<compile_context>
chip_gen: v7x
topology: tpu7x:2x2x1
jax: 0.10.0
libtpu: 0.0.40
codegen_flags: <defaults>
</compile_context>

<pallas_src>
import jax
import jax.numpy as jnp
import numpy as np
from jax import lax
from jax.experimental import pallas as pl
from jax.experimental.pallas import tpu as pltpu

EPS = 1e-5  # PyTorch GroupNorm default eps


def _silu(x):
    return x * jax.nn.sigmoid(x)


def _pad_rows(W):
    # vertical margin rows of the padded conv scratch: >= W, rounded up to 8
    return -(-W // 8) * 8


def _make_kernel(H, W, Cin, Cout, groups):
    HW = H * W
    PAD = _pad_rows(W)
    G = groups

    def kernel(x_ref, tb_ref,
               g1_ref, be1_ref, m1_ref, mt1_ref, w1_ref,
               g2_ref, be2_ref, m2_ref, mt2_ref, w2_ref,
               wr_ref, bout_ref,
               out_ref,
               pad_ref):
        # ---- loop-invariant (HW, 1) boundary masks -------------------------
        q = lax.broadcasted_iota(jnp.int32, (HW, 1), 0)   # flattened spatial idx
        col = q % W
        mask_l = col != 0           # left-neighbor tap valid (not image col 0)
        mask_r = col != (W - 1)     # right-neighbor tap valid
        mask_up = q >= W            # row-above tap valid (not image row 0)
        mask_dn = q < (HW - W)      # row-below tap valid (not last image row)

        def group_norm_silu(v, m_ref, mt_ref, gamma_ref, beta_ref, C):
            # whole-slab per-channel sums (f32); per-group aggregation via tiny
            # membership matmuls; single-pass variance in f32.
            s1 = jnp.sum(v, axis=0, keepdims=True)                    # (1, C)
            s2 = jnp.sum(v * v, axis=0, keepdims=True)                # (1, C)
            n = float(HW * (C // G))
            gmean = jnp.dot(s1, m_ref[...], preferred_element_type=jnp.float32) / n
            gmsq = jnp.dot(s2, m_ref[...], preferred_element_type=jnp.float32) / n
            ginv = lax.rsqrt(gmsq - gmean * gmean + EPS)              # (1, G)
            mean_c = jnp.dot(gmean, mt_ref[...], preferred_element_type=jnp.float32)
            inv_c = jnp.dot(ginv, mt_ref[...], preferred_element_type=jnp.float32)
            scale = inv_c * gamma_ref[...]                            # (1, C)
            shift = beta_ref[...] - mean_c * scale
            y = v * scale + shift
            return y * jax.nn.sigmoid(y)                              # SiLU

        def conv3x3(y, w_ref, Ci):
            # y: (HW, Ci) f32.  Build the channel-concatenated slab
            #   [center | left-shifted(masked) | right-shifted(masked)]  (bf16)
            # in the H-padded scratch, then 3 matmuls (one per kernel row) with
            # K = 3*Ci.  w_ref is (3, 3*Ci, Cout) with matching kx order.
            K3 = 3 * Ci
            # store-once bf16 center copy (aligned rows, lane offset 0)
            pad_ref[PAD:PAD + HW, 0:Ci] = y.astype(jnp.bfloat16)
            # horizontal +-1 row shifts read back from the rounded center copy;
            # the single garbage margin row each touches is masked away.
            lft = pad_ref[PAD - 1:PAD - 1 + HW, 0:Ci]                 # y[q-1]
            rgt = pad_ref[PAD + 1:PAD + 1 + HW, 0:Ci]                 # y[q+1]
            pad_ref[PAD:PAD + HW, Ci:2 * Ci] = jnp.where(mask_l, lft, jnp.zeros_like(lft))
            pad_ref[PAD:PAD + HW, 2 * Ci:K3] = jnp.where(mask_r, rgt, jnp.zeros_like(rgt))

            # ky = 1: aligned center-row slab
            acc = jnp.dot(pad_ref[PAD:PAD + HW, 0:K3], w_ref[1],
                          preferred_element_type=jnp.float32)
            # ky = 0 / ky = 2: aligned +-W shifted whole-slab reads.  The first/
            # last W output rows of these taps read never-written margin rows of
            # the scratch, so they are masked on the (HW, Cout) result (no
            # scratch zeroing needed, megacore-safe).
            up = jnp.dot(pad_ref[PAD - W:PAD - W + HW, 0:K3], w_ref[0],
                         preferred_element_type=jnp.float32)
            dn = jnp.dot(pad_ref[PAD + W:PAD + W + HW, 0:K3], w_ref[2],
                         preferred_element_type=jnp.float32)
            return acc + jnp.where(mask_up, up, 0.0) + jnp.where(mask_dn, dn, 0.0)

        x = x_ref[...]                                                # (HW, Cin) f32

        # GroupNorm(32,Cin) -> SiLU -> conv_feature (+ bias + time, folded in tb)
        y1 = group_norm_silu(x, m1_ref, mt1_ref, g1_ref, be1_ref, Cin)
        feat = conv3x3(y1, w1_ref, Cin) + tb_ref[...]                 # (HW, Cout)

        # GroupNorm(32,Cout) -> SiLU -> conv_merge
        y2 = group_norm_silu(feat, m2_ref, mt2_ref, g2_ref, be2_ref, Cout)
        merged = conv3x3(y2, w2_ref, Cout)

        # residual path: 1x1 conv, reusing the already-loaded x
        res = jnp.dot(x.astype(jnp.bfloat16), wr_ref[...],
                      preferred_element_type=jnp.float32)

        # bout = conv_merge bias + residual bias (folded on host)
        out_ref[...] = (merged + res + bout_ref[...]).astype(out_ref.dtype)

    return kernel


def unet_residual_block(x, time, params, *, groups=32):
    """x: (N, H, W, Cin) NHWC, time: (N, 1, n_time).  Returns (N, H, W, Cout)."""
    N, H, W, Cin = x.shape
    Cout = params["conv_feature_b"].shape[-1]
    assert Cin == Cout, "module (as written) only works for in_channels == out_channels"
    assert Cin % groups == 0 and Cout % groups == 0
    HW = H * W
    PAD = _pad_rows(W)
    G = groups
    Cmax = max(Cin, Cout)

    # ---- host-side (XLA) precompute ---------------------------------------
    # silu(time) @ W_t + b_t (+ conv_feature bias) -> one (N, n_time)@(n_time, Cout)
    tb = (_silu(time[:, 0, :].astype(jnp.float32)) @ params["linear_time_w"]
          + params["linear_time_b"] + params["conv_feature_b"])         # (N, Cout)
    tb = tb.reshape(N, 1, Cout).astype(jnp.float32)

    def membership(C):
        m = (np.arange(C)[:, None] // (C // G) == np.arange(G)[None, :]).astype(np.float32)
        return jnp.asarray(m), jnp.asarray(m.T)

    m1, mt1 = membership(Cin)
    m2, mt2 = membership(Cout)

    def prep_w(w9):
        # (9, Ci, Co), index ky*3+kx  ->  (3, 3*Ci, Co) bf16 with kx reordered to
        # (center, left, right) to match the kernel's slab channel layout.
        Ci, Co = w9.shape[1], w9.shape[2]
        w = w9.reshape(3, 3, Ci, Co)
        return jnp.concatenate([w[:, 1], w[:, 0], w[:, 2]], axis=1).astype(jnp.bfloat16)

    w1 = prep_w(params["conv_feature_w"])          # (3, 3*Cin,  Cout) bf16
    w2 = prep_w(params["conv_merge_w"])            # (3, 3*Cout, Cout) bf16
    wr = params["res_w"].astype(jnp.bfloat16)      # (Cin, Cout) bf16
    b_out = (params["conv_merge_b"] + params["res_b"]).astype(jnp.float32)

    x2 = x.reshape(N, HW, Cin)

    def const(shape):
        return pl.BlockSpec(shape, lambda b: (0,) * len(shape))

    grid_spec = pltpu.PrefetchScalarGridSpec(
        num_scalar_prefetch=0,
        grid=(N,),
        in_specs=[
            pl.BlockSpec((None, HW, Cin), lambda b: (b, 0, 0)),   # x (flat spatial)
            pl.BlockSpec((None, 1, Cout), lambda b: (b, 0, 0)),   # time vec + bias
            const((1, Cin)), const((1, Cin)),                     # gn1 gamma / beta
            const((Cin, G)), const((G, Cin)),                     # gn1 membership
            const((3, 3 * Cin, Cout)),                            # conv_feature w (bf16)
            const((1, Cout)), const((1, Cout)),                   # gn2 gamma / beta
            const((Cout, G)), const((G, Cout)),                   # gn2 membership
            const((3, 3 * Cout, Cout)),                           # conv_merge w (bf16)
            const((Cin, Cout)),                                   # residual 1x1 w (bf16)
            const((1, Cout)),                                     # folded output bias
        ],
        out_specs=pl.BlockSpec((None, HW, Cout), lambda b: (b, 0, 0)),
        scratch_shapes=[
            # single shared bf16 H-padded conv scratch (both convs reuse it)
            pltpu.VMEM((2 * PAD + HW, 3 * Cmax), jnp.bfloat16),
        ],
    )
    out = pl.pallas_call(
        _make_kernel(H, W, Cin, Cout, groups),
        out_shape=jax.ShapeDtypeStruct((N, HW, Cout), x.dtype),
        grid_spec=grid_spec,
        compiler_params=pltpu.CompilerParams(
            dimension_semantics=("parallel",)),   # batch items are independent
    )(x2, tb,
      params["gn1_g"], params["gn1_b"], m1, mt1, w1,
      params["gn2_g"], params["gn2_b"], m2, mt2, w2,
      wr, b_out)
    return out.reshape(N, H, W, Cout)


def reference(x, time, params, groups=32):
    """Pure-JAX f32 reference of the intended forward pass (NHWC)."""
    def gn(v, gamma, beta):
        N, H, W, C = v.shape
        g = v.reshape(N, H, W, groups, C // groups)
        mean = g.mean(axis=(1, 2, 4), keepdims=True)
        var = ((g - mean) ** 2).mean(axis=(1, 2, 4), keepdims=True)
        g = (g - mean) / jnp.sqrt(var + EPS)
        return g.reshape(N, H, W, C) * gamma.reshape(1, 1, 1, C) + beta.reshape(1, 1, 1, C)

    def conv3(v, w9, b):
        Ci, Co = w9.shape[1], w9.shape[2]
        w = w9.reshape(3, 3, Ci, Co)
        return lax.conv_general_dilated(
            v, w, window_strides=(1, 1), padding="SAME",
            dimension_numbers=("NHWC", "HWIO", "NHWC")) + b.reshape(1, 1, 1, Co)

    feat = conv3(_silu(gn(x, params["gn1_g"], params["gn1_b"])),
                 params["conv_feature_w"], params["conv_feature_b"])
    t = _silu(time[:, 0, :]) @ params["linear_time_w"] + params["linear_time_b"]
    merge = feat + t[:, None, None, :]
    merge = conv3(_silu(gn(merge, params["gn2_g"], params["gn2_b"])),
                  params["conv_merge_w"], params["conv_merge_b"])
    res = jnp.einsum("nhwc,cd->nhwd", x, params["res_w"]) + params["res_b"].reshape(1, 1, 1, -1)
    return merge + res


if __name__ == "__main__":
    N, H, W = 2, 8, 8
    Cin = Cout = 64        # in_channels == out_channels -> 1x1-conv residual path
    n_time = 128           # small stand-in for the module's n_time=1200

    key = jax.random.PRNGKey(0)
    ks = jax.random.split(key, 16)
    s = 0.1
    params = {
        "gn1_g": 1.0 + s * jax.random.normal(ks[0], (1, Cin), jnp.float32),
        "gn1_b": s * jax.random.normal(ks[1], (1, Cin), jnp.float32),
        # PyTorch Conv2d weight (Cout, Cin, 3, 3) == this (9, Cin, Cout) via
        # w.transpose(2, 3, 1, 0).reshape(9, Cin, Cout)
        "conv_feature_w": s * jax.random.normal(ks[2], (9, Cin, Cout), jnp.float32),
        "conv_feature_b": s * jax.random.normal(ks[3], (1, Cout), jnp.float32),
        # PyTorch Linear weight (Cout, n_time) == this (n_time, Cout) transposed
        "linear_time_w": s * jax.random.normal(ks[4], (n_time, Cout), jnp.float32),
        "linear_time_b": s * jax.random.normal(ks[5], (1, Cout), jnp.float32),
        "gn2_g": 1.0 + s * jax.random.normal(ks[6], (1, Cout), jnp.float32),
        "gn2_b": s * jax.random.normal(ks[7], (1, Cout), jnp.float32),
        "conv_merge_w": s * jax.random.normal(ks[8], (9, Cout, Cout), jnp.float32),
        "conv_merge_b": s * jax.random.normal(ks[9], (1, Cout), jnp.float32),
        # PyTorch 1x1 Conv2d weight (Cout, Cin, 1, 1) == this (Cin, Cout)
        "res_w": s * jax.random.normal(ks[10], (Cin, Cout), jnp.float32),
        "res_b": s * jax.random.normal(ks[11], (1, Cout), jnp.float32),
    }
    x = jax.random.normal(ks[12], (N, H, W, Cin), jnp.float32)      # NHWC feature map
    time = jax.random.normal(ks[13], (N, 1, n_time), jnp.float32)   # time embedding

    out = jax.block_until_ready(unet_residual_block(x, time, params))
    ref = jax.block_until_ready(reference(x, time, params))

    assert out.shape == (N, H, W, Cout)
    # Kernel uses bf16 MXU operands with f32 accumulation; reference is pure f32,
    # so the tolerance is loosened accordingly.
    np.testing.assert_allclose(np.asarray(out), np.asarray(ref), rtol=3e-2, atol=5e-2)
    print("KERNEL_OK")
</pallas_src>

<mosaic_0001>
module attributes {stable_mosaic.version = 11 : i64} {
  func.func @kernel(%arg0: i32, %arg1: memref<1x64x64xf32, #tpu.memory_space<vmem>>, %arg2: memref<1x1x64xf32, #tpu.memory_space<vmem>>, %arg3: memref<1x64xf32, #tpu.memory_space<vmem>>, %arg4: memref<1x64xf32, #tpu.memory_space<vmem>>, %arg5: memref<64x32xf32, #tpu.memory_space<vmem>>, %arg6: memref<32x64xf32, #tpu.memory_space<vmem>>, %arg7: memref<3x192x64xbf16, #tpu.memory_space<vmem>>, %arg8: memref<1x64xf32, #tpu.memory_space<vmem>>, %arg9: memref<1x64xf32, #tpu.memory_space<vmem>>, %arg10: memref<64x32xf32, #tpu.memory_space<vmem>>, %arg11: memref<32x64xf32, #tpu.memory_space<vmem>>, %arg12: memref<3x192x64xbf16, #tpu.memory_space<vmem>>, %arg13: memref<64x64xbf16, #tpu.memory_space<vmem>>, %arg14: memref<1x64xf32, #tpu.memory_space<vmem>>, %arg15: memref<1x64x64xf32, #tpu.memory_space<vmem>>, %arg16: memref<80x192xbf16, #tpu.memory_space<vmem>>) attributes {dimension_semantics = [#tpu.dimension_semantics<parallel>], iteration_bounds = array<i64: 2>, scalar_prefetch = 0 : i64, scratch_operands = 1 : i64, tpu.core_type = #tpu.core_type<tc>, window_params = [{transform_indices = @transform_0, window_bounds = array<i64: 1, 64, 64>}, {transform_indices = @transform_1, window_bounds = array<i64: 1, 1, 64>}, {pipeline_mode = #tpu.pipeline_mode<synchronous>, transform_indices = @transform_2, window_bounds = array<i64: 1, 64>}, {pipeline_mode = #tpu.pipeline_mode<synchronous>, transform_indices = @transform_3, window_bounds = array<i64: 1, 64>}, {pipeline_mode = #tpu.pipeline_mode<synchronous>, transform_indices = @transform_4, window_bounds = array<i64: 64, 32>}, {pipeline_mode = #tpu.pipeline_mode<synchronous>, transform_indices = @transform_5, window_bounds = array<i64: 32, 64>}, {pipeline_mode = #tpu.pipeline_mode<synchronous>, transform_indices = @transform_6, window_bounds = array<i64: 3, 192, 64>}, {pipeline_mode = #tpu.pipeline_mode<synchronous>, transform_indices = @transform_7, window_bounds = array<i64: 1, 64>}, {pipeline_mode = #tpu.pipeline_mode<synchronous>, transform_indices = @transform_8, window_bounds = array<i64: 1, 64>}, {pipeline_mode = #tpu.pipeline_mode<synchronous>, transform_indices = @transform_9, window_bounds = array<i64: 64, 32>}, {pipeline_mode = #tpu.pipeline_mode<synchronous>, transform_indices = @transform_10, window_bounds = array<i64: 32, 64>}, {pipeline_mode = #tpu.pipeline_mode<synchronous>, transform_indices = @transform_11, window_bounds = array<i64: 3, 192, 64>}, {pipeline_mode = #tpu.pipeline_mode<synchronous>, transform_indices = @transform_12, window_bounds = array<i64: 64, 64>}, {pipeline_mode = #tpu.pipeline_mode<synchronous>, transform_indices = @transform_13, window_bounds = array<i64: 1, 64>}, {transform_indices = @transform_14, window_bounds = array<i64: 1, 64, 64>}]} {
    %0 = tpu.iota {dimensions = array<i32: 0>} : vector<64x1xi32>
    %c8_i32 = arith.constant 8 : i32
    %c0_i32 = arith.constant 0 : i32
    %1 = arith.cmpi eq, %c8_i32, %c0_i32 : i32
    %c1_i32 = arith.constant 1 : i32
    %2 = arith.select %1, %c1_i32, %c8_i32 : i32
    %3 = vector.broadcast %2 : i32 to vector<64x1xi32>
    %4 = arith.remsi %0, %3 : vector<64x1xi32>
    %c0_i32_0 = arith.constant 0 : i32
    %5 = vector.broadcast %c0_i32_0 : i32 to vector<64x1xi32>
    %6 = arith.cmpi ne, %4, %5 : vector<64x1xi32>
    %c0_i32_1 = arith.constant 0 : i32
    %7 = vector.broadcast %c0_i32_1 : i32 to vector<64x1xi32>
    %8 = arith.cmpi slt, %4, %7 : vector<64x1xi32>
    %c0_i32_2 = arith.constant 0 : i32
    %9 = arith.cmpi slt, %2, %c0_i32_2 : i32
    %10 = vector.broadcast %9 : i1 to vector<64x1xi1>
    %11 = vector.broadcast %10 : vector<64x1xi1> to vector<64x1xi1>
    %12 = arith.xori %8, %11 : vector<64x1xi1>
    %13 = arith.andi %12, %6 : vector<64x1xi1>
    %14 = vector.broadcast %2 : i32 to vector<64x1xi32>
    %15 = arith.addi %4, %14 : vector<64x1xi32>
    %16 = arith.select %13, %15, %4 : vector<64x1xi1>, vector<64x1xi32>
    %c0_i32_3 = arith.constant 0 : i32
    %17 = vector.broadcast %c0_i32_3 : i32 to vector<64x1xi32>
    %18 = arith.cmpi ne, %16, %17 : vector<64x1xi32>
    %c7_i32 = arith.constant 7 : i32
    %19 = vector.broadcast %c7_i32 : i32 to vector<64x1xi32>
    %20 = arith.cmpi ne, %16, %19 : vector<64x1xi32>
    %c8_i32_4 = arith.constant 8 : i32
    %21 = vector.broadcast %c8_i32_4 : i32 to vector<64x1xi32>
    %22 = arith.cmpi sge, %0, %21 : vector<64x1xi32>
    %c56_i32 = arith.constant 56 : i32
    %23 = vector.broadcast %c56_i32 : i32 to vector<64x1xi32>
    %24 = arith.cmpi slt, %0, %23 : vector<64x1xi32>
    %c0 = arith.constant 0 : index
    %c0_5 = arith.constant 0 : index
    %c0_6 = arith.constant 0 : index
    %25 = vector.load %arg1[%c0, %c0_5, %c0_6] : memref<1x64x64xf32, #tpu.memory_space<vmem>>, vector<1x64x64xf32>
    %26 = vector.shape_cast %25 : vector<1x64x64xf32> to vector<64x64xf32>
    %cst = arith.constant dense<0.000000e+00> : vector<64xf32>
    %27 = vector.multi_reduction <add>, %26, %cst [0] : vector<64x64xf32> to vector<64xf32>
    %28 = vector.shape_cast %27 : vector<64xf32> to vector<1x64xf32>
    %29 = arith.mulf %26, %26 : vector<64x64xf32>
    %cst_7 = arith.constant dense<0.000000e+00> : vector<64xf32>
    %30 = vector.multi_reduction <add>, %29, %cst_7 [0] : vector<64x64xf32> to vector<64xf32>
    %31 = vector.shape_cast %30 : vector<64xf32> to vector<1x64xf32>
    %c0_8 = arith.constant 0 : index
    %c0_9 = arith.constant 0 : index
    %32 = vector.load %arg5[%c0_8, %c0_9] : memref<64x32xf32, #tpu.memory_space<vmem>>, vector<64x32xf32>
    %cst_10 = arith.constant dense<0.000000e+00> : vector<1x32xf32>
    %33 = tpu.matmul %28, %32, %cst_10 {dimension_numbers = #tpu.dot_dimension_numbers<[1], [0], [0], [1], [0, 0, 1, 1], [], []>} : vector<1x64xf32>, vector<64x32xf32>, vector<1x32xf32> -> vector<1x32xf32>
    %cst_11 = arith.constant 1.280000e+02 : f32
    %34 = vector.broadcast %cst_11 : f32 to vector<1x32xf32>
    %35 = arith.divf %33, %34 : vector<1x32xf32>
    %c0_12 = arith.constant 0 : index
    %c0_13 = arith.constant 0 : index
    %36 = vector.load %arg5[%c0_12, %c0_13] : memref<64x32xf32, #tpu.memory_space<vmem>>, vector<64x32xf32>
    %cst_14 = arith.constant dense<0.000000e+00> : vector<1x32xf32>
    %37 = tpu.matmul %31, %36, %cst_14 {dimension_numbers = #tpu.dot_dimension_numbers<[1], [0], [0], [1], [0, 0, 1, 1], [], []>} : vector<1x64xf32>, vector<64x32xf32>, vector<1x32xf32> -> vector<1x32xf32>
    %cst_15 = arith.constant 1.280000e+02 : f32
    %38 = vector.broadcast %cst_15 : f32 to vector<1x32xf32>
    %39 = arith.divf %37, %38 : vector<1x32xf32>
    %40 = arith.mulf %35, %35 : vector<1x32xf32>
    %41 = arith.subf %39, %40 : vector<1x32xf32>
    %cst_16 = arith.constant 9.99999974E-6 : f32
    %42 = vector.broadcast %cst_16 : f32 to vector<1x32xf32>
    %43 = arith.addf %41, %42 : vector<1x32xf32>
    %44 = math.rsqrt %43 : vector<1x32xf32>
    %c0_17 = arith.constant 0 : index
    %c0_18 = arith.constant 0 : index
    %45 = vector.load %arg6[%c0_17, %c0_18] : memref<32x64xf32, #tpu.memory_space<vmem>>, vector<32x64xf32>
    %cst_19 = arith.constant dense<0.000000e+00> : vector<1x64xf32>
    %46 = tpu.matmul %35, %45, %cst_19 {dimension_numbers = #tpu.dot_dimension_numbers<[1], [0], [0], [1], [0, 0, 1, 1], [], []>} : vector<1x32xf32>, vector<32x64xf32>, vector<1x64xf32> -> vector<1x64xf32>
    %c0_20 = arith.constant 0 : index
    %c0_21 = arith.constant 0 : index
    %47 = vector.load %arg6[%c0_20, %c0_21] : memref<32x64xf32, #tpu.memory_space<vmem>>, vector<32x64xf32>
    %cst_22 = arith.constant dense<0.000000e+00> : vector<1x64xf32>
    %48 = tpu.matmul %44, %47, %cst_22 {dimension_numbers = #tpu.dot_dimension_numbers<[1], [0], [0], [1], [0, 0, 1, 1], [], []>} : vector<1x32xf32>, vector<32x64xf32>, vector<1x64xf32> -> vector<1x64xf32>
    %c0_23 = arith.constant 0 : index
    %c0_24 = arith.constant 0 : index
    %49 = vector.load %arg3[%c0_23, %c0_24] : memref<1x64xf32, #tpu.memory_space<vmem>>, vector<1x64xf32>
    %50 = arith.mulf %48, %49 : vector<1x64xf32>
    %c0_25 = arith.constant 0 : index
    %c0_26 = arith.constant 0 : index
    %51 = vector.load %arg4[%c0_25, %c0_26] : memref<1x64xf32, #tpu.memory_space<vmem>>, vector<1x64xf32>
    %52 = arith.mulf %46, %50 : vector<1x64xf32>
    %53 = arith.subf %51, %52 : vector<1x64xf32>
    %54 = vector.broadcast %50 : vector<1x64xf32> to vector<64x64xf32>
    %55 = arith.mulf %26, %54 : vector<64x64xf32>
    %56 = vector.broadcast %53 : vector<1x64xf32> to vector<64x64xf32>
    %57 = arith.addf %55, %56 : vector<64x64xf32>
    %58 = arith.negf %57 : vector<64x64xf32>
    %59 = math.exp %58 : vector<64x64xf32>
    %cst_27 = arith.constant 1.000000e+00 : f32
    %60 = vector.broadcast %cst_27 : f32 to vector<64x64xf32>
    %61 = arith.addf %60, %59 : vector<64x64xf32>
    %62 = arith.divf %60, %61 : vector<64x64xf32>
    %63 = arith.mulf %57, %62 : vector<64x64xf32>
    %64 = arith.truncf %63 : vector<64x64xf32> to vector<64x64xbf16>
    %c8 = arith.constant 8 : index
    %c0_28 = arith.constant 0 : index
    %65 = vector.load %arg16[%c8, %c0_28] : memref<80x192xbf16, #tpu.memory_space<vmem>>, vector<64x64xbf16>
    tpu.vector_store %arg16[%c8, %c0_28], %64 {strides = array<i32>} : memref<80x192xbf16, #tpu.memory_space<vmem>>, vector<64x64xbf16>,
    %c7 = arith.constant 7 : index
    %c0_29 = arith.constant 0 : index
    %66 = vector.load %arg16[%c7, %c0_29] : memref<80x192xbf16, #tpu.memory_space<vmem>>, vector<64x64xbf16>
    %c9 = arith.constant 9 : index
    %c0_30 = arith.constant 0 : index
    %67 = vector.load %arg16[%c9, %c0_30] : memref<80x192xbf16, #tpu.memory_space<vmem>>, vector<64x64xbf16>
    %cst_31 = arith.constant 0.000000e+00 : bf16
    %68 = vector.broadcast %cst_31 : bf16 to vector<64x64xbf16>
    %69 = vector.shape_cast %18 : vector<64x1xi1> to vector<64x1xi1>
    %70 = vector.broadcast %69 : vector<64x1xi1> to vector<64x64xi1>
    %71 = arith.select %70, %66, %68 : vector<64x64xi1>, vector<64x64xbf16>
    %c8_32 = arith.constant 8 : index
    %c64 = arith.constant 64 : index
    %72 = vector.load %arg16[%c8_32, %c64] : memref<80x192xbf16, #tpu.memory_space<vmem>>, vector<64x64xbf16>
    tpu.vector_store %arg16[%c8_32, %c64], %71 {strides = array<i32>} : memref<80x192xbf16, #tpu.memory_space<vmem>>, vector<64x64xbf16>,
    %cst_33 = arith.constant 0.000000e+00 : bf16
    %73 = vector.broadcast %cst_33 : bf16 to vector<64x64xbf16>
    %74 = vector.shape_cast %20 : vector<64x1xi1> to vector<64x1xi1>
    %75 = vector.broadcast %74 : vector<64x1xi1> to vector<64x64xi1>
    %76 = arith.select %75, %67, %73 : vector<64x64xi1>, vector<64x64xbf16>
    %c8_34 = arith.constant 8 : index
    %c128 = arith.constant 128 : index
    %77 = vector.load %arg16[%c8_34, %c128] : memref<80x192xbf16, #tpu.memory_space<vmem>>, vector<64x64xbf16>
    tpu.vector_store %arg16[%c8_34, %c128], %76 {strides = array<i32>} : memref<80x192xbf16, #tpu.memory_space<vmem>>, vector<64x64xbf16>,
    %c8_35 = arith.constant 8 : index
    %c0_36 = arith.constant 0 : index
    %78 = vector.load %arg16[%c8_35, %c0_36] : memref<80x192xbf16, #tpu.memory_space<vmem>>, vector<64x192xbf16>
    %c1 = arith.constant 1 : index
    %c0_37 = arith.constant 0 : index
    %c0_38 = arith.constant 0 : index
    %79 = vector.load %arg7[%c1, %c0_37, %c0_38] : memref<3x192x64xbf16, #tpu.memory_space<vmem>>, vector<1x192x64xbf16>
    %80 = vector.shape_cast %79 : vector<1x192x64xbf16> to vector<192x64xbf16>
    %cst_39 = arith.constant dense<0.000000e+00> : vector<64x64xf32>
    %81 = tpu.matmul %78, %80, %cst_39 {dimension_numbers = #tpu.dot_dimension_numbers<[1], [0], [0], [1], [0, 0, 1, 1], [], []>} : vector<64x192xbf16>, vector<192x64xbf16>, vector<64x64xf32> -> vector<64x64xf32>
    %c0_40 = arith.constant 0 : index
    %c0_41 = arith.constant 0 : index
    %82 = vector.load %arg16[%c0_40, %c0_41] : memref<80x192xbf16, #tpu.memory_space<vmem>>, vector<64x192xbf16>
    %c0_42 = arith.constant 0 : index
    %c0_43 = arith.constant 0 : index
    %c0_44 = arith.constant 0 : index
    %83 = vector.load %arg7[%c0_42, %c0_43, %c0_44] : memref<3x192x64xbf16, #tpu.memory_space<vmem>>, vector<1x192x64xbf16>
    %84 = vector.shape_cast %83 : vector<1x192x64xbf16> to vector<192x64xbf16>
    %cst_45 = arith.constant dense<0.000000e+00> : vector<64x64xf32>
    %85 = tpu.matmul %82, %84, %cst_45 {dimension_numbers = #tpu.dot_dimension_numbers<[1], [0], [0], [1], [0, 0, 1, 1], [], []>} : vector<64x192xbf16>, vector<192x64xbf16>, vector<64x64xf32> -> vector<64x64xf32>
    %c16 = arith.constant 16 : index
    %c0_46 = arith.constant 0 : index
    %86 = vector.load %arg16[%c16, %c0_46] : memref<80x192xbf16, #tpu.memory_space<vmem>>, vector<64x192xbf16>
    %c2 = arith.constant 2 : index
    %c0_47 = arith.constant 0 : index
    %c0_48 = arith.constant 0 : index
    %87 = vector.load %arg7[%c2, %c0_47, %c0_48] : memref<3x192x64xbf16, #tpu.memory_space<vmem>>, vector<1x192x64xbf16>
    %88 = vector.shape_cast %87 : vector<1x192x64xbf16> to vector<192x64xbf16>
    %cst_49 = arith.constant dense<0.000000e+00> : vector<64x64xf32>
    %89 = tpu.matmul %86, %88, %cst_49 {dimension_numbers = #tpu.dot_dimension_numbers<[1], [0], [0], [1], [0, 0, 1, 1], [], []>} : vector<64x192xbf16>, vector<192x64xbf16>, vector<64x64xf32> -> vector<64x64xf32>
    %cst_50 = arith.constant 0.000000e+00 : f32
    %90 = vector.shape_cast %22 : vector<64x1xi1> to vector<64x1xi1>
    %91 = vector.broadcast %90 : vector<64x1xi1> to vector<64x64xi1>
    %92 = vector.broadcast %cst_50 : f32 to vector<64x64xf32>
    %93 = arith.select %91, %85, %92 : vector<64x64xi1>, vector<64x64xf32>
    %94 = arith.addf %81, %93 : vector<64x64xf32>
    %cst_51 = arith.constant 0.000000e+00 : f32
    %95 = vector.shape_cast %24 : vector<64x1xi1> to vector<64x1xi1>
    %96 = vector.broadcast %95 : vector<64x1xi1> to vector<64x64xi1>
    %97 = vector.broadcast %cst_51 : f32 to vector<64x64xf32>
    %98 = arith.select %96, %89, %97 : vector<64x64xi1>, vector<64x64xf32>
    %99 = arith.addf %94, %98 : vector<64x64xf32>
    %c0_52 = arith.constant 0 : index
    %c0_53 = arith.constant 0 : index
    %c0_54 = arith.constant 0 : index
    %100 = vector.load %arg2[%c0_52, %c0_53, %c0_54] : memref<1x1x64xf32, #tpu.memory_space<vmem>>, vector<1x1x64xf32>
    %101 = vector.shape_cast %100 : vector<1x1x64xf32> to vector<1x64xf32>
    %102 = vector.broadcast %101 : vector<1x64xf32> to vector<64x64xf32>
    %103 = arith.addf %99, %102 : vector<64x64xf32>
    %cst_55 = arith.constant dense<0.000000e+00> : vector<64xf32>
    %104 = vector.multi_reduction <add>, %103, %cst_55 [0] : vector<64x64xf32> to vector<64xf32>
    %105 = vector.shape_cast %104 : vector<64xf32> to vector<1x64xf32>
    %106 = arith.mulf %103, %103 : vector<64x64xf32>
    %cst_56 = arith.constant dense<0.000000e+00> : vector<64xf32>
    %107 = vector.multi_reduction <add>, %106, %cst_56 [0] : vector<64x64xf32> to vector<64xf32>
    %108 = vector.shape_cast %107 : vector<64xf32> to vector<1x64xf32>
    %c0_57 = arith.constant 0 : index
    %c0_58 = arith.constant 0 : index
    %109 = vector.load %arg10[%c0_57, %c0_58] : memref<64x32xf32, #tpu.memory_space<vmem>>, vector<64x32xf32>
    %cst_59 = arith.constant dense<0.000000e+00> : vector<1x32xf32>
    %110 = tpu.matmul %105, %109, %cst_59 {dimension_numbers = #tpu.dot_dimension_numbers<[1], [0], [0], [1], [0, 0, 1, 1], [], []>} : vector<1x64xf32>, vector<64x32xf32>, vector<1x32xf32> -> vector<1x32xf32>
    %cst_60 = arith.constant 1.280000e+02 : f32
    %111 = vector.broadcast %cst_60 : f32 to vector<1x32xf32>
    %112 = arith.divf %110, %111 : vector<1x32xf32>
    %c0_61 = arith.constant 0 : index
    %c0_62 = arith.constant 0 : index
    %113 = vector.load %arg10[%c0_61, %c0_62] : memref<64x32xf32, #tpu.memory_space<vmem>>, vector<64x32xf32>
    %cst_63 = arith.constant dense<0.000000e+00> : vector<1x32xf32>
    %114 = tpu.matmul %108, %113, %cst_63 {dimension_numbers = #tpu.dot_dimension_numbers<[1], [0], [0], [1], [0, 0, 1, 1], [], []>} : vector<1x64xf32>, vector<64x32xf32>, vector<1x32xf32> -> vector<1x32xf32>
    %cst_64 = arith.constant 1.280000e+02 : f32
    %115 = vector.broadcast %cst_64 : f32 to vector<1x32xf32>
    %116 = arith.divf %114, %115 : vector<1x32xf32>
    %117 = arith.mulf %112, %112 : vector<1x32xf32>
    %118 = arith.subf %116, %117 : vector<1x32xf32>
    %cst_65 = arith.constant 9.99999974E-6 : f32
    %119 = vector.broadcast %cst_65 : f32 to vector<1x32xf32>
    %120 = arith.addf %118, %119 : vector<1x32xf32>
    %121 = math.rsqrt %120 : vector<1x32xf32>
    %c0_66 = arith.constant 0 : index
    %c0_67 = arith.constant 0 : index
    %122 = vector.load %arg11[%c0_66, %c0_67] : memref<32x64xf32, #tpu.memory_space<vmem>>, vector<32x64xf32>
    %cst_68 = arith.constant dense<0.000000e+00> : vector<1x64xf32>
    %123 = tpu.matmul %112, %122, %cst_68 {dimension_numbers = #tpu.dot_dimension_numbers<[1], [0], [0], [1], [0, 0, 1, 1], [], []>} : vector<1x32xf32>, vector<32x64xf32>, vector<1x64xf32> -> vector<1x64xf32>
    %c0_69 = arith.constant 0 : index
    %c0_70 = arith.constant 0 : index
    %124 = vector.load %arg11[%c0_69, %c0_70] : memref<32x64xf32, #tpu.memory_space<vmem>>, vector<32x64xf32>
    %cst_71 = arith.constant dense<0.000000e+00> : vector<1x64xf32>
    %125 = tpu.matmul %121, %124, %cst_71 {dimension_numbers = #tpu.dot_dimension_numbers<[1], [0], [0], [1], [0, 0, 1, 1], [], []>} : vector<1x32xf32>, vector<32x64xf32>, vector<1x64xf32> -> vector<1x64xf32>
    %c0_72 = arith.constant 0 : index
    %c0_73 = arith.constant 0 : index
    %126 = vector.load %arg8[%c0_72, %c0_73] : memref<1x64xf32, #tpu.memory_space<vmem>>, vector<1x64xf32>
    %127 = arith.mulf %125, %126 : vector<1x64xf32>
    %c0_74 = arith.constant 0 : index
    %c0_75 = arith.constant 0 : index
    %128 = vector.load %arg9[%c0_74, %c0_75] : memref<1x64xf32, #tpu.memory_space<vmem>>, vector<1x64xf32>
    %129 = arith.mulf %123, %127 : vector<1x64xf32>
    %130 = arith.subf %128, %129 : vector<1x64xf32>
    %131 = vector.broadcast %127 : vector<1x64xf32> to vector<64x64xf32>
    %132 = arith.mulf %103, %131 : vector<64x64xf32>
    %133 = vector.broadcast %130 : vector<1x64xf32> to vector<64x64xf32>
    %134 = arith.addf %132, %133 : vector<64x64xf32>
    %135 = arith.negf %134 : vector<64x64xf32>
    %136 = math.exp %135 : vector<64x64xf32>
    %cst_76 = arith.constant 1.000000e+00 : f32
    %137 = vector.broadcast %cst_76 : f32 to vector<64x64xf32>
    %138 = arith.addf %137, %136 : vector<64x64xf32>
    %139 = arith.divf %137, %138 : vector<64x64xf32>
    %140 = arith.mulf %134, %139 : vector<64x64xf32>
    %141 = arith.truncf %140 : vector<64x64xf32> to vector<64x64xbf16>
    %c8_77 = arith.constant 8 : index
    %c0_78 = arith.constant 0 : index
    %142 = vector.load %arg16[%c8_77, %c0_78] : memref<80x192xbf16, #tpu.memory_space<vmem>>, vector<64x64xbf16>
    tpu.vector_store %arg16[%c8_77, %c0_78], %141 {strides = array<i32>} : memref<80x192xbf16, #tpu.memory_space<vmem>>, vector<64x64xbf16>,
    %c7_79 = arith.constant 7 : index
    %c0_80 = arith.constant 0 : index
    %143 = vector.load %arg16[%c7_79, %c0_80] : memref<80x192xbf16, #tpu.memory_space<vmem>>, vector<64x64xbf16>
    %c9_81 = arith.constant 9 : index
    %c0_82 = arith.constant 0 : index
    %144 = vector.load %arg16[%c9_81, %c0_82] : memref<80x192xbf16, #tpu.memory_space<vmem>>, vector<64x64xbf16>
    %cst_83 = arith.constant 0.000000e+00 : bf16
    %145 = vector.broadcast %cst_83 : bf16 to vector<64x64xbf16>
    %146 = vector.shape_cast %18 : vector<64x1xi1> to vector<64x1xi1>
    %147 = vector.broadcast %146 : vector<64x1xi1> to vector<64x64xi1>
    %148 = arith.select %147, %143, %145 : vector<64x64xi1>, vector<64x64xbf16>
    %c8_84 = arith.constant 8 : index
    %c64_85 = arith.constant 64 : index
    %149 = vector.load %arg16[%c8_84, %c64_85] : memref<80x192xbf16, #tpu.memory_space<vmem>>, vector<64x64xbf16>
    tpu.vector_store %arg16[%c8_84, %c64_85], %148 {strides = array<i32>} : memref<80x192xbf16, #tpu.memory_space<vmem>>, vector<64x64xbf16>,
    %cst_86 = arith.constant 0.000000e+00 : bf16
    %150 = vector.broadcast %cst_86 : bf16 to vector<64x64xbf16>
    %151 = vector.shape_cast %20 : vector<64x1xi1> to vector<64x1xi1>
    %152 = vector.broadcast %151 : vector<64x1xi1> to vector<64x64xi1>
    %153 = arith.select %152, %144, %150 : vector<64x64xi1>, vector<64x64xbf16>
    %c8_87 = arith.constant 8 : index
    %c128_88 = arith.constant 128 : index
    %154 = vector.load %arg16[%c8_87, %c128_88] : memref<80x192xbf16, #tpu.memory_space<vmem>>, vector<64x64xbf16>
    tpu.vector_store %arg16[%c8_87, %c128_88], %153 {strides = array<i32>} : memref<80x192xbf16, #tpu.memory_space<vmem>>, vector<64x64xbf16>,
    %c8_89 = arith.constant 8 : index
    %c0_90 = arith.constant 0 : index
    %155 = vector.load %arg16[%c8_89, %c0_90] : memref<80x192xbf16, #tpu.memory_space<vmem>>, vector<64x192xbf16>
    %c1_91 = arith.constant 1 : index
    %c0_92 = arith.constant 0 : index
    %c0_93 = arith.constant 0 : index
    %156 = vector.load %arg12[%c1_91, %c0_92, %c0_93] : memref<3x192x64xbf16, #tpu.memory_space<vmem>>, vector<1x192x64xbf16>
    %157 = vector.shape_cast %156 : vector<1x192x64xbf16> to vector<192x64xbf16>
    %cst_94 = arith.constant dense<0.000000e+00> : vector<64x64xf32>
    %158 = tpu.matmul %155, %157, %cst_94 {dimension_numbers = #tpu.dot_dimension_numbers<[1], [0], [0], [1], [0, 0, 1, 1], [], []>} : vector<64x192xbf16>, vector<192x64xbf16>, vector<64x64xf32> -> vector<64x64xf32>
    %c0_95 = arith.constant 0 : index
    %c0_96 = arith.constant 0 : index
    %159 = vector.load %arg16[%c0_95, %c0_96] : memref<80x192xbf16, #tpu.memory_space<vmem>>, vector<64x192xbf16>
    %c0_97 = arith.constant 0 : index
    %c0_98 = arith.constant 0 : index
    %c0_99 = arith.constant 0 : index
    %160 = vector.load %arg12[%c0_97, %c0_98, %c0_99] : memref<3x192x64xbf16, #tpu.memory_space<vmem>>, vector<1x192x64xbf16>
    %161 = vector.shape_cast %160 : vector<1x192x64xbf16> to vector<192x64xbf16>
    %cst_100 = arith.constant dense<0.000000e+00> : vector<64x64xf32>
    %162 = tpu.matmul %159, %161, %cst_100 {dimension_numbers = #tpu.dot_dimension_numbers<[1], [0], [0], [1], [0, 0, 1, 1], [], []>} : vector<64x192xbf16>, vector<192x64xbf16>, vector<64x64xf32> -> vector<64x64xf32>
    %c16_101 = arith.constant 16 : index
    %c0_102 = arith.constant 0 : index
    %163 = vector.load %arg16[%c16_101, %c0_102] : memref<80x192xbf16, #tpu.memory_space<vmem>>, vector<64x192xbf16>
    %c2_103 = arith.constant 2 : index
    %c0_104 = arith.constant 0 : index
    %c0_105 = arith.constant 0 : index
    %164 = vector.load %arg12[%c2_103, %c0_104, %c0_105] : memref<3x192x64xbf16, #tpu.memory_space<vmem>>, vector<1x192x64xbf16>
    %165 = vector.shape_cast %164 : vector<1x192x64xbf16> to vector<192x64xbf16>
    %cst_106 = arith.constant dense<0.000000e+00> : vector<64x64xf32>
    %166 = tpu.matmul %163, %165, %cst_106 {dimension_numbers = #tpu.dot_dimension_numbers<[1], [0], [0], [1], [0, 0, 1, 1], [], []>} : vector<64x192xbf16>, vector<192x64xbf16>, vector<64x64xf32> -> vector<64x64xf32>
    %cst_107 = arith.constant 0.000000e+00 : f32
    %167 = vector.shape_cast %22 : vector<64x1xi1> to vector<64x1xi1>
    %168 = vector.broadcast %167 : vector<64x1xi1> to vector<64x64xi1>
    %169 = vector.broadcast %cst_107 : f32 to vector<64x64xf32>
    %170 = arith.select %168, %162, %169 : vector<64x64xi1>, vector<64x64xf32>
    %171 = arith.addf %158, %170 : vector<64x64xf32>
    %cst_108 = arith.constant 0.000000e+00 : f32
    %172 = vector.shape_cast %24 : vector<64x1xi1> to vector<64x1xi1>
    %173 = vector.broadcast %172 : vector<64x1xi1> to vector<64x64xi1>
    %174 = vector.broadcast %cst_108 : f32 to vector<64x64xf32>
    %175 = arith.select %173, %166, %174 : vector<64x64xi1>, vector<64x64xf32>
    %176 = arith.addf %171, %175 : vector<64x64xf32>
    %177 = arith.truncf %26 : vector<64x64xf32> to vector<64x64xbf16>
    %c0_109 = arith.constant 0 : index
    %c0_110 = arith.constant 0 : index
    %178 = vector.load %arg13[%c0_109, %c0_110] : memref<64x64xbf16, #tpu.memory_space<vmem>>, vector<64x64xbf16>
    %cst_111 = arith.constant dense<0.000000e+00> : vector<64x64xf32>
    %179 = tpu.matmul %177, %178, %cst_111 {dimension_numbers = #tpu.dot_dimension_numbers<[1], [0], [0], [1], [0, 0, 1, 1], [], []>} : vector<64x64xbf16>, vector<64x64xbf16>, vector<64x64xf32> -> vector<64x64xf32>
    %180 = arith.addf %176, %179 : vector<64x64xf32>
    %c0_112 = arith.constant 0 : index
    %c0_113 = arith.constant 0 : index
    %181 = vector.load %arg14[%c0_112, %c0_113] : memref<1x64xf32, #tpu.memory_space<vmem>>, vector<1x64xf32>
    %182 = vector.broadcast %181 : vector<1x64xf32> to vector<64x64xf32>
    %183 = arith.addf %180, %182 : vector<64x64xf32>
    %c0_114 = arith.constant 0 : index
    %c0_115 = arith.constant 0 : index
    %c0_116 = arith.constant 0 : index
    %184 = vector.load %arg15[%c0_114, %c0_115, %c0_116] : memref<1x64x64xf32, #tpu.memory_space<vmem>>, vector<1x64x64xf32>
    %185 = vector.shape_cast %184 : vector<1x64x64xf32> to vector<64x64xf32>
    %186 = vector.shape_cast %183 : vector<64x64xf32> to vector<1x64x64xf32>
    tpu.vector_store %arg15[%c0_114, %c0_115, %c0_116], %186 {strides = array<i32>} : memref<1x64x64xf32, #tpu.memory_space<vmem>>, vector<1x64x64xf32>,
    return
  }
  func.func @transform_0(%arg0: i32) -> (i32, i32, i32) {
    %c0_i32 = arith.constant 0 : i32
    %c0_i32_0 = arith.constant 0 : i32
    %c0_i32_1 = arith.constant 0 : i32
    return %arg0, %c0_i32, %c0_i32_0 : i32, i32, i32
  }
  func.func @transform_1(%arg0: i32) -> (i32, i32, i32) {
    %c0_i32 = arith.constant 0 : i32
    %c0_i32_0 = arith.constant 0 : i32
    %c0_i32_1 = arith.constant 0 : i32
    return %arg0, %c0_i32, %c0_i32_0 : i32, i32, i32
  }
  func.func @transform_2(%arg0: i32) -> (i32, i32) {
    %c0_i32 = arith.constant 0 : i32
    %c0_i32_0 = arith.constant 0 : i32
    %c0_i32_1 = arith.constant 0 : i32
    return %c0_i32, %c0_i32_0 : i32, i32
  }
  func.func @transform_3(%arg0: i32) -> (i32, i32) {
    %c0_i32 = arith.constant 0 : i32
    %c0_i32_0 = arith.constant 0 : i32
    %c0_i32_1 = arith.constant 0 : i32
    return %c0_i32, %c0_i32_0 : i32, i32
  }
  func.func @transform_4(%arg0: i32) -> (i32, i32) {
    %c0_i32 = arith.constant 0 : i32
    %c0_i32_0 = arith.constant 0 : i32
    %c0_i32_1 = arith.constant 0 : i32
    return %c0_i32, %c0_i32_0 : i32, i32
  }
  func.func @transform_5(%arg0: i32) -> (i32, i32) {
    %c0_i32 = arith.constant 0 : i32
    %c0_i32_0 = arith.constant 0 : i32
    %c0_i32_1 = arith.constant 0 : i32
    return %c0_i32, %c0_i32_0 : i32, i32
  }
  func.func @transform_6(%arg0: i32) -> (i32, i32, i32) {
    %c0_i32 = arith.constant 0 : i32
    %c0_i32_0 = arith.constant 0 : i32
    %c0_i32_1 = arith.constant 0 : i32
    %c0_i32_2 = arith.constant 0 : i32
    return %c0_i32, %c0_i32_0, %c0_i32_1 : i32, i32, i32
  }
  func.func @transform_7(%arg0: i32) -> (i32, i32) {
    %c0_i32 = arith.constant 0 : i32
    %c0_i32_0 = arith.constant 0 : i32
    %c0_i32_1 = arith.constant 0 : i32
    return %c0_i32, %c0_i32_0 : i32, i32
  }
  func.func @transform_8(%arg0: i32) -> (i32, i32) {
    %c0_i32 = arith.constant 0 : i32
    %c0_i32_0 = arith.constant 0 : i32
    %c0_i32_1 = arith.constant 0 : i32
    return %c0_i32, %c0_i32_0 : i32, i32
  }
  func.func @transform_9(%arg0: i32) -> (i32, i32) {
    %c0_i32 = arith.constant 0 : i32
    %c0_i32_0 = arith.constant 0 : i32
    %c0_i32_1 = arith.constant 0 : i32
    return %c0_i32, %c0_i32_0 : i32, i32
  }
  func.func @transform_10(%arg0: i32) -> (i32, i32) {
    %c0_i32 = arith.constant 0 : i32
    %c0_i32_0 = arith.constant 0 : i32
    %c0_i32_1 = arith.constant 0 : i32
    return %c0_i32, %c0_i32_0 : i32, i32
  }
  func.func @transform_11(%arg0: i32) -> (i32, i32, i32) {
    %c0_i32 = arith.constant 0 : i32
    %c0_i32_0 = arith.constant 0 : i32
    %c0_i32_1 = arith.constant 0 : i32
    %c0_i32_2 = arith.constant 0 : i32
    return %c0_i32, %c0_i32_0, %c0_i32_1 : i32, i32, i32
  }
  func.func @transform_12(%arg0: i32) -> (i32, i32) {
    %c0_i32 = arith.constant 0 : i32
    %c0_i32_0 = arith.constant 0 : i32
    %c0_i32_1 = arith.constant 0 : i32
    return %c0_i32, %c0_i32_0 : i32, i32
  }
  func.func @transform_13(%arg0: i32) -> (i32, i32) {
    %c0_i32 = arith.constant 0 : i32
    %c0_i32_0 = arith.constant 0 : i32
    %c0_i32_1 = arith.constant 0 : i32
    return %c0_i32, %c0_i32_0 : i32, i32
  }
  func.func @transform_14(%arg0: i32) -> (i32, i32, i32) {
    %c0_i32 = arith.constant 0 : i32
    %c0_i32_0 = arith.constant 0 : i32
    %c0_i32_1 = arith.constant 0 : i32
    return %arg0, %c0_i32, %c0_i32_0 : i32, i32, i32
  }
}

</mosaic_0001>

<llo_original>
// kernel: tpu_custom_call.1
$region0: #{tpu_custom_call.1}
  #allocation0 [shape = 'u32[]', space=smem, size = 0x4, offset = 0x4, fixed_abs, tag = 'smem constant byte address 0x4 - core index']
  #allocation1 [shape = 'u32[144,128]{1,0:T(1,128)}', space=vmem, size = 0x12000, scoped, tag = 'internal scratch']
  #allocation2 [shape = 'bf16[80,192]{1,0:T(16,128)(2,1)}', space=vmem, size = 0xa000, scoped, tag = 'scratch operand']
  %s0 = inlined_call_operand.vmem [shape: f32[2,64,64], index: 0, kind: input, shape index: {}]
  %s1 = inlined_call_operand.vmem [shape: f32[2,1,64], index: 1, kind: input, shape index: {}]
  %s2 = inlined_call_operand.vmem [shape: f32[1,64], index: 2, kind: input, shape index: {}]
  %s3 = inlined_call_operand.vmem [shape: f32[1,64], index: 3, kind: input, shape index: {}]
  %s4 = inlined_call_operand.vmem [shape: f32[64,32], index: 4, kind: input, shape index: {}]
  %s5 = inlined_call_operand.vmem [shape: f32[32,64], index: 5, kind: input, shape index: {}]
  %s6 = inlined_call_operand.vmem [shape: bf16[3,192,64], index: 6, kind: input, shape index: {}]
  %s7 = inlined_call_operand.vmem [shape: f32[1,64], index: 7, kind: input, shape index: {}]
  %s8 = inlined_call_operand.vmem [shape: f32[1,64], index: 8, kind: input, shape index: {}]
  %s9 = inlined_call_operand.vmem [shape: f32[64,32], index: 9, kind: input, shape index: {}]
  %s10 = inlined_call_operand.vmem [shape: f32[32,64], index: 10, kind: input, shape index: {}]
  %s11 = inlined_call_operand.vmem [shape: bf16[3,192,64], index: 11, kind: input, shape index: {}]
  %s12 = inlined_call_operand.vmem [shape: bf16[64,64], index: 12, kind: input, shape index: {}]
  %s13 = inlined_call_operand.vmem [shape: f32[1,64], index: 13, kind: input, shape index: {}]
  %s14 = inlined_call_operand.hbm [shape: f32[2,64,64], index: 14, kind: output, shape index: {}]
  %s15 = sld [smem:[#allocation0]]
  $region89: #{tpu_custom_call.1} parent=0
    _
  %s17 = ssub.s32 1, %s15
  %s18 = scalar_select 0, %s17, %s15
  $region1: #{tpu_custom_call.1} parent=0
    #allocation3 [shape = 'u8[65536]{0}', space=vmem, size = 0x10000, scoped, tag = 'output window, operand 0']
    #allocation4 [shape = 's32[2]{0}', space=sflag, size = 0x8, scoped, tag = 'scoped memory for tpu_custom_call.1']
    %19 = vsyncpa [#allocation4], 0
    %s20 = scalar_lea.sflag [#allocation4], 1
    %21 = vsyncpa %s20, 0
    loop: start=0, step=1, limit=4
    $region2: #{tpu_custom_call.1} parent=1 // loop_pre_header
      _
    $region3: #{tpu_custom_call.1} parent=1 // loop_header
      %s23 = sphi 0, %s27
      %p24 = scmp.ge.s32.totalorder %s23, 4
      %s33 = sphi 0, %s35
      %s36 = sphi 0, %s33
      %s37 = sphi 0, %s36
      %s53 = sphi 0, %s37
      %s59 = sphi 0, %s61
      %s62 = sphi 0, %s59
      %s63 = sphi 0, %s62
      %s79 = sphi 0, %s63
      %s83 = sphi 0, %s83
      %s85 = sphi 0, %s83
      %s86 = sphi 0, %s85
      %s100 = sphi 0, %s86
      %s104 = sphi 0, %s104
      %s106 = sphi 0, %s104
      %s107 = sphi 0, %s106
      %s121 = sphi 0, %s107
      %s125 = sphi 0, %s125
      %s127 = sphi 0, %s125
      %s128 = sphi 0, %s127
      %s142 = sphi 0, %s128
      %s146 = sphi 0, %s146
      %s148 = sphi 0, %s146
      %s149 = sphi 0, %s148
      %s163 = sphi 0, %s149
      %s167 = sphi 0, %s167
      %s169 = sphi 0, %s167
      %s170 = sphi 0, %s169
      %s184 = sphi 0, %s170
      %s188 = sphi 0, %s188
      %s190 = sphi 0, %s188
      %s191 = sphi 0, %s190
      %s205 = sphi 0, %s191
      %s209 = sphi 0, %s209
      %s211 = sphi 0, %s209
      %s212 = sphi 0, %s211
      %s226 = sphi 0, %s212
      %s230 = sphi 0, %s230
      %s232 = sphi 0, %s230
      %s233 = sphi 0, %s232
      %s247 = sphi 0, %s233
      %s251 = sphi 0, %s251
      %s253 = sphi 0, %s251
      %s254 = sphi 0, %s253
      %s268 = sphi 0, %s254
      %s272 = sphi 0, %s272
      %s274 = sphi 0, %s272
      %s275 = sphi 0, %s274
      %s289 = sphi 0, %s275
      %s293 = sphi 0, %s293
      %s295 = sphi 0, %s293
      %s296 = sphi 0, %s295
      %s310 = sphi 0, %s296
      %s314 = sphi 0, %s314
      %s316 = sphi 0, %s314
      %s317 = sphi 0, %s316
      %s331 = sphi 0, %s317
      %s337 = sphi 0, %s339
      %s340 = sphi 0, %s337
      %s341 = sphi 0, %s340
      %s357 = sphi 0, %s341
    $region4: #{tpu_custom_call.1} parent=1 // loop_header_branch
      %26 = sbr.rel (%p24) target = $region8
    $region5: #{tpu_custom_call.1} parent=1 // loop_body
      %s28 = ssub.s32 %s23, 1
      %s29 = ssub.s32 %s23, 2
      %s30 = sadd.s32 %s23, 1
      %s31 = ssub.s32 %s23, %s30
      %p32 = scmp.eq.s32.totalorder %s31, 0
      %s34 = sadd.s32 %s33, 1
      %s35 = scalar_select %p32, %s33, %s34
      %p38 = pneg %p32
      %p39 = scmp.eq.s32.totalorder %s23, 1
      %p40 = por %p38, %p39
      %p41 = scmp.ne.s32.totalorder %s33, %s36
      %p42 = scmp.eq.s32.totalorder %s23, 0
      %p43 = por %p41, %p42
      %p44 = scmp.ne.s32.totalorder %s33, %s36
      %p45 = scmp.eq.s32.totalorder %s28, 1
      %p46 = por %p44, %p45
      %p47 = scmp.ne.s32.totalorder %s36, %s37
      %p48 = scmp.eq.s32.totalorder %s28, 0
      %p49 = por %p47, %p48
      %p50 = scmp.ne.s32.totalorder %s36, %s37
      %p51 = scmp.eq.s32.totalorder %s29, 1
      %p52 = por %p50, %p51
      %p54 = scmp.ne.s32.totalorder %s37, %s53
      %p55 = scmp.eq.s32.totalorder %s29, 0
      %p56 = por %p54, %p55
      %s57 = ssub.s32 %s23, %s30
      %p58 = scmp.eq.s32.totalorder %s57, 0
      %s60 = sadd.s32 %s59, 1
      %s61 = scalar_select %p58, %s59, %s60
      %p64 = pneg %p58
      %p65 = scmp.eq.s32.totalorder %s23, 1
      %p66 = por %p64, %p65
      %p67 = scmp.ne.s32.totalorder %s59, %s62
      %p68 = scmp.eq.s32.totalorder %s23, 0
      %p69 = por %p67, %p68
      %p70 = scmp.ne.s32.totalorder %s59, %s62
      %p71 = scmp.eq.s32.totalorder %s28, 1
      %p72 = por %p70, %p71
      %p73 = scmp.ne.s32.totalorder %s62, %s63
      %p74 = scmp.eq.s32.totalorder %s28, 0
      %p75 = por %p73, %p74
      %p76 = scmp.ne.s32.totalorder %s62, %s63
      %p77 = scmp.eq.s32.totalorder %s29, 1
      %p78 = por %p76, %p77
      %p80 = scmp.ne.s32.totalorder %s63, %s79
      %p81 = scmp.eq.s32.totalorder %s29, 0
      %p82 = por %p80, %p81
      %s84 = sadd.s32 %s83, 1
      %p87 = scmp.eq.s32.totalorder %s23, 1
      %p88 = scmp.ne.s32.totalorder %s83, %s85
      %p89 = scmp.eq.s32.totalorder %s23, 0
      %p90 = por %p88, %p89
      %p91 = scmp.ne.s32.totalorder %s83, %s85
      %p92 = scmp.eq.s32.totalorder %s28, 1
      %p93 = por %p91, %p92
      %p94 = scmp.ne.s32.totalorder %s85, %s86
      %p95 = scmp.eq.s32.totalorder %s28, 0
      %p96 = por %p94, %p95
      %p97 = scmp.ne.s32.totalorder %s85, %s86
      %p98 = scmp.eq.s32.totalorder %s29, 1
      %p99 = por %p97, %p98
      %p101 = scmp.ne.s32.totalorder %s86, %s100
      %p102 = scmp.eq.s32.totalorder %s29, 0
      %p103 = por %p101, %p102
      %s105 = sadd.s32 %s104, 1
      %p108 = scmp.eq.s32.totalorder %s23, 1
      %p109 = scmp.ne.s32.totalorder %s104, %s106
      %p110 = scmp.eq.s32.totalorder %s23, 0
      %p111 = por %p109, %p110
      %p112 = scmp.ne.s32.totalorder %s104, %s106
      %p113 = scmp.eq.s32.totalorder %s28, 1
      %p114 = por %p112, %p113
      %p115 = scmp.ne.s32.totalorder %s106, %s107
      %p116 = scmp.eq.s32.totalorder %s28, 0
      %p117 = por %p115, %p116
      %p118 = scmp.ne.s32.totalorder %s106, %s107
      %p119 = scmp.eq.s32.totalorder %s29, 1
      %p120 = por %p118, %p119
      %p122 = scmp.ne.s32.totalorder %s107, %s121
      %p123 = scmp.eq.s32.totalorder %s29, 0
      %p124 = por %p122, %p123
      %s126 = sadd.s32 %s125, 1
      %p129 = scmp.eq.s32.totalorder %s23, 1
      %p130 = scmp.ne.s32.totalorder %s125, %s127
      %p131 = scmp.eq.s32.totalorder %s23, 0
      %p132 = por %p130, %p131
      %p133 = scmp.ne.s32.totalorder %s125, %s127
      %p134 = scmp.eq.s32.totalorder %s28, 1
      %p135 = por %p133, %p134
      %p136 = scmp.ne.s32.totalorder %s127, %s128
      %p137 = scmp.eq.s32.totalorder %s28, 0
      %p138 = por %p136, %p137
      %p139 = scmp.ne.s32.totalorder %s127, %s128
      %p140 = scmp.eq.s32.totalorder %s29, 1
      %p141 = por %p139, %p140
      %p143 = scmp.ne.s32.totalorder %s128, %s142
      %p144 = scmp.eq.s32.totalorder %s29, 0
      %p145 = por %p143, %p144
      %s147 = sadd.s32 %s146, 1
      %p150 = scmp.eq.s32.totalorder %s23, 1
      %p151 = scmp.ne.s32.totalorder %s146, %s148
      %p152 = scmp.eq.s32.totalorder %s23, 0
      %p153 = por %p151, %p152
      %p154 = scmp.ne.s32.totalorder %s146, %s148
      %p155 = scmp.eq.s32.totalorder %s28, 1
      %p156 = por %p154, %p155
      %p157 = scmp.ne.s32.totalorder %s148, %s149
      %p158 = scmp.eq.s32.totalorder %s28, 0
      %p159 = por %p157, %p158
      %p160 = scmp.ne.s32.totalorder %s148, %s149
      %p161 = scmp.eq.s32.totalorder %s29, 1
      %p162 = por %p160, %p161
      %p164 = scmp.ne.s32.totalorder %s149, %s163
      %p165 = scmp.eq.s32.totalorder %s29, 0
      %p166 = por %p164, %p165
      %s168 = sadd.s32 %s167, 1
      %p171 = scmp.eq.s32.totalorder %s23, 1
      %p172 = scmp.ne.s32.totalorder %s167, %s169
      %p173 = scmp.eq.s32.totalorder %s23, 0
      %p174 = por %p172, %p173
      %p175 = scmp.ne.s32.totalorder %s167, %s169
      %p176 = scmp.eq.s32.totalorder %s28, 1
      %p177 = por %p175, %p176
      %p178 = scmp.ne.s32.totalorder %s169, %s170
      %p179 = scmp.eq.s32.totalorder %s28, 0
      %p180 = por %p178, %p179
      %p181 = scmp.ne.s32.totalorder %s169, %s170
      %p182 = scmp.eq.s32.totalorder %s29, 1
      %p183 = por %p181, %p182
      %p185 = scmp.ne.s32.totalorder %s170, %s184
      %p186 = scmp.eq.s32.totalorder %s29, 0
      %p187 = por %p185, %p186
      %s189 = sadd.s32 %s188, 1
      %p192 = scmp.eq.s32.totalorder %s23, 1
      %p193 = scmp.ne.s32.totalorder %s188, %s190
      %p194 = scmp.eq.s32.totalorder %s23, 0
      %p195 = por %p193, %p194
      %p196 = scmp.ne.s32.totalorder %s188, %s190
      %p197 = scmp.eq.s32.totalorder %s28, 1
      %p198 = por %p196, %p197
      %p199 = scmp.ne.s32.totalorder %s190, %s191
      %p200 = scmp.eq.s32.totalorder %s28, 0
      %p201 = por %p199, %p200
      %p202 = scmp.ne.s32.totalorder %s190, %s191
      %p203 = scmp.eq.s32.totalorder %s29, 1
      %p204 = por %p202, %p203
      %p206 = scmp.ne.s32.totalorder %s191, %s205
      %p207 = scmp.eq.s32.totalorder %s29, 0
      %p208 = por %p206, %p207
      %s210 = sadd.s32 %s209, 1
      %p213 = scmp.eq.s32.totalorder %s23, 1
      %p214 = scmp.ne.s32.totalorder %s209, %s211
      %p215 = scmp.eq.s32.totalorder %s23, 0
      %p216 = por %p214, %p215
      %p217 = scmp.ne.s32.totalorder %s209, %s211
      %p218 = scmp.eq.s32.totalorder %s28, 1
      %p219 = por %p217, %p218
      %p220 = scmp.ne.s32.totalorder %s211, %s212
      %p221 = scmp.eq.s32.totalorder %s28, 0
      %p222 = por %p220, %p221
      %p223 = scmp.ne.s32.totalorder %s211, %s212
      %p224 = scmp.eq.s32.totalorder %s29, 1
      %p225 = por %p223, %p224
      %p227 = scmp.ne.s32.totalorder %s212, %s226
      %p228 = scmp.eq.s32.totalorder %s29, 0
      %p229 = por %p227, %p228
      %s231 = sadd.s32 %s230, 1
      %p234 = scmp.eq.s32.totalorder %s23, 1
      %p235 = scmp.ne.s32.totalorder %s230, %s232
      %p236 = scmp.eq.s32.totalorder %s23, 0
      %p237 = por %p235, %p236
      %p238 = scmp.ne.s32.totalorder %s230, %s232
      %p239 = scmp.eq.s32.totalorder %s28, 1
      %p240 = por %p238, %p239
      %p241 = scmp.ne.s32.totalorder %s232, %s233
      %p242 = scmp.eq.s32.totalorder %s28, 0
      %p243 = por %p241, %p242
      %p244 = scmp.ne.s32.totalorder %s232, %s233
      %p245 = scmp.eq.s32.totalorder %s29, 1
      %p246 = por %p244, %p245
      %p248 = scmp.ne.s32.totalorder %s233, %s247
      %p249 = scmp.eq.s32.totalorder %s29, 0
      %p250 = por %p248, %p249
      %s252 = sadd.s32 %s251, 1
      %p255 = scmp.eq.s32.totalorder %s23, 1
      %p256 = scmp.ne.s32.totalorder %s251, %s253
      %p257 = scmp.eq.s32.totalorder %s23, 0
      %p258 = por %p256, %p257
      %p259 = scmp.ne.s32.totalorder %s251, %s253
      %p260 = scmp.eq.s32.totalorder %s28, 1
      %p261 = por %p259, %p260
      %p262 = scmp.ne.s32.totalorder %s253, %s254
      %p263 = scmp.eq.s32.totalorder %s28, 0
      %p264 = por %p262, %p263
      %p265 = scmp.ne.s32.totalorder %s253, %s254
      %p266 = scmp.eq.s32.totalorder %s29, 1
      %p267 = por %p265, %p266
      %p269 = scmp.ne.s32.totalorder %s254, %s268
      %p270 = scmp.eq.s32.totalorder %s29, 0
      %p271 = por %p269, %p270
      %s273 = sadd.s32 %s272, 1
      %p276 = scmp.eq.s32.totalorder %s23, 1
      %p277 = scmp.ne.s32.totalorder %s272, %s274
      %p278 = scmp.eq.s32.totalorder %s23, 0
      %p279 = por %p277, %p278
      %p280 = scmp.ne.s32.totalorder %s272, %s274
      %p281 = scmp.eq.s32.totalorder %s28, 1
      %p282 = por %p280, %p281
      %p283 = scmp.ne.s32.totalorder %s274, %s275
      %p284 = scmp.eq.s32.totalorder %s28, 0
      %p285 = por %p283, %p284
      %p286 = scmp.ne.s32.totalorder %s274, %s275
      %p287 = scmp.eq.s32.totalorder %s29, 1
      %p288 = por %p286, %p287
      %p290 = scmp.ne.s32.totalorder %s275, %s289
      %p291 = scmp.eq.s32.totalorder %s29, 0
      %p292 = por %p290, %p291
      %s294 = sadd.s32 %s293, 1
      %p297 = scmp.eq.s32.totalorder %s23, 1
      %p298 = scmp.ne.s32.totalorder %s293, %s295
      %p299 = scmp.eq.s32.totalorder %s23, 0
      %p300 = por %p298, %p299
      %p301 = scmp.ne.s32.totalorder %s293, %s295
      %p302 = scmp.eq.s32.totalorder %s28, 1
      %p303 = por %p301, %p302
      %p304 = scmp.ne.s32.totalorder %s295, %s296
      %p305 = scmp.eq.s32.totalorder %s28, 0
      %p306 = por %p304, %p305
      %p307 = scmp.ne.s32.totalorder %s295, %s296
      %p308 = scmp.eq.s32.totalorder %s29, 1
      %p309 = por %p307, %p308
      %p311 = scmp.ne.s32.totalorder %s296, %s310
      %p312 = scmp.eq.s32.totalorder %s29, 0
      %p313 = por %p311, %p312
      %s315 = sadd.s32 %s314, 1
      %p318 = scmp.eq.s32.totalorder %s23, 1
      %p319 = scmp.ne.s32.totalorder %s314, %s316
      %p320 = scmp.eq.s32.totalorder %s23, 0
      %p321 = por %p319, %p320
      %p322 = scmp.ne.s32.totalorder %s314, %s316
      %p323 = scmp.eq.s32.totalorder %s28, 1
      %p324 = por %p322, %p323
      %p325 = scmp.ne.s32.totalorder %s316, %s317
      %p326 = scmp.eq.s32.totalorder %s28, 0
      %p327 = por %p325, %p326
      %p328 = scmp.ne.s32.totalorder %s316, %s317
      %p329 = scmp.eq.s32.totalorder %s29, 1
      %p330 = por %p328, %p329
      %p332 = scmp.ne.s32.totalorder %s317, %s331
      %p333 = scmp.eq.s32.totalorder %s29, 0
      %p334 = por %p332, %p333
      %s335 = ssub.s32 %s23, %s30
      %p336 = scmp.eq.s32.totalorder %s335, 0
      %s338 = sadd.s32 %s337, 1
      %s339 = scalar_select %p336, %s337, %s338
      %p342 = pneg %p336
      %p343 = scmp.eq.s32.totalorder %s23, 1
      %p344 = por %p342, %p343
      %p345 = scmp.ne.s32.totalorder %s337, %s340
      %p346 = scmp.eq.s32.totalorder %s23, 0
      %p347 = por %p345, %p346
      %p348 = scmp.ne.s32.totalorder %s337, %s340
      %p349 = scmp.eq.s32.totalorder %s28, 1
      %p350 = por %p348, %p349
      %p351 = scmp.ne.s32.totalorder %s340, %s341
      %p352 = scmp.eq.s32.totalorder %s28, 0
      %p353 = por %p351, %p352
      %p354 = scmp.ne.s32.totalorder %s340, %s341
      %p355 = scmp.eq.s32.totalorder %s29, 1
      %p356 = por %p354, %p355
      %p358 = scmp.ne.s32.totalorder %s341, %s357
      %p359 = scmp.eq.s32.totalorder %s29, 0
      %p360 = por %p358, %p359
      %p361 = scmp.le.s32.totalorder 1, %s23
      %p362 = scmp.lt.s32.totalorder %s23, 3
      %p363 = pnand %p361, %p362
      %p364 = pneg %p363
      // Predicated region
      $region9: #{tpu_custom_call.1} parent=5 // pred_check
        _
      $region10: #{tpu_custom_call.1} parent=5 // pred_check_branch
        %366 = sbr.rel (%p363) target = $region12
      $region11: #{tpu_custom_call.1} parent=5 // pred_region
        %s367 = ssub.s32 %s23, 1
        // Predicated region
        $region13: #{tpu_custom_call.1} parent=11 // pred_check
          %p368 = pneg %p96
        $region14: #{tpu_custom_call.1} parent=11 // pred_check_branch
          %370 = sbr.rel (%p368) target = $region16
        $region15: #{tpu_custom_call.1} parent=11 // pred_region
          _
        $region16: #{tpu_custom_call.1} parent=11 // pred_fallthru
          _
        // Predicated region
        $region17: #{tpu_custom_call.1} parent=11 // pred_check
          %p371 = pneg %p117
        $region18: #{tpu_custom_call.1} parent=11 // pred_check_branch
          %373 = sbr.rel (%p371) target = $region20
        $region19: #{tpu_custom_call.1} parent=11 // pred_region
          _
        $region20: #{tpu_custom_call.1} parent=11 // pred_fallthru
          _
        // Predicated region
        $region21: #{tpu_custom_call.1} parent=11 // pred_check
          %p374 = pneg %p138
        $region22: #{tpu_custom_call.1} parent=11 // pred_check_branch
          %376 = sbr.rel (%p374) target = $region24
        $region23: #{tpu_custom_call.1} parent=11 // pred_region
          _
        $region24: #{tpu_custom_call.1} parent=11 // pred_fallthru
          _
        // Predicated region
        $region25: #{tpu_custom_call.1} parent=11 // pred_check
          %p377 = pneg %p159
        $region26: #{tpu_custom_call.1} parent=11 // pred_check_branch
          %379 = sbr.rel (%p377) target = $region28
        $region27: #{tpu_custom_call.1} parent=11 // pred_region
          _
        $region28: #{tpu_custom_call.1} parent=11 // pred_fallthru
          _
        // Predicated region
        $region29: #{tpu_custom_call.1} parent=11 // pred_check
          %p380 = pneg %p180
        $region30: #{tpu_custom_call.1} parent=11 // pred_check_branch
          %382 = sbr.rel (%p380) target = $region32
        $region31: #{tpu_custom_call.1} parent=11 // pred_region
          _
        $region32: #{tpu_custom_call.1} parent=11 // pred_fallthru
          _
        // Predicated region
        $region33: #{tpu_custom_call.1} parent=11 // pred_check
          %p383 = pneg %p201
        $region34: #{tpu_custom_call.1} parent=11 // pred_check_branch
          %385 = sbr.rel (%p383) target = $region36
        $region35: #{tpu_custom_call.1} parent=11 // pred_region
          _
        $region36: #{tpu_custom_call.1} parent=11 // pred_fallthru
          _
        // Predicated region
        $region37: #{tpu_custom_call.1} parent=11 // pred_check
          %p386 = pneg %p222
        $region38: #{tpu_custom_call.1} parent=11 // pred_check_branch
          %388 = sbr.rel (%p386) target = $region40
        $region39: #{tpu_custom_call.1} parent=11 // pred_region
          _
        $region40: #{tpu_custom_call.1} parent=11 // pred_fallthru
          _
        // Predicated region
        $region41: #{tpu_custom_call.1} parent=11 // pred_check
          %p389 = pneg %p243
        $region42: #{tpu_custom_call.1} parent=11 // pred_check_branch
          %391 = sbr.rel (%p389) target = $region44
        $region43: #{tpu_custom_call.1} parent=11 // pred_region
          _
        $region44: #{tpu_custom_call.1} parent=11 // pred_fallthru
          _
        // Predicated region
        $region45: #{tpu_custom_call.1} parent=11 // pred_check
          %p392 = pneg %p264
        $region46: #{tpu_custom_call.1} parent=11 // pred_check_branch
          %394 = sbr.rel (%p392) target = $region48
        $region47: #{tpu_custom_call.1} parent=11 // pred_region
          _
        $region48: #{tpu_custom_call.1} parent=11 // pred_fallthru
          _
        // Predicated region
        $region49: #{tpu_custom_call.1} parent=11 // pred_check
          %p395 = pneg %p285
        $region50: #{tpu_custom_call.1} parent=11 // pred_check_branch
          %397 = sbr.rel (%p395) target = $region52
        $region51: #{tpu_custom_call.1} parent=11 // pred_region
          _
        $region52: #{tpu_custom_call.1} parent=11 // pred_fallthru
          _
        // Predicated region
        $region53: #{tpu_custom_call.1} parent=11 // pred_check
          %p398 = pneg %p306
        $region54: #{tpu_custom_call.1} parent=11 // pred_check_branch
          %400 = sbr.rel (%p398) target = $region56
        $region55: #{tpu_custom_call.1} parent=11 // pred_region
          _
        $region56: #{tpu_custom_call.1} parent=11 // pred_fallthru
          _
        // Predicated region
        $region57: #{tpu_custom_call.1} parent=11 // pred_check
          %p401 = pneg %p327
        $region58: #{tpu_custom_call.1} parent=11 // pred_check_branch
          %403 = sbr.rel (%p401) target = $region60
        $region59: #{tpu_custom_call.1} parent=11 // pred_region
          _
        $region60: #{tpu_custom_call.1} parent=11 // pred_fallthru
          _
      $region12: #{tpu_custom_call.1} parent=5 // pred_fallthru
        _
      %p404 = scmp.lt.s32.totalorder %s23, 2
      // Predicated region
      $region61: #{tpu_custom_call.1} parent=5 // pred_check
        %p405 = pneg %p404
      $region62: #{tpu_custom_call.1} parent=5 // pred_check_branch
        %407 = sbr.rel (%p405) target = $region64
      $region63: #{tpu_custom_call.1} parent=5 // pred_region
        // Predicated region
        $region65: #{tpu_custom_call.1} parent=63 // pred_check
          %p408 = pneg %p43
        $region66: #{tpu_custom_call.1} parent=63 // pred_check_branch
          %410 = sbr.rel (%p408) target = $region68
        $region67: #{tpu_custom_call.1} parent=63 // pred_region
          %p411 = scmp.lt.s32.totalorder %s23, 1
          %s412 = scalar_select %p411, %s23, 1
          %s413 = smul.addr %s412, 8
          %s414 = smul.addr %s413, 8
          %s415 = scalar_lea.vmem %s0, %s414
        $region68: #{tpu_custom_call.1} parent=63 // pred_fallthru
          _
        // Predicated region
        $region69: #{tpu_custom_call.1} parent=63 // pred_check
          %p416 = pneg %p69
        $region70: #{tpu_custom_call.1} parent=63 // pred_check_branch
          %418 = sbr.rel (%p416) target = $region72
        $region71: #{tpu_custom_call.1} parent=63 // pred_region
          %p419 = scmp.lt.s32.totalorder %s23, 1
          %s420 = scalar_select %p419, %s23, 1
          %s421 = scalar_lea.vmem %s1, %s420
        $region72: #{tpu_custom_call.1} parent=63 // pred_fallthru
          _
      $region64: #{tpu_custom_call.1} parent=5 // pred_fallthru
        _
      %p422 = scmp.le.s32.totalorder 1, %s23
      %p423 = scmp.lt.s32.totalorder %s23, 3
      %p424 = pnand %p422, %p423
      %p425 = pneg %p424
      // Predicated region
      $region73: #{tpu_custom_call.1} parent=5 // pred_check
        _
      $region74: #{tpu_custom_call.1} parent=5 // pred_check_branch
        %427 = sbr.rel (%p424) target = $region76
      $region75: #{tpu_custom_call.1} parent=5 // pred_region
        %s428 = ssub.s32 %s23, 1
        %p429 = scmp.lt.s32.totalorder %s28, 1
        %s430 = scalar_select %p429, %s28, 1
        %s431 = smul.addr %s430, 8
        %s432 = smul.addr %s431, 8
        %s433 = scalar_lea.vmem %s0, %s432
        %p434 = pneg %p49
        %p435 = pneg %p46
        %p436 = scmp.lt.s32.totalorder %s28, 1
        %s437 = scalar_select %p436, %s28, 1
        %s438 = scalar_lea.vmem %s1, %s437
        %p439 = pneg %p75
        %p440 = pneg %p72
        %p441 = pneg %p96
        %p442 = pneg %p93
        %p443 = pneg %p117
        %p444 = pneg %p114
        %p445 = pneg %p138
        %p446 = pneg %p135
        %p447 = pneg %p159
        %p448 = pneg %p156
        %p449 = pneg %p180
        %p450 = pneg %p177
        %p451 = pneg %p201
        %p452 = pneg %p198
        %p453 = pneg %p222
        %p454 = pneg %p219
        %p455 = pneg %p243
        %p456 = pneg %p240
        %p457 = pneg %p264
        %p458 = pneg %p261
        %p459 = pneg %p285
        %p460 = pneg %p282
        %p461 = pneg %p306
        %p462 = pneg %p303
        %p463 = pneg %p327
        %p464 = pneg %p324
        %p465 = pneg %p353
        %p466 = pneg %p350
        %s467 = sand.u32 %s340, 1
        %s468 = scalar_lea.sflag [#allocation4], %s467
        %s469 = sand.u32 %s340, 1
        %s470 = smul.addr %s469, 64
        %s471 = scalar_lea.vmem [#allocation3], %s470
        %p472 = scmp.lt.s32.totalorder %s28, 1
        %s473 = scalar_select %p472, %s28, 1
        %s474 = smul.addr %s473, 8
        %s475 = smul.addr %s474, 8
        %s476 = scalar_lea.vmem %s0, %s475
        %p477 = scmp.lt.s32.totalorder %s28, 1
        %s478 = scalar_select %p477, %s28, 1
        %s479 = scalar_lea.vmem %s1, %s478
        %v483 = vlaneseq
        %v484 = vshrl.u32 %v483, 7
        %v485 = vadd.s32 %v484, 8
        %v486 = vadd.s32 %v484, 16
        %v487 = vadd.s32 %v484, 24
        %v488 = vadd.s32 %v484, 32
        %v489 = vadd.s32 %v484, 40
        %v490 = vadd.s32 %v484, 48
        %v491 = vadd.s32 %v484, 56
        %vm492 = vcmp.lt.s32.totalorder %v484, 0
        %v493 = vsub.s32 0, %v484
        %v494 = vsel %vm492, %v493, %v484
        %v495 = vshrl.u32 %v494, 3
        %v496 = vand.u32 %v494, 7
        %v497 = vsub.s32 0, %v496
        %v498 = vsel %vm492, %v497, %v496
        %vm499 = vcmp.lt.s32.totalorder %v485, 0
        %v500 = vsub.s32 0, %v485
        %v501 = vsel %vm499, %v500, %v485
        %v502 = vshrl.u32 %v501, 3
        %v503 = vand.u32 %v501, 7
        %v504 = vsub.s32 0, %v503
        %v505 = vsel %vm499, %v504, %v503
        %vm506 = vcmp.lt.s32.totalorder %v486, 0
        %v507 = vsub.s32 0, %v486
        %v508 = vsel %vm506, %v507, %v486
        %v509 = vshrl.u32 %v508, 3
        %v510 = vand.u32 %v508, 7
        %v511 = vsub.s32 0, %v510
        %v512 = vsel %vm506, %v511, %v510
        %vm513 = vcmp.lt.s32.totalorder %v487, 0
        %v514 = vsub.s32 0, %v487
        %v515 = vsel %vm513, %v514, %v487
        %v516 = vshrl.u32 %v515, 3
        %v517 = vand.u32 %v515, 7
        %v518 = vsub.s32 0, %v517
        %v519 = vsel %vm513, %v518, %v517
        %vm520 = vcmp.lt.s32.totalorder %v488, 0
        %v521 = vsub.s32 0, %v488
        %v522 = vsel %vm520, %v521, %v488
        %v523 = vshrl.u32 %v522, 3
        %v524 = vand.u32 %v522, 7
        %v525 = vsub.s32 0, %v524
        %v526 = vsel %vm520, %v525, %v524
        %vm527 = vcmp.lt.s32.totalorder %v489, 0
        %v528 = vsub.s32 0, %v489
        %v529 = vsel %vm527, %v528, %v489
        %v530 = vshrl.u32 %v529, 3
        %v531 = vand.u32 %v529, 7
        %v532 = vsub.s32 0, %v531
        %v533 = vsel %vm527, %v532, %v531
        %vm534 = vcmp.lt.s32.totalorder %v490, 0
        %v535 = vsub.s32 0, %v490
        %v536 = vsel %vm534, %v535, %v490
        %v537 = vshrl.u32 %v536, 3
        %v538 = vand.u32 %v536, 7
        %v539 = vsub.s32 0, %v538
        %v540 = vsel %vm534, %v539, %v538
        %vm541 = vcmp.lt.s32.totalorder %v491, 0
        %v542 = vsub.s32 0, %v491
        %v543 = vsel %vm541, %v542, %v491
        %v544 = vshrl.u32 %v543, 3
        %v545 = vand.u32 %v543, 7
        %v546 = vsub.s32 0, %v545
        %v547 = vsel %vm541, %v546, %v545
        %vm548 = vcmp.ne.s32.totalorder %v498, 0
        %vm549 = vcmp.ne.s32.totalorder %v505, 0
        %vm550 = vcmp.ne.s32.totalorder %v512, 0
        %vm551 = vcmp.ne.s32.totalorder %v519, 0
        %vm552 = vcmp.ne.s32.totalorder %v526, 0
        %vm553 = vcmp.ne.s32.totalorder %v533, 0
        %vm554 = vcmp.ne.s32.totalorder %v540, 0
        %vm555 = vcmp.ne.s32.totalorder %v547, 0
        %vm556 = vcmp.lt.s32.totalorder %v498, 0
        %vm557 = vcmp.lt.s32.totalorder %v505, 0
        %vm558 = vcmp.lt.s32.totalorder %v512, 0
        %vm559 = vcmp.lt.s32.totalorder %v519, 0
        %vm560 = vcmp.lt.s32.totalorder %v526, 0
        %vm561 = vcmp.lt.s32.totalorder %v533, 0
        %vm562 = vcmp.lt.s32.totalorder %v540, 0
        %vm563 = vcmp.lt.s32.totalorder %v547, 0
        %vm564 = vmand %vm556, %vm548
        %vm565 = vmand %vm557, %vm549
        %vm566 = vmand %vm558, %vm550
        %vm567 = vmand %vm559, %vm551
        %vm568 = vmand %vm560, %vm552
        %vm569 = vmand %vm561, %vm553
        %vm570 = vmand %vm562, %vm554
        %vm571 = vmand %vm563, %vm555
        %v572 = vadd.s32 %v498, 8
        %v573 = vadd.s32 %v505, 8
        %v574 = vadd.s32 %v512, 8
        %v575 = vadd.s32 %v519, 8
        %v576 = vadd.s32 %v526, 8
        %v577 = vadd.s32 %v533, 8
        %v578 = vadd.s32 %v540, 8
        %v579 = vadd.s32 %v547, 8
        %v580 = vsel %vm564, %v572, %v498
        %v581 = vsel %vm565, %v573, %v505
        %v582 = vsel %vm566, %v574, %v512
        %v583 = vsel %vm567, %v575, %v519
        %v584 = vsel %vm568, %v576, %v526
        %v585 = vsel %vm569, %v577, %v533
        %v586 = vsel %vm570, %v578, %v540
        %v587 = vsel %vm571, %v579, %v547
        %vm588 = vcmp.ne.s32.totalorder %v580, 0
        %vm589 = vcmp.ne.s32.totalorder %v581, 0
        %vm590 = vcmp.ne.s32.totalorder %v582, 0
        %vm591 = vcmp.ne.s32.totalorder %v583, 0
        %vm592 = vcmp.ne.s32.totalorder %v584, 0
        %vm593 = vcmp.ne.s32.totalorder %v585, 0
        %vm594 = vcmp.ne.s32.totalorder %v586, 0
        %vm595 = vcmp.ne.s32.totalorder %v587, 0
        %vm596 = vcmp.ne.s32.totalorder %v580, 7
        %vm597 = vcmp.ne.s32.totalorder %v581, 7
        %vm598 = vcmp.ne.s32.totalorder %v582, 7
        %vm599 = vcmp.ne.s32.totalorder %v583, 7
        %vm600 = vcmp.ne.s32.totalorder %v584, 7
        %vm601 = vcmp.ne.s32.totalorder %v585, 7
        %vm602 = vcmp.ne.s32.totalorder %v586, 7
        %vm603 = vcmp.ne.s32.totalorder %v587, 7
        %vm604 = vcmp.ge.s32.totalorder %v484, 8
        %vm605 = vcmp.ge.s32.totalorder %v485, 8
        %vm606 = vcmp.ge.s32.totalorder %v486, 8
        %vm607 = vcmp.ge.s32.totalorder %v487, 8
        %vm608 = vcmp.ge.s32.totalorder %v488, 8
        %vm609 = vcmp.ge.s32.totalorder %v489, 8
        %vm610 = vcmp.ge.s32.totalorder %v490, 8
        %vm611 = vcmp.ge.s32.totalorder %v491, 8
        %vm612 = vcmp.lt.s32.totalorder %v484, 56
        %vm613 = vcmp.lt.s32.totalorder %v485, 56
        %vm614 = vcmp.lt.s32.totalorder %v486, 56
        %vm615 = vcmp.lt.s32.totalorder %v487, 56
        %vm616 = vcmp.lt.s32.totalorder %v488, 56
        %vm617 = vcmp.lt.s32.totalorder %v489, 56
        %vm618 = vcmp.lt.s32.totalorder %v490, 56
        %vm619 = vcmp.lt.s32.totalorder %v491, 56
        %v620 = vld [vmem:[%s476] sm:$0xff]
        %v621 = vld [vmem:[%s476 + $0x8] sm:$0xff]
        %v622 = vld [vmem:[%s476 + $0x10] sm:$0xff]
        %v623 = vld [vmem:[%s476 + $0x18] sm:$0xff]
        %v624 = vld [vmem:[%s476 + $0x20] sm:$0xff]
        %v625 = vld [vmem:[%s476 + $0x28] sm:$0xff]
        %v626 = vld [vmem:[%s476 + $0x30] sm:$0xff]
        %v627 = vld [vmem:[%s476 + $0x38] sm:$0xff]
        %vm628 = vcmask 523264
        %v629 = vsel %vm628, %v620, 0.0
        %v630 = vsel %vm628, %v621, 0.0
        %v631 = vadd.f32 %v629, %v630
        %v632 = vsel %vm628, %v622, 0.0
        %v633 = vadd.f32 %v631, %v632
        %v634 = vsel %vm628, %v623, 0.0
        %v635 = vadd.f32 %v633, %v634
        %v636 = vsel %vm628, %v624, 0.0
        %v637 = vadd.f32 %v635, %v636
        %v638 = vsel %vm628, %v625, 0.0
        %v639 = vadd.f32 %v637, %v638
        %v640 = vsel %vm628, %v626, 0.0
        %v641 = vadd.f32 %v639, %v640
        %v642 = vsel %vm628, %v627, 0.0
        %v643 = vadd.f32 %v641, %v642
        %v644 = vrot.slane %v643, 4
        %v645 = vadd.f32 %v643, %v644
        %v646 = vrot.slane %v645, 2
        %v647 = vadd.f32 %v645, %v646
        %v648 = vrot.slane %v647, 1
        %v649 = vadd.f32 %v647, %v648
        %v650 = vmul.f32 %v620, %v620
        %v651 = vmul.f32 %v621, %v621
        %v652 = vmul.f32 %v622, %v622
        %v653 = vmul.f32 %v623, %v623
        %v654 = vmul.f32 %v624, %v624
        %v655 = vmul.f32 %v625, %v625
        %v656 = vmul.f32 %v626, %v626
        %v657 = vmul.f32 %v627, %v627
        %v658 = vsel %vm628, %v650, 0.0
        %v659 = vsel %vm628, %v651, 0.0
        %v660 = vadd.f32 %v658, %v659
        %v661 = vsel %vm628, %v652, 0.0
        %v662 = vadd.f32 %v660, %v661
        %v663 = vsel %vm628, %v653, 0.0
        %v664 = vadd.f32 %v662, %v663
        %v665 = vsel %vm628, %v654, 0.0
        %v666 = vadd.f32 %v664, %v665
        %v667 = vsel %vm628, %v655, 0.0
        %v668 = vadd.f32 %v666, %v667
        %v669 = vsel %vm628, %v656, 0.0
        %v670 = vadd.f32 %v668, %v669
        %v671 = vsel %vm628, %v657, 0.0
        %v672 = vadd.f32 %v670, %v671
        %v673 = vrot.slane %v672, 4
        %v674 = vadd.f32 %v672, %v673
        %v675 = vrot.slane %v674, 2
        %v676 = vadd.f32 %v674, %v675
        %v677 = vrot.slane %v676, 1
        %v678 = vadd.f32 %v676, %v677
        %v679 = vld [vmem:[%s4] sm:$0xff]
        %v680 = vld [vmem:[%s4 + $0x8] sm:$0xff]
        %v681 = vld [vmem:[%s4 + $0x10] sm:$0xff]
        %v682 = vld [vmem:[%s4 + $0x18] sm:$0xff]
        %v683 = vld [vmem:[%s4 + $0x20] sm:$0xff]
        %v684 = vld [vmem:[%s4 + $0x28] sm:$0xff]
        %v685 = vld [vmem:[%s4 + $0x30] sm:$0xff]
        %v686 = vld [vmem:[%s4 + $0x38] sm:$0xff]
        %v688 = vsel %vm628, %v649, 0
        %690 = vmatprep.subr.mxu0 0.0
        %691 = vmatpush1.msra.mxu0 %v679
        %692 = vmatprep.subr.mxu0 0.0
        %693 = vmatpush1.msra.mxu0 %v680
        %694 = vmatprep.subr.mxu0 0.0
        %695 = vmatpush1.msra.mxu0 %v681
        %696 = vmatprep.subr.mxu0 0.0
        %697 = vmatpush1.msra.mxu0 %v682
        %698 = vmatprep.subr.mxu0 0.0
        %699 = vmatpush1.msra.mxu0 %v683
        %700 = vmatprep.subr.mxu0 0.0
        %701 = vmatpush1.msra.mxu0 %v684
        %702 = vmatprep.subr.mxu0 0.0
        %703 = vmatpush1.msra.mxu0 %v685
        %704 = vmatprep.subr.mxu0 0.0
        %705 = vmatpush1.msra.mxu0 %v686
        %706 = vmatprep.subr.mxu0 0.0
        %707 = vmatpush1.msra.mxu0 0.0
        %708 = vmatprep.subr.mxu0 0.0
        %709 = vmatpush1.msra.mxu0 0.0
        %710 = vmatprep.subr.mxu0 0.0
        %711 = vmatpush1.msra.mxu0 0.0
        %712 = vmatprep.subr.mxu0 0.0
        %713 = vmatpush1.msra.mxu0 0.0
        %714 = vmatprep.subr.mxu0 0.0
        %715 = vmatpush1.msra.mxu0 0.0
        %716 = vmatprep.subr.mxu0 0.0
        %717 = vmatpush1.msra.mxu0 0.0
        %718 = vmatprep.subr.mxu0 0.0
        %719 = vmatpush1.msra.mxu0 0.0
        %720 = vmatprep.subr.mxu0 0.0
        %721 = vmatpush1.msra.mxu0 0.0
        %722 = vmatprep.subr.mxu0 0.0
        %723 = vmatpush1.msra.mxu0 0.0
        %724 = vmatprep.subr.mxu0 0.0
        %725 = vmatpush1.msra.mxu0 0.0
        %726 = vmatprep.subr.mxu0 0.0
        %727 = vmatpush1.msra.mxu0 0.0
        %728 = vmatprep.subr.mxu0 0.0
        %729 = vmatpush1.msra.mxu0 0.0
        %730 = vmatprep.subr.mxu0 0.0
        %731 = vmatpush1.msra.mxu0 0.0
        %732 = vmatprep.subr.mxu0 0.0
        %733 = vmatpush1.msra.mxu0 0.0
        %734 = vmatprep.subr.mxu0 0.0
        %735 = vmatpush1.msra.mxu0 0.0
        %736 = vmatprep.subr.mxu0 0.0
        %737 = vmatpush1.msra.mxu0 0.0
        %738 = vmatprep.subr.mxu0 0.0
        %739 = vmatpush1.msra.mxu0 0.0
        %740 = vmatprep.subr.mxu0 0.0
        %741 = vmatpush1.msra.mxu0 0.0
        %742 = vmatprep.subr.mxu0 0.0
        %743 = vmatpush1.msra.mxu0 0.0
        %744 = vmatprep.subr.mxu0 0.0
        %745 = vmatpush1.msra.mxu0 0.0
        %746 = vmatprep.subr.mxu0 0.0
        %747 = vmatpush1.msra.mxu0 0.0
        %748 = vmatprep.subr.mxu0 0.0
        %749 = vmatpush1.msra.mxu0 0.0
        %750 = vmatprep.subr.mxu0 0.0
        %751 = vmatpush1.msra.mxu0 0.0
        %752 = vmatprep.subr.mxu0 0.0
        %753 = vmatpush1.msra.mxu0 0.0
        %754 = vmatprep.mubr.f32.mxu0 0.0
        %755 = vmatmul.mubr.f32.gmra.mrb[0].mxu0 %v688
        %v756 = vpop.f32.mrb[0].mxu0
        %v757 = vadd.f32 0.0, %v756
        %v758 = vpop.f32.mrb[0].mxu0
        %759 = vdwg.mxu0
        %v760 = vrcp.pop 128.0
        %v761 = vmul.f32 %v757, %v760
        %v763 = vsel %vm628, %v678, 0
        %765 = vmatprep.subr.mxu0 0.0
        %766 = vmatpush1.msra.mxu0 %v679
        %767 = vmatprep.subr.mxu0 0.0
        %768 = vmatpush1.msra.mxu0 %v680
        %769 = vmatprep.subr.mxu0 0.0
        %770 = vmatpush1.msra.mxu0 %v681
        %771 = vmatprep.subr.mxu0 0.0
        %772 = vmatpush1.msra.mxu0 %v682
        %773 = vmatprep.subr.mxu0 0.0
        %774 = vmatpush1.msra.mxu0 %v683
        %775 = vmatprep.subr.mxu0 0.0
        %776 = vmatpush1.msra.mxu0 %v684
        %777 = vmatprep.subr.mxu0 0.0
        %778 = vmatpush1.msra.mxu0 %v685
        %779 = vmatprep.subr.mxu0 0.0
        %780 = vmatpush1.msra.mxu0 %v686
        %781 = vmatprep.subr.mxu0 0.0
        %782 = vmatpush1.msra.mxu0 0.0
        %783 = vmatprep.subr.mxu0 0.0
        %784 = vmatpush1.msra.mxu0 0.0
        %785 = vmatprep.subr.mxu0 0.0
        %786 = vmatpush1.msra.mxu0 0.0
        %787 = vmatprep.subr.mxu0 0.0
        %788 = vmatpush1.msra.mxu0 0.0
        %789 = vmatprep.subr.mxu0 0.0
        %790 = vmatpush1.msra.mxu0 0.0
        %791 = vmatprep.subr.mxu0 0.0
        %792 = vmatpush1.msra.mxu0 0.0
        %793 = vmatprep.subr.mxu0 0.0
        %794 = vmatpush1.msra.mxu0 0.0
        %795 = vmatprep.subr.mxu0 0.0
        %796 = vmatpush1.msra.mxu0 0.0
        %797 = vmatprep.subr.mxu0 0.0
        %798 = vmatpush1.msra.mxu0 0.0
        %799 = vmatprep.subr.mxu0 0.0
        %800 = vmatpush1.msra.mxu0 0.0
        %801 = vmatprep.subr.mxu0 0.0
        %802 = vmatpush1.msra.mxu0 0.0
        %803 = vmatprep.subr.mxu0 0.0
        %804 = vmatpush1.msra.mxu0 0.0
        %805 = vmatprep.subr.mxu0 0.0
        %806 = vmatpush1.msra.mxu0 0.0
        %807 = vmatprep.subr.mxu0 0.0
        %808 = vmatpush1.msra.mxu0 0.0
        %809 = vmatprep.subr.mxu0 0.0
        %810 = vmatpush1.msra.mxu0 0.0
        %811 = vmatprep.subr.mxu0 0.0
        %812 = vmatpush1.msra.mxu0 0.0
        %813 = vmatprep.subr.mxu0 0.0
        %814 = vmatpush1.msra.mxu0 0.0
        %815 = vmatprep.subr.mxu0 0.0
        %816 = vmatpush1.msra.mxu0 0.0
        %817 = vmatprep.subr.mxu0 0.0
        %818 = vmatpush1.msra.mxu0 0.0
        %819 = vmatprep.subr.mxu0 0.0
        %820 = vmatpush1.msra.mxu0 0.0
        %821 = vmatprep.subr.mxu0 0.0
        %822 = vmatpush1.msra.mxu0 0.0
        %823 = vmatprep.subr.mxu0 0.0
        %824 = vmatpush1.msra.mxu0 0.0
        %825 = vmatprep.subr.mxu0 0.0
        %826 = vmatpush1.msra.mxu0 0.0
        %827 = vmatprep.subr.mxu0 0.0
        %828 = vmatpush1.msra.mxu0 0.0
        %829 = vmatprep.mubr.f32.mxu0 0.0
        %830 = vmatmul.mubr.f32.gmra.mrb[0].mxu0 %v763
        %v831 = vpop.f32.mrb[0].mxu0
        %v832 = vadd.f32 0.0, %v831
        %v833 = vpop.f32.mrb[0].mxu0
        %834 = vdwg.mxu0
        %v835 = vmul.f32 %v832, %v760
        %v836 = vmul.f32 %v761, %v761
        %v837 = vsub.f32 %v835, %v836
        %v838 = vadd.f32 %v837, 1e-05
        %v839 = vrsqrt.pop %v838
        %v840 = vld [vmem:[%s5] sm:$0xff]
        %v841 = vld [vmem:[%s5 + $0x8] sm:$0xff]
        %v842 = vld [vmem:[%s5 + $0x10] sm:$0xff]
        %v843 = vld [vmem:[%s5 + $0x18] sm:$0xff]
        %vm844 = vcmask 261120
        %v846 = vsel %vm844, %v761, 0
        %848 = vmatprep.subr.mxu0 0.0
        %849 = vmatpush1.msra.mxu0 %v840
        %850 = vmatprep.subr.mxu0 0.0
        %851 = vmatpush1.msra.mxu0 %v841
        %852 = vmatprep.subr.mxu0 0.0
        %853 = vmatpush1.msra.mxu0 %v842
        %854 = vmatprep.subr.mxu0 0.0
        %855 = vmatpush1.msra.mxu0 %v843
        %856 = vmatprep.subr.mxu0 0.0
        %857 = vmatpush1.msra.mxu0 0.0
        %858 = vmatprep.subr.mxu0 0.0
        %859 = vmatpush1.msra.mxu0 0.0
        %860 = vmatprep.subr.mxu0 0.0
        %861 = vmatpush1.msra.mxu0 0.0
        %862 = vmatprep.subr.mxu0 0.0
        %863 = vmatpush1.msra.mxu0 0.0
        %864 = vmatprep.subr.mxu0 0.0
        %865 = vmatpush1.msra.mxu0 0.0
        %866 = vmatprep.subr.mxu0 0.0
        %867 = vmatpush1.msra.mxu0 0.0
        %868 = vmatprep.subr.mxu0 0.0
        %869 = vmatpush1.msra.mxu0 0.0
        %870 = vmatprep.subr.mxu0 0.0
        %871 = vmatpush1.msra.mxu0 0.0
        %872 = vmatprep.subr.mxu0 0.0
        %873 = vmatpush1.msra.mxu0 0.0
        %874 = vmatprep.subr.mxu0 0.0
        %875 = vmatpush1.msra.mxu0 0.0
        %876 = vmatprep.subr.mxu0 0.0
        %877 = vmatpush1.msra.mxu0 0.0
        %878 = vmatprep.subr.mxu0 0.0
        %879 = vmatpush1.msra.mxu0 0.0
        %880 = vmatprep.subr.mxu0 0.0
        %881 = vmatpush1.msra.mxu0 0.0
        %882 = vmatprep.subr.mxu0 0.0
        %883 = vmatpush1.msra.mxu0 0.0
        %884 = vmatprep.subr.mxu0 0.0
        %885 = vmatpush1.msra.mxu0 0.0
        %886 = vmatprep.subr.mxu0 0.0
        %887 = vmatpush1.msra.mxu0 0.0
        %888 = vmatprep.subr.mxu0 0.0
        %889 = vmatpush1.msra.mxu0 0.0
        %890 = vmatprep.subr.mxu0 0.0
        %891 = vmatpush1.msra.mxu0 0.0
        %892 = vmatprep.subr.mxu0 0.0
        %893 = vmatpush1.msra.mxu0 0.0
        %894 = vmatprep.subr.mxu0 0.0
        %895 = vmatpush1.msra.mxu0 0.0
        %896 = vmatprep.subr.mxu0 0.0
        %897 = vmatpush1.msra.mxu0 0.0
        %898 = vmatprep.subr.mxu0 0.0
        %899 = vmatpush1.msra.mxu0 0.0
        %900 = vmatprep.subr.mxu0 0.0
        %901 = vmatpush1.msra.mxu0 0.0
        %902 = vmatprep.subr.mxu0 0.0
        %903 = vmatpush1.msra.mxu0 0.0
        %904 = vmatprep.subr.mxu0 0.0
        %905 = vmatpush1.msra.mxu0 0.0
        %906 = vmatprep.subr.mxu0 0.0
        %907 = vmatpush1.msra.mxu0 0.0
        %908 = vmatprep.subr.mxu0 0.0
        %909 = vmatpush1.msra.mxu0 0.0
        %910 = vmatprep.subr.mxu0 0.0
        %911 = vmatpush1.msra.mxu0 0.0
        %912 = vmatprep.mubr.f32.mxu0 0.0
        %913 = vmatmul.mubr.f32.gmra.mrb[0].mxu0 %v846
        %v914 = vpop.f32.mrb[0].mxu0
        %v915 = vadd.f32 0.0, %v914
        %v916 = vpop.f32.mrb[0].mxu0
        %917 = vdwg.mxu0
        %v919 = vsel %vm844, %v839, 0
        %921 = vmatprep.subr.mxu0 0.0
        %922 = vmatpush1.msra.mxu0 %v840
        %923 = vmatprep.subr.mxu0 0.0
        %924 = vmatpush1.msra.mxu0 %v841
        %925 = vmatprep.subr.mxu0 0.0
        %926 = vmatpush1.msra.mxu0 %v842
        %927 = vmatprep.subr.mxu0 0.0
        %928 = vmatpush1.msra.mxu0 %v843
        %929 = vmatprep.subr.mxu0 0.0
        %930 = vmatpush1.msra.mxu0 0.0
        %931 = vmatprep.subr.mxu0 0.0
        %932 = vmatpush1.msra.mxu0 0.0
        %933 = vmatprep.subr.mxu0 0.0
        %934 = vmatpush1.msra.mxu0 0.0
        %935 = vmatprep.subr.mxu0 0.0
        %936 = vmatpush1.msra.mxu0 0.0
        %937 = vmatprep.subr.mxu0 0.0
        %938 = vmatpush1.msra.mxu0 0.0
        %939 = vmatprep.subr.mxu0 0.0
        %940 = vmatpush1.msra.mxu0 0.0
        %941 = vmatprep.subr.mxu0 0.0
        %942 = vmatpush1.msra.mxu0 0.0
        %943 = vmatprep.subr.mxu0 0.0
        %944 = vmatpush1.msra.mxu0 0.0
        %945 = vmatprep.subr.mxu0 0.0
        %946 = vmatpush1.msra.mxu0 0.0
        %947 = vmatprep.subr.mxu0 0.0
        %948 = vmatpush1.msra.mxu0 0.0
        %949 = vmatprep.subr.mxu0 0.0
        %950 = vmatpush1.msra.mxu0 0.0
        %951 = vmatprep.subr.mxu0 0.0
        %952 = vmatpush1.msra.mxu0 0.0
        %953 = vmatprep.subr.mxu0 0.0
        %954 = vmatpush1.msra.mxu0 0.0
        %955 = vmatprep.subr.mxu0 0.0
        %956 = vmatpush1.msra.mxu0 0.0
        %957 = vmatprep.subr.mxu0 0.0
        %958 = vmatpush1.msra.mxu0 0.0
        %959 = vmatprep.subr.mxu0 0.0
        %960 = vmatpush1.msra.mxu0 0.0
        %961 = vmatprep.subr.mxu0 0.0
        %962 = vmatpush1.msra.mxu0 0.0
        %963 = vmatprep.subr.mxu0 0.0
        %964 = vmatpush1.msra.mxu0 0.0
        %965 = vmatprep.subr.mxu0 0.0
        %966 = vmatpush1.msra.mxu0 0.0
        %967 = vmatprep.subr.mxu0 0.0
        %968 = vmatpush1.msra.mxu0 0.0
        %969 = vmatprep.subr.mxu0 0.0
        %970 = vmatpush1.msra.mxu0 0.0
        %971 = vmatprep.subr.mxu0 0.0
        %972 = vmatpush1.msra.mxu0 0.0
        %973 = vmatprep.subr.mxu0 0.0
        %974 = vmatpush1.msra.mxu0 0.0
        %975 = vmatprep.subr.mxu0 0.0
        %976 = vmatpush1.msra.mxu0 0.0
        %977 = vmatprep.subr.mxu0 0.0
        %978 = vmatpush1.msra.mxu0 0.0
        %979 = vmatprep.subr.mxu0 0.0
        %980 = vmatpush1.msra.mxu0 0.0
        %981 = vmatprep.subr.mxu0 0.0
        %982 = vmatpush1.msra.mxu0 0.0
        %983 = vmatprep.subr.mxu0 0.0
        %984 = vmatpush1.msra.mxu0 0.0
        %985 = vmatprep.mubr.f32.mxu0 0.0
        %986 = vmatmul.mubr.f32.gmra.mrb[0].mxu0 %v919
        %v987 = vpop.f32.mrb[0].mxu0
        %v988 = vadd.f32 0.0, %v987
        %v989 = vpop.f32.mrb[0].mxu0
        %990 = vdwg.mxu0
        %v991 = vld [vmem:[%s2] sm:$0x1]
        %v992 = vmul.f32 %v988, %v991
        %v993 = vld [vmem:[%s3] sm:$0x1]
        %v994 = vmul.f32 %v915, %v992
        %v995 = vsub.f32 %v993, %v994
        %v996 = vlaneseq
        %v997 = vshrl.u32 %v996, 7
        %v998 = vsub.s32 0, %v997
        %v999 = vrot.slane %v992, %v998
        %v1000 = vmul.f32 %v620, %v999
        %v1001 = vmul.f32 %v621, %v999
        %v1002 = vmul.f32 %v622, %v999
        %v1003 = vmul.f32 %v623, %v999
        %v1004 = vmul.f32 %v624, %v999
        %v1005 = vmul.f32 %v625, %v999
        %v1006 = vmul.f32 %v626, %v999
        %v1007 = vmul.f32 %v627, %v999
        %v1009 = vlaneseq
        %v1010 = vshrl.u32 %v1009, 7
        %v1011 = vsub.s32 0, %v1010
        %v1012 = vrot.slane %v995, %v1011
        %v1014 = vadd.f32 %v1000, %v1012
        %v1015 = vadd.f32 %v1001, %v1012
        %v1016 = vadd.f32 %v1002, %v1012
        %v1017 = vadd.f32 %v1003, %v1012
        %v1018 = vadd.f32 %v1004, %v1012
        %v1019 = vadd.f32 %v1005, %v1012
        %v1020 = vadd.f32 %v1006, %v1012
        %v1021 = vadd.f32 %v1007, %v1012
        %v1022 = vxor.u32 %v1014, 2147483648
        %v1023 = vxor.u32 %v1015, 2147483648
        %v1024 = vxor.u32 %v1016, 2147483648
        %v1025 = vxor.u32 %v1017, 2147483648
        %v1026 = vxor.u32 %v1018, 2147483648
        %v1027 = vxor.u32 %v1019, 2147483648
        %v1028 = vxor.u32 %v1020, 2147483648
        %v1029 = vxor.u32 %v1021, 2147483648
        %v1030 = vmul.f32 %v1022, 1.442695
        %v1031 = vpow.pop %v1030
        %v1032 = vmul.f32 %v1023, 1.442695
        %v1033 = vpow.pop %v1032
        %v1034 = vmul.f32 %v1024, 1.442695
        %v1035 = vpow.pop %v1034
        %v1036 = vmul.f32 %v1025, 1.442695
        %v1037 = vpow.pop %v1036
        %v1038 = vmul.f32 %v1026, 1.442695
        %v1039 = vpow.pop %v1038
        %v1040 = vmul.f32 %v1027, 1.442695
        %v1041 = vpow.pop %v1040
        %v1042 = vmul.f32 %v1028, 1.442695
        %v1043 = vpow.pop %v1042
        %v1044 = vmul.f32 %v1029, 1.442695
        %v1045 = vpow.pop %v1044
        %v1046 = vadd.f32 %v1031, 1.0
        %v1047 = vadd.f32 %v1033, 1.0
        %v1048 = vadd.f32 %v1035, 1.0
        %v1049 = vadd.f32 %v1037, 1.0
        %v1050 = vadd.f32 %v1039, 1.0
        %v1051 = vadd.f32 %v1041, 1.0
        %v1052 = vadd.f32 %v1043, 1.0
        %v1053 = vadd.f32 %v1045, 1.0
        %v1054 = vrcp.pop %v1046
        %v1055 = vmul.f32 1.0, %v1054
        %v1056 = vrcp.pop %v1047
        %v1057 = vmul.f32 1.0, %v1056
        %v1058 = vrcp.pop %v1048
        %v1059 = vmul.f32 1.0, %v1058
        %v1060 = vrcp.pop %v1049
        %v1061 = vmul.f32 1.0, %v1060
        %v1062 = vrcp.pop %v1050
        %v1063 = vmul.f32 1.0, %v1062
        %v1064 = vrcp.pop %v1051
        %v1065 = vmul.f32 1.0, %v1064
        %v1066 = vrcp.pop %v1052
        %v1067 = vmul.f32 1.0, %v1066
        %v1068 = vrcp.pop %v1053
        %v1069 = vmul.f32 1.0, %v1068
        %v1070 = vmul.f32 %v1014, %v1055
        %v1071 = vmul.f32 %v1015, %v1057
        %v1072 = vmul.f32 %v1016, %v1059
        %v1073 = vmul.f32 %v1017, %v1061
        %v1074 = vmul.f32 %v1018, %v1063
        %v1075 = vmul.f32 %v1019, %v1065
        %v1076 = vmul.f32 %v1020, %v1067
        %v1077 = vmul.f32 %v1021, %v1069
        %v1078 = vpack.c.bf16 %v1071, %v1070
        %v1079 = vpack.c.bf16 %v1073, %v1072
        %v1080 = vpack.c.bf16 %v1075, %v1074
        %v1081 = vpack.c.bf16 %v1077, %v1076
        %vm1086 = vcmask 1043456
        %v1087 = vrot.slane %v1078, 4
        %v1088 = vrot.slane %v1079, 4
        %v1089 = vsel %vm1086, %v1087, %v1088
        %v1090 = vrot.slane %v1080, 4
        %v1091 = vsel %vm1086, %v1088, %v1090
        %v1092 = vrot.slane %v1081, 4
        %v1093 = vsel %vm1086, %v1090, %v1092
        %vm1099 = vcmask 523268
        %1100 = vst.msk [vmem:[#allocation2] sm:$0xf0] %vm1099, %v1087
        %1101 = vst.msk [vmem:[#allocation2 + $0x10] sm:$0xff] %vm628, %v1089
        %1102 = vst.msk [vmem:[#allocation2 + $0x20] sm:$0xff] %vm628, %v1091
        %1103 = vst.msk [vmem:[#allocation2 + $0x30] sm:$0xff] %vm628, %v1093
        %vm1104 = vcmask 519168
        %1105 = vst.msk [vmem:[#allocation2 + $0x40] sm:$0xf] %vm1104, %v1092
        %v1106 = vld [vmem:[#allocation2] sm:$0xf8]
        %v1107 = vld [vmem:[#allocation2 + $0x10] sm:$0xff]
        %v1108 = vld [vmem:[#allocation2 + $0x20] sm:$0xff]
        %v1109 = vld [vmem:[#allocation2 + $0x30] sm:$0xff]
        %v1110 = vld [vmem:[#allocation2 + $0x40] sm:$0xf]
        %v1111 = vld [vmem:[#allocation2] sm:$0xf0]
        %v1112 = vld [vmem:[#allocation2 + $0x40] sm:$0x1f]
        %v1113 = vsel %vm588, 1, 0
        %v1114 = vsel %vm589, 1, 0
        %v1115 = vsel %vm590, 1, 0
        %v1116 = vsel %vm591, 1, 0
        %v1117 = vsel %vm592, 1, 0
        %v1118 = vsel %vm593, 1, 0
        %v1119 = vsel %vm594, 1, 0
        %v1120 = vsel %vm595, 1, 0
        %vm1121 = vcmp.eq.s32.totalorder %v1113, 1
        %vm1122 = vcmp.eq.s32.totalorder %v1114, 1
        %vm1123 = vcmp.eq.s32.totalorder %v1115, 1
        %vm1124 = vcmp.eq.s32.totalorder %v1116, 1
        %vm1125 = vcmp.eq.s32.totalorder %v1117, 1
        %vm1126 = vcmp.eq.s32.totalorder %v1118, 1
        %vm1127 = vcmp.eq.s32.totalorder %v1119, 1
        %vm1128 = vcmp.eq.s32.totalorder %v1120, 1
        %vm1129 = vmpackc.low %vm1121, %vm1121
        %vm1130 = vmpackc.low %vm1122, %vm1122
        %vm1131 = vmpackc.low %vm1123, %vm1123
        %vm1132 = vmpackc.low %vm1124, %vm1124
        %vm1133 = vmpackc.low %vm1125, %vm1125
        %vm1134 = vmpackc.low %vm1126, %vm1126
        %vm1135 = vmpackc.low %vm1127, %vm1127
        %vm1136 = vmpackc.low %vm1128, %vm1128
        %v1137 = vsel %vm1129, 65537, 0
        %v1138 = vsel %vm1130, 65537, 0
        %v1139 = vsel %vm1131, 65537, 0
        %v1140 = vsel %vm1132, 65537, 0
        %v1141 = vsel %vm1133, 65537, 0
        %v1142 = vsel %vm1134, 65537, 0
        %v1143 = vsel %vm1135, 65537, 0
        %v1144 = vsel %vm1136, 65537, 0
        %v1145 = vunpack.c.l.b16 %v1137
        %v1146 = vunpack.c.l.b16 %v1138
        %v1147 = vunpack.c.l.b16 %v1139
        %v1148 = vunpack.c.l.b16 %v1140
        %v1149 = vunpack.c.l.b16 %v1141
        %v1150 = vunpack.c.l.b16 %v1142
        %v1151 = vunpack.c.l.b16 %v1143
        %v1152 = vunpack.c.l.b16 %v1144
        %v1153 = vpack.c.b16 %v1146, %v1145
        %v1154 = vpack.c.b16 %v1148, %v1147
        %v1155 = vpack.c.b16 %v1150, %v1149
        %v1156 = vpack.c.b16 %v1152, %v1151
        %vm1157 = vsmask.f32 3328
        %v1159 = vshrl.u32 %v1153, 16
        %v1161 = vrot.slane %v1159, 4
        %v1162 = vshll.u32 %v1153, 16
        %v1164 = vrot.slane %v1162, 5
        %v1165 = vor.u32 %v1161, %v1164
        %v1167 = vshrl.u32 %v1154, 16
        %v1169 = vrot.slane %v1167, 4
        %v1170 = vshll.u32 %v1154, 16
        %v1172 = vrot.slane %v1170, 5
        %v1173 = vor.u32 %v1169, %v1172
        %v1174 = vsel %vm1157, %v1165, %v1173
        %v1176 = vshrl.u32 %v1155, 16
        %v1178 = vrot.slane %v1176, 4
        %v1179 = vshll.u32 %v1155, 16
        %v1181 = vrot.slane %v1179, 5
        %v1182 = vor.u32 %v1178, %v1181
        %v1183 = vsel %vm1157, %v1173, %v1182
        %v1185 = vshrl.u32 %v1156, 16
        %v1187 = vrot.slane %v1185, 4
        %v1188 = vshll.u32 %v1156, 16
        %v1190 = vrot.slane %v1188, 5
        %v1191 = vor.u32 %v1187, %v1190
        %v1192 = vsel %vm1157, %v1182, %v1191
        %vm1193 = vcmp.ne.s16.totalorder %v1165, 0
        %vm1194 = vcmp.ne.s16.totalorder %v1174, 0
        %vm1195 = vcmp.ne.s16.totalorder %v1183, 0
        %vm1196 = vcmp.ne.s16.totalorder %v1192, 0
        %vm1197 = vcmp.ne.s16.totalorder %v1191, 0
        %v1198 = vsel %vm1193, %v1106, 0
        %v1199 = vsel %vm1194, %v1107, 0
        %v1200 = vsel %vm1195, %v1108, 0
        %v1201 = vsel %vm1196, %v1109, 0
        %v1202 = vsel %vm1197, %v1110, 0
        %vm1203 = vsmask.f32 256
        %v1205 = vshrl.u32 %v1198, 16
        %v1207 = vrot.slane %v1205, 7
        %v1208 = vshll.u32 %v1198, 16
        %v1210 = vor.u32 %v1207, %v1208
        %v1212 = vshrl.u32 %v1199, 16
        %v1214 = vrot.slane %v1212, 7
        %v1215 = vshll.u32 %v1199, 16
        %v1217 = vor.u32 %v1214, %v1215
        %v1218 = vsel %vm1203, %v1207, %v1217
        %v1220 = vshrl.u32 %v1200, 16
        %v1222 = vrot.slane %v1220, 7
        %v1223 = vshll.u32 %v1200, 16
        %v1225 = vor.u32 %v1222, %v1223
        %v1226 = vsel %vm1203, %v1214, %v1225
        %v1228 = vshrl.u32 %v1201, 16
        %v1230 = vrot.slane %v1228, 7
        %v1231 = vshll.u32 %v1201, 16
        %v1233 = vor.u32 %v1230, %v1231
        %v1234 = vsel %vm1203, %v1222, %v1233
        %v1236 = vshrl.u32 %v1202, 16
        %v1238 = vrot.slane %v1236, 7
        %v1239 = vshll.u32 %v1202, 16
        %v1241 = vor.u32 %v1238, %v1239
        %v1242 = vsel %vm1203, %v1230, %v1241
        %1243 = vrot.lane.b32.xlu0 %v1210, 64
        %v1244 = vpop.permute.xlu0 %1243
        %1245 = vrot.lane.b32.xlu0 %v1218, 64
        %v1246 = vpop.permute.xlu0 %1245
        %1247 = vrot.lane.b32.xlu0 %v1226, 64
        %v1248 = vpop.permute.xlu0 %1247
        %1249 = vrot.lane.b32.xlu0 %v1234, 64
        %v1250 = vpop.permute.xlu0 %1249
        %1251 = vrot.lane.b32.xlu0 %v1242, 64
        %v1252 = vpop.permute.xlu0 %1251
        %vm1258 = vcmask 1048068
        %1259 = vst.msk [vmem:[#allocation2] sm:$0xf0] %vm1258, %v1244
        %vm1260 = vcmask 1048064
        %1261 = vst.msk [vmem:[#allocation2 + $0x10] sm:$0xff] %vm1260, %v1246
        %1262 = vst.msk [vmem:[#allocation2 + $0x20] sm:$0xff] %vm1260, %v1248
        %1263 = vst.msk [vmem:[#allocation2 + $0x30] sm:$0xff] %vm1260, %v1250
        %vm1264 = vcmask 1043968
        %1265 = vst.msk [vmem:[#allocation2 + $0x40] sm:$0xf] %vm1264, %v1252
        %v1266 = vsel %vm596, 1, 0
        %v1267 = vsel %vm597, 1, 0
        %v1268 = vsel %vm598, 1, 0
        %v1269 = vsel %vm599, 1, 0
        %v1270 = vsel %vm600, 1, 0
        %v1271 = vsel %vm601, 1, 0
        %v1272 = vsel %vm602, 1, 0
        %v1273 = vsel %vm603, 1, 0
        %vm1274 = vcmp.eq.s32.totalorder %v1266, 1
        %vm1275 = vcmp.eq.s32.totalorder %v1267, 1
        %vm1276 = vcmp.eq.s32.totalorder %v1268, 1
        %vm1277 = vcmp.eq.s32.totalorder %v1269, 1
        %vm1278 = vcmp.eq.s32.totalorder %v1270, 1
        %vm1279 = vcmp.eq.s32.totalorder %v1271, 1
        %vm1280 = vcmp.eq.s32.totalorder %v1272, 1
        %vm1281 = vcmp.eq.s32.totalorder %v1273, 1
        %vm1282 = vmpackc.low %vm1274, %vm1274
        %vm1283 = vmpackc.low %vm1275, %vm1275
        %vm1284 = vmpackc.low %vm1276, %vm1276
        %vm1285 = vmpackc.low %vm1277, %vm1277
        %vm1286 = vmpackc.low %vm1278, %vm1278
        %vm1287 = vmpackc.low %vm1279, %vm1279
        %vm1288 = vmpackc.low %vm1280, %vm1280
        %vm1289 = vmpackc.low %vm1281, %vm1281
        %v1290 = vsel %vm1282, 65537, 0
        %v1291 = vsel %vm1283, 65537, 0
        %v1292 = vsel %vm1284, 65537, 0
        %v1293 = vsel %vm1285, 65537, 0
        %v1294 = vsel %vm1286, 65537, 0
        %v1295 = vsel %vm1287, 65537, 0
        %v1296 = vsel %vm1288, 65537, 0
        %v1297 = vsel %vm1289, 65537, 0
        %v1298 = vunpack.c.l.b16 %v1290
        %v1299 = vunpack.c.l.b16 %v1291
        %v1300 = vunpack.c.l.b16 %v1292
        %v1301 = vunpack.c.l.b16 %v1293
        %v1302 = vunpack.c.l.b16 %v1294
        %v1303 = vunpack.c.l.b16 %v1295
        %v1304 = vunpack.c.l.b16 %v1296
        %v1305 = vunpack.c.l.b16 %v1297
        %v1306 = vpack.c.b16 %v1299, %v1298
        %v1307 = vpack.c.b16 %v1301, %v1300
        %v1308 = vpack.c.b16 %v1303, %v1302
        %v1309 = vpack.c.b16 %v1305, %v1304
        %vm1310 = vsmask.f32 4352
        %v1312 = vshrl.u32 %v1306, 16
        %v1314 = vrot.slane %v1312, 3
        %v1315 = vshll.u32 %v1306, 16
        %v1317 = vrot.slane %v1315, 4
        %v1318 = vor.u32 %v1314, %v1317
        %v1320 = vshrl.u32 %v1307, 16
        %v1322 = vrot.slane %v1320, 3
        %v1323 = vshll.u32 %v1307, 16
        %v1325 = vrot.slane %v1323, 4
        %v1326 = vor.u32 %v1322, %v1325
        %v1327 = vsel %vm1310, %v1318, %v1326
        %v1329 = vshrl.u32 %v1308, 16
        %v1331 = vrot.slane %v1329, 3
        %v1332 = vshll.u32 %v1308, 16
        %v1334 = vrot.slane %v1332, 4
        %v1335 = vor.u32 %v1331, %v1334
        %v1336 = vsel %vm1310, %v1326, %v1335
        %v1338 = vshrl.u32 %v1309, 16
        %v1340 = vrot.slane %v1338, 3
        %v1341 = vshll.u32 %v1309, 16
        %v1343 = vrot.slane %v1341, 4
        %v1344 = vor.u32 %v1340, %v1343
        %v1345 = vsel %vm1310, %v1335, %v1344
        %vm1346 = vcmp.ne.s16.totalorder %v1318, 0
        %vm1347 = vcmp.ne.s16.totalorder %v1327, 0
        %vm1348 = vcmp.ne.s16.totalorder %v1336, 0
        %vm1349 = vcmp.ne.s16.totalorder %v1345, 0
        %vm1350 = vcmp.ne.s16.totalorder %v1344, 0
        %v1351 = vsel %vm1346, %v1111, 0
        %v1352 = vsel %vm1347, %v1107, 0
        %v1353 = vsel %vm1348, %v1108, 0
        %v1354 = vsel %vm1349, %v1109, 0
        %v1355 = vsel %vm1350, %v1112, 0
        %vm1356 = vsmask.f32 7424
        %v1358 = vshrl.u32 %v1351, 16
        %v1360 = vshll.u32 %v1351, 16
        %v1362 = vrot.slane %v1360, 1
        %v1363 = vor.u32 %v1358, %v1362
        %v1365 = vshll.u32 %v1352, 16
        %v1367 = vrot.slane %v1365, 1
        %v1368 = vsel %vm1356, %v1363, %v1367
        %v1369 = vshrl.u32 %v1352, 16
        %v1371 = vor.u32 %v1369, %v1367
        %v1373 = vshll.u32 %v1353, 16
        %v1375 = vrot.slane %v1373, 1
        %v1376 = vsel %vm1356, %v1371, %v1375
        %v1377 = vshrl.u32 %v1353, 16
        %v1379 = vor.u32 %v1377, %v1375
        %v1381 = vshll.u32 %v1354, 16
        %v1383 = vrot.slane %v1381, 1
        %v1384 = vsel %vm1356, %v1379, %v1383
        %v1385 = vshrl.u32 %v1354, 16
        %v1387 = vor.u32 %v1385, %v1383
        %v1389 = vshll.u32 %v1355, 16
        %v1391 = vrot.slane %v1389, 1
        %v1392 = vsel %vm1356, %v1387, %v1391
        %v1393 = vshrl.u32 %v1355, 16
        %v1395 = vor.u32 %v1393, %v1391
        %1401 = vst.msk [vmem:[#allocation2 + $0x8] sm:$0xf0] %vm1099, %v1368
        %1402 = vst.msk [vmem:[#allocation2 + $0x18] sm:$0xff] %vm628, %v1376
        %1403 = vst.msk [vmem:[#allocation2 + $0x28] sm:$0xff] %vm628, %v1384
        %1404 = vst.msk [vmem:[#allocation2 + $0x38] sm:$0xff] %vm628, %v1392
        %1405 = vst.msk [vmem:[#allocation2 + $0x48] sm:$0xf] %vm1104, %v1395
        %v1406 = vld [vmem:[#allocation2] sm:$0xf0]
        %v1407 = vld [vmem:[#allocation2 + $0x8] sm:$0xf0]
        %v1408 = vld [vmem:[#allocation2 + $0x10] sm:$0xff]
        %v1409 = vld [vmem:[#allocation2 + $0x18] sm:$0xff]
        %v1410 = vld [vmem:[#allocation2 + $0x20] sm:$0xff]
        %v1411 = vld [vmem:[#allocation2 + $0x28] sm:$0xff]
        %v1412 = vld [vmem:[#allocation2 + $0x30] sm:$0xff]
        %v1413 = vld [vmem:[#allocation2 + $0x38] sm:$0xff]
        %v1414 = vld [vmem:[#allocation2 + $0x40] sm:$0xf]
        %v1415 = vld [vmem:[#allocation2 + $0x48] sm:$0xf]
        %s1416 = scalar_lea.vmem %s6, 96
        %v1417 = vld [vmem:[%s1416] sm:$0xf]
        %v1418 = vld [vmem:[%s1416 + $0x4] sm:$0xf]
        %v1419 = vld [vmem:[%s1416 + $0x8] sm:$0xf]
        %v1420 = vld [vmem:[%s1416 + $0xc] sm:$0xf]
        %v1421 = vld [vmem:[%s1416 + $0x10] sm:$0xf]
        %v1422 = vld [vmem:[%s1416 + $0x14] sm:$0xf]
        %v1423 = vld [vmem:[%s1416 + $0x18] sm:$0xf]
        %v1424 = vld [vmem:[%s1416 + $0x1c] sm:$0xf]
        %v1425 = vld [vmem:[%s1416 + $0x20] sm:$0xf]
        %v1426 = vld [vmem:[%s1416 + $0x24] sm:$0xf]
        %v1427 = vld [vmem:[%s1416 + $0x28] sm:$0xf]
        %v1428 = vld [vmem:[%s1416 + $0x2c] sm:$0xf]
        %v1429 = vld [vmem:[%s1416 + $0x30] sm:$0xf]
        %v1430 = vld [vmem:[%s1416 + $0x34] sm:$0xf]
        %v1431 = vld [vmem:[%s1416 + $0x38] sm:$0xf]
        %v1432 = vld [vmem:[%s1416 + $0x3c] sm:$0xf]
        %v1433 = vld [vmem:[%s1416 + $0x40] sm:$0xf]
        %v1434 = vld [vmem:[%s1416 + $0x44] sm:$0xf]
        %v1435 = vld [vmem:[%s1416 + $0x48] sm:$0xf]
        %v1436 = vld [vmem:[%s1416 + $0x4c] sm:$0xf]
        %v1437 = vld [vmem:[%s1416 + $0x50] sm:$0xf]
        %v1438 = vld [vmem:[%s1416 + $0x54] sm:$0xf]
        %v1439 = vld [vmem:[%s1416 + $0x58] sm:$0xf]
        %v1440 = vld [vmem:[%s1416 + $0x5c] sm:$0xf]
        %v1441 = vld [vmem:[#allocation2] sm:$0xff]
        %v1442 = vld [vmem:[#allocation2 + $0x8] sm:$0xff]
        %v1443 = vld [vmem:[%s6] sm:$0xf]
        %v1444 = vld [vmem:[%s6 + $0x4] sm:$0xf]
        %v1445 = vld [vmem:[%s6 + $0x8] sm:$0xf]
        %v1446 = vld [vmem:[%s6 + $0xc] sm:$0xf]
        %v1447 = vld [vmem:[%s6 + $0x10] sm:$0xf]
        %v1448 = vld [vmem:[%s6 + $0x14] sm:$0xf]
        %v1449 = vld [vmem:[%s6 + $0x18] sm:$0xf]
        %v1450 = vld [vmem:[%s6 + $0x1c] sm:$0xf]
        %v1451 = vld [vmem:[%s6 + $0x20] sm:$0xf]
        %v1452 = vld [vmem:[%s6 + $0x24] sm:$0xf]
        %v1453 = vld [vmem:[%s6 + $0x28] sm:$0xf]
        %v1454 = vld [vmem:[%s6 + $0x2c] sm:$0xf]
        %v1455 = vld [vmem:[%s6 + $0x30] sm:$0xf]
        %v1456 = vld [vmem:[%s6 + $0x34] sm:$0xf]
        %v1457 = vld [vmem:[%s6 + $0x38] sm:$0xf]
        %v1458 = vld [vmem:[%s6 + $0x3c] sm:$0xf]
        %v1459 = vld [vmem:[%s6 + $0x40] sm:$0xf]
        %v1460 = vld [vmem:[%s6 + $0x44] sm:$0xf]
        %v1461 = vld [vmem:[%s6 + $0x48] sm:$0xf]
        %v1462 = vld [vmem:[%s6 + $0x4c] sm:$0xf]
        %v1463 = vld [vmem:[%s6 + $0x50] sm:$0xf]
        %v1464 = vld [vmem:[%s6 + $0x54] sm:$0xf]
        %v1465 = vld [vmem:[%s6 + $0x58] sm:$0xf]
        %v1466 = vld [vmem:[%s6 + $0x5c] sm:$0xf]
        %v1491 = vunpack.c.l.b16 %v1443
        %v1492 = vunpack.c.l.b16 %v1444
        %v1493 = vunpack.c.l.b16 %v1445
        %v1494 = vunpack.c.l.b16 %v1446
        %v1495 = vunpack.c.l.b16 %v1447
        %v1496 = vunpack.c.l.b16 %v1448
        %v1497 = vunpack.c.l.b16 %v1449
        %v1498 = vunpack.c.l.b16 %v1450
        %v1499 = vunpack.c.l.b16 %v1451
        %v1500 = vunpack.c.l.b16 %v1452
        %v1501 = vunpack.c.l.b16 %v1453
        %v1502 = vunpack.c.l.b16 %v1454
        %v1503 = vunpack.c.l.b16 %v1455
        %v1504 = vunpack.c.l.b16 %v1456
        %v1505 = vunpack.c.l.b16 %v1457
        %v1506 = vunpack.c.l.b16 %v1458
        %v1507 = vunpack.c.l.b16 %v1459
        %v1508 = vunpack.c.l.b16 %v1460
        %v1509 = vunpack.c.l.b16 %v1461
        %v1510 = vunpack.c.l.b16 %v1462
        %v1511 = vunpack.c.l.b16 %v1463
        %v1512 = vunpack.c.l.b16 %v1464
        %v1513 = vunpack.c.l.b16 %v1465
        %v1514 = vunpack.c.l.b16 %v1466
        %v1515 = vpack.c.b16 %v1492, %v1491
        %v1516 = vpack.c.b16 %v1494, %v1493
        %v1517 = vpack.c.b16 %v1496, %v1495
        %v1518 = vpack.c.b16 %v1498, %v1497
        %v1519 = vpack.c.b16 %v1500, %v1499
        %v1520 = vpack.c.b16 %v1502, %v1501
        %v1521 = vpack.c.b16 %v1504, %v1503
        %v1522 = vpack.c.b16 %v1506, %v1505
        %v1523 = vpack.c.b16 %v1508, %v1507
        %v1524 = vpack.c.b16 %v1510, %v1509
        %v1525 = vpack.c.b16 %v1512, %v1511
        %v1526 = vpack.c.b16 %v1514, %v1513
        %v1540 = vsel %vm628, %v1442, 0
        %v1543 = vsel %vm628, %v1409, 0
        %v1546 = vsel %vm628, %v1411, 0
        %v1549 = vsel %vm628, %v1413, 0
        %1551 = vmatprep.subr.bf16.mxu0 0
        %1552 = vmatpush1.bf16.msra.mxu0 %v1515
        %1553 = vmatprep.subr.bf16.mxu0 0
        %1554 = vmatpush1.bf16.msra.mxu0 %v1516
        %1555 = vmatprep.subr.bf16.mxu0 0
        %1556 = vmatpush1.bf16.msra.mxu0 %v1517
        %1557 = vmatprep.subr.bf16.mxu0 0
        %1558 = vmatpush1.bf16.msra.mxu0 %v1518
        %1559 = vmatprep.subr.bf16.mxu0 0
        %1560 = vmatpush1.bf16.msra.mxu0 %v1519
        %1561 = vmatprep.subr.bf16.mxu0 0
        %1562 = vmatpush1.bf16.msra.mxu0 %v1520
        %1563 = vmatprep.subr.bf16.mxu0 0
        %1564 = vmatpush1.bf16.msra.mxu0 %v1521
        %1565 = vmatprep.subr.bf16.mxu0 0
        %1566 = vmatpush1.bf16.msra.mxu0 %v1522
        %1567 = vmatprep.subr.bf16.mxu0 0
        %1568 = vmatpush1.bf16.msra.mxu0 %v1523
        %1569 = vmatprep.subr.bf16.mxu0 0
        %1570 = vmatpush1.bf16.msra.mxu0 %v1524
        %1571 = vmatprep.subr.bf16.mxu0 0
        %1572 = vmatpush1.bf16.msra.mxu0 %v1525
        %1573 = vmatprep.subr.bf16.mxu0 0
        %1574 = vmatpush1.bf16.msra.mxu0 %v1526
        %1575 = vmatprep.subr.bf16.mxu0 0
        %1576 = vmatpush1.bf16.msra.mxu0 0
        %1577 = vmatprep.subr.bf16.mxu0 0
        %1578 = vmatpush1.bf16.msra.mxu0 0
        %1579 = vmatprep.subr.bf16.mxu0 0
        %1580 = vmatpush1.bf16.msra.mxu0 0
        %1581 = vmatprep.subr.bf16.mxu0 0
        %1582 = vmatpush1.bf16.msra.mxu0 0
        %1583 = vmatprep.mubr.bf16.mxu0 %v1540
        %1584 = vmatmul.mubr.bf16.gmra.mrb[0].mxu0 %v1441
        %v1585 = vpop.f32.mrb[0].mxu0
        %v1586 = vadd.f32 0.0, %v1585
        %v1587 = vpop.f32.mrb[0].mxu0
        %v1588 = vpop.f32.mrb[0].mxu0
        %v1589 = vadd.f32 0.0, %v1588
        %v1590 = vpop.f32.mrb[0].mxu0
        %1591 = vmatprep.mubr.bf16.mxu0 %v1543
        %1592 = vmatmul.mubr.bf16.gmra.mrb[0].mxu0 %v1408
        %v1593 = vpop.f32.mrb[0].mxu0
        %v1594 = vadd.f32 0.0, %v1593
        %v1595 = vpop.f32.mrb[0].mxu0
        %v1596 = vpop.f32.mrb[0].mxu0
        %v1597 = vadd.f32 0.0, %v1596
        %v1598 = vpop.f32.mrb[0].mxu0
        %1599 = vmatprep.mubr.bf16.mxu0 %v1546
        %1600 = vmatmul.mubr.bf16.gmra.mrb[0].mxu0 %v1410
        %v1601 = vpop.f32.mrb[0].mxu0
        %v1602 = vadd.f32 0.0, %v1601
        %v1603 = vpop.f32.mrb[0].mxu0
        %v1604 = vpop.f32.mrb[0].mxu0
        %v1605 = vadd.f32 0.0, %v1604
        %v1606 = vpop.f32.mrb[0].mxu0
        %1607 = vmatprep.mubr.bf16.mxu0 %v1549
        %1608 = vmatmul.mubr.bf16.gmra.mrb[0].mxu0 %v1412
        %v1609 = vpop.f32.mrb[0].mxu0
        %v1610 = vadd.f32 0.0, %v1609
        %v1611 = vpop.f32.mrb[0].mxu0
        %v1612 = vpop.f32.mrb[0].mxu0
        %v1613 = vadd.f32 0.0, %v1612
        %v1614 = vpop.f32.mrb[0].mxu0
        %1615 = vdwg.mxu0
        %v1616 = vld [vmem:[#allocation2 + $0x40] sm:$0xff]
        %v1617 = vld [vmem:[#allocation2 + $0x48] sm:$0xff]
        %s1618 = scalar_lea.vmem %s6, 192
        %v1619 = vld [vmem:[%s1618] sm:$0xf]
        %v1620 = vld [vmem:[%s1618 + $0x4] sm:$0xf]
        %v1621 = vld [vmem:[%s1618 + $0x8] sm:$0xf]
        %v1622 = vld [vmem:[%s1618 + $0xc] sm:$0xf]
        %v1623 = vld [vmem:[%s1618 + $0x10] sm:$0xf]
        %v1624 = vld [vmem:[%s1618 + $0x14] sm:$0xf]
        %v1625 = vld [vmem:[%s1618 + $0x18] sm:$0xf]
        %v1626 = vld [vmem:[%s1618 + $0x1c] sm:$0xf]
        %v1627 = vld [vmem:[%s1618 + $0x20] sm:$0xf]
        %v1628 = vld [vmem:[%s1618 + $0x24] sm:$0xf]
        %v1629 = vld [vmem:[%s1618 + $0x28] sm:$0xf]
        %v1630 = vld [vmem:[%s1618 + $0x2c] sm:$0xf]
        %v1631 = vld [vmem:[%s1618 + $0x30] sm:$0xf]
        %v1632 = vld [vmem:[%s1618 + $0x34] sm:$0xf]
        %v1633 = vld [vmem:[%s1618 + $0x38] sm:$0xf]
        %v1634 = vld [vmem:[%s1618 + $0x3c] sm:$0xf]
        %v1635 = vld [vmem:[%s1618 + $0x40] sm:$0xf]
        %v1636 = vld [vmem:[%s1618 + $0x44] sm:$0xf]
        %v1637 = vld [vmem:[%s1618 + $0x48] sm:$0xf]
        %v1638 = vld [vmem:[%s1618 + $0x4c] sm:$0xf]
        %v1639 = vld [vmem:[%s1618 + $0x50] sm:$0xf]
        %v1640 = vld [vmem:[%s1618 + $0x54] sm:$0xf]
        %v1641 = vld [vmem:[%s1618 + $0x58] sm:$0xf]
        %v1642 = vld [vmem:[%s1618 + $0x5c] sm:$0xf]
        %v1667 = vunpack.c.l.b16 %v1619
        %v1668 = vunpack.c.l.b16 %v1620
        %v1669 = vunpack.c.l.b16 %v1621
        %v1670 = vunpack.c.l.b16 %v1622
        %v1671 = vunpack.c.l.b16 %v1623
        %v1672 = vunpack.c.l.b16 %v1624
        %v1673 = vunpack.c.l.b16 %v1625
        %v1674 = vunpack.c.l.b16 %v1626
        %v1675 = vunpack.c.l.b16 %v1627
        %v1676 = vunpack.c.l.b16 %v1628
        %v1677 = vunpack.c.l.b16 %v1629
        %v1678 = vunpack.c.l.b16 %v1630
        %v1679 = vunpack.c.l.b16 %v1631
        %v1680 = vunpack.c.l.b16 %v1632
        %v1681 = vunpack.c.l.b16 %v1633
        %v1682 = vunpack.c.l.b16 %v1634
        %v1683 = vunpack.c.l.b16 %v1635
        %v1684 = vunpack.c.l.b16 %v1636
        %v1685 = vunpack.c.l.b16 %v1637
        %v1686 = vunpack.c.l.b16 %v1638
        %v1687 = vunpack.c.l.b16 %v1639
        %v1688 = vunpack.c.l.b16 %v1640
        %v1689 = vunpack.c.l.b16 %v1641
        %v1690 = vunpack.c.l.b16 %v1642
        %v1691 = vpack.c.b16 %v1668, %v1667
        %v1692 = vpack.c.b16 %v1670, %v1669
        %v1693 = vpack.c.b16 %v1672, %v1671
        %v1694 = vpack.c.b16 %v1674, %v1673
        %v1695 = vpack.c.b16 %v1676, %v1675
        %v1696 = vpack.c.b16 %v1678, %v1677
        %v1697 = vpack.c.b16 %v1680, %v1679
        %v1698 = vpack.c.b16 %v1682, %v1681
        %v1699 = vpack.c.b16 %v1684, %v1683
        %v1700 = vpack.c.b16 %v1686, %v1685
        %v1701 = vpack.c.b16 %v1688, %v1687
        %v1702 = vpack.c.b16 %v1690, %v1689
        %v1716 = vsel %vm628, %v1617, 0
        %1718 = vmatprep.subr.bf16.mxu0 0
        %1719 = vmatpush1.bf16.msra.mxu0 %v1691
        %1720 = vmatprep.subr.bf16.mxu0 0
        %1721 = vmatpush1.bf16.msra.mxu0 %v1692
        %1722 = vmatprep.subr.bf16.mxu0 0
        %1723 = vmatpush1.bf16.msra.mxu0 %v1693
        %1724 = vmatprep.subr.bf16.mxu0 0
        %1725 = vmatpush1.bf16.msra.mxu0 %v1694
        %1726 = vmatprep.subr.bf16.mxu0 0
        %1727 = vmatpush1.bf16.msra.mxu0 %v1695
        %1728 = vmatprep.subr.bf16.mxu0 0
        %1729 = vmatpush1.bf16.msra.mxu0 %v1696
        %1730 = vmatprep.subr.bf16.mxu0 0
        %1731 = vmatpush1.bf16.msra.mxu0 %v1697
        %1732 = vmatprep.subr.bf16.mxu0 0
        %1733 = vmatpush1.bf16.msra.mxu0 %v1698
        %1734 = vmatprep.subr.bf16.mxu0 0
        %1735 = vmatpush1.bf16.msra.mxu0 %v1699
        %1736 = vmatprep.subr.bf16.mxu0 0
        %1737 = vmatpush1.bf16.msra.mxu0 %v1700
        %1738 = vmatprep.subr.bf16.mxu0 0
        %1739 = vmatpush1.bf16.msra.mxu0 %v1701
        %1740 = vmatprep.subr.bf16.mxu0 0
        %1741 = vmatpush1.bf16.msra.mxu0 %v1702
        %1742 = vmatprep.subr.bf16.mxu0 0
        %1743 = vmatpush1.bf16.msra.mxu0 0
        %1744 = vmatprep.subr.bf16.mxu0 0
        %1745 = vmatpush1.bf16.msra.mxu0 0
        %1746 = vmatprep.subr.bf16.mxu0 0
        %1747 = vmatpush1.bf16.msra.mxu0 0
        %1748 = vmatprep.subr.bf16.mxu0 0
        %1749 = vmatpush1.bf16.msra.mxu0 0
        %1750 = vmatprep.mubr.bf16.mxu0 %v1543
        %1751 = vmatmul.mubr.bf16.gmra.mrb[0].mxu0 %v1408
        %v1752 = vpop.f32.mrb[0].mxu0
        %v1753 = vadd.f32 0.0, %v1752
        %v1754 = vpop.f32.mrb[0].mxu0
        %v1755 = vpop.f32.mrb[0].mxu0
        %v1756 = vadd.f32 0.0, %v1755
        %v1757 = vpop.f32.mrb[0].mxu0
        %1758 = vmatprep.mubr.bf16.mxu0 %v1546
        %1759 = vmatmul.mubr.bf16.gmra.mrb[0].mxu0 %v1410
        %v1760 = vpop.f32.mrb[0].mxu0
        %v1761 = vadd.f32 0.0, %v1760
        %v1762 = vpop.f32.mrb[0].mxu0
        %v1763 = vpop.f32.mrb[0].mxu0
        %v1764 = vadd.f32 0.0, %v1763
        %v1765 = vpop.f32.mrb[0].mxu0
        %1766 = vmatprep.mubr.bf16.mxu0 %v1549
        %1767 = vmatmul.mubr.bf16.gmra.mrb[0].mxu0 %v1412
        %v1768 = vpop.f32.mrb[0].mxu0
        %v1769 = vadd.f32 0.0, %v1768
        %v1770 = vpop.f32.mrb[0].mxu0
        %v1771 = vpop.f32.mrb[0].mxu0
        %v1772 = vadd.f32 0.0, %v1771
        %v1773 = vpop.f32.mrb[0].mxu0
        %1774 = vmatprep.mubr.bf16.mxu0 %v1716
        %1775 = vmatmul.mubr.bf16.gmra.mrb[0].mxu0 %v1616
        %v1776 = vpop.f32.mrb[0].mxu0
        %v1777 = vadd.f32 0.0, %v1776
        %v1778 = vpop.f32.mrb[0].mxu0
        %v1779 = vpop.f32.mrb[0].mxu0
        %v1780 = vadd.f32 0.0, %v1779
        %v1781 = vpop.f32.mrb[0].mxu0
        %1782 = vdwg.mxu0
        %v1783 = vsel %vm604, 1, 0
        %v1784 = vsel %vm605, 1, 0
        %v1785 = vsel %vm606, 1, 0
        %v1786 = vsel %vm607, 1, 0
        %v1787 = vsel %vm608, 1, 0
        %v1788 = vsel %vm609, 1, 0
        %v1789 = vsel %vm610, 1, 0
        %v1790 = vsel %vm611, 1, 0
        %vm1791 = vcmp.eq.s32.totalorder %v1783, 1
        %vm1792 = vcmp.eq.s32.totalorder %v1784, 1
        %vm1793 = vcmp.eq.s32.totalorder %v1785, 1
        %vm1794 = vcmp.eq.s32.totalorder %v1786, 1
        %vm1795 = vcmp.eq.s32.totalorder %v1787, 1
        %vm1796 = vcmp.eq.s32.totalorder %v1788, 1
        %vm1797 = vcmp.eq.s32.totalorder %v1789, 1
        %vm1798 = vcmp.eq.s32.totalorder %v1790, 1
        %v1799 = vsel %vm1791, %v1586, 0.0
        %v1800 = vsel %vm1792, %v1589, 0.0
        %v1801 = vsel %vm1793, %v1594, 0.0
        %v1802 = vsel %vm1794, %v1597, 0.0
        %v1803 = vsel %vm1795, %v1602, 0.0
        %v1804 = vsel %vm1796, %v1605, 0.0
        %v1805 = vsel %vm1797, %v1610, 0.0
        %v1806 = vsel %vm1798, %v1613, 0.0
        %v1817 = vrot.slane %v1406, 4
        %v1818 = vrot.slane %v1408, 4
        %v1819 = vsel %vm1086, %v1817, %v1818
        %v1820 = vrot.slane %v1407, 4
        %v1821 = vrot.slane %v1409, 4
        %v1822 = vsel %vm1086, %v1820, %v1821
        %v1823 = vrot.slane %v1410, 4
        %v1824 = vsel %vm1086, %v1818, %v1823
        %v1825 = vrot.slane %v1411, 4
        %v1826 = vsel %vm1086, %v1821, %v1825
        %v1827 = vrot.slane %v1412, 4
        %v1828 = vsel %vm1086, %v1823, %v1827
        %v1829 = vrot.slane %v1413, 4
        %v1830 = vsel %vm1086, %v1825, %v1829
        %v1831 = vrot.slane %v1414, 4
        %v1832 = vsel %vm1086, %v1827, %v1831
        %v1833 = vrot.slane %v1415, 4
        %v1834 = vsel %vm1086, %v1829, %v1833
        %v1863 = vunpack.c.l.b16 %v1417
        %v1864 = vunpack.c.l.b16 %v1418
        %v1865 = vunpack.c.l.b16 %v1419
        %v1866 = vunpack.c.l.b16 %v1420
        %v1867 = vunpack.c.l.b16 %v1421
        %v1868 = vunpack.c.l.b16 %v1422
        %v1869 = vunpack.c.l.b16 %v1423
        %v1870 = vunpack.c.l.b16 %v1424
        %v1871 = vunpack.c.l.b16 %v1425
        %v1872 = vunpack.c.l.b16 %v1426
        %v1873 = vunpack.c.l.b16 %v1427
        %v1874 = vunpack.c.l.b16 %v1428
        %v1875 = vunpack.c.l.b16 %v1429
        %v1876 = vunpack.c.l.b16 %v1430
        %v1877 = vunpack.c.l.b16 %v1431
        %v1878 = vunpack.c.l.b16 %v1432
        %v1879 = vunpack.c.l.b16 %v1433
        %v1880 = vunpack.c.l.b16 %v1434
        %v1881 = vunpack.c.l.b16 %v1435
        %v1882 = vunpack.c.l.b16 %v1436
        %v1883 = vunpack.c.l.b16 %v1437
        %v1884 = vunpack.c.l.b16 %v1438
        %v1885 = vunpack.c.l.b16 %v1439
        %v1886 = vunpack.c.l.b16 %v1440
        %v1887 = vpack.c.b16 %v1864, %v1863
        %v1888 = vpack.c.b16 %v1866, %v1865
        %v1889 = vpack.c.b16 %v1868, %v1867
        %v1890 = vpack.c.b16 %v1870, %v1869
        %v1891 = vpack.c.b16 %v1872, %v1871
        %v1892 = vpack.c.b16 %v1874, %v1873
        %v1893 = vpack.c.b16 %v1876, %v1875
        %v1894 = vpack.c.b16 %v1878, %v1877
        %v1895 = vpack.c.b16 %v1880, %v1879
        %v1896 = vpack.c.b16 %v1882, %v1881
        %v1897 = vpack.c.b16 %v1884, %v1883
        %v1898 = vpack.c.b16 %v1886, %v1885
        %v1912 = vsel %vm628, %v1822, 0
        %v1915 = vsel %vm628, %v1826, 0
        %v1918 = vsel %vm628, %v1830, 0
        %v1921 = vsel %vm628, %v1834, 0
        %1923 = vmatprep.subr.bf16.mxu0 0
        %1924 = vmatpush1.bf16.msra.mxu0 %v1887
        %1925 = vmatprep.subr.bf16.mxu0 0
        %1926 = vmatpush1.bf16.msra.mxu0 %v1888
        %1927 = vmatprep.subr.bf16.mxu0 0
        %1928 = vmatpush1.bf16.msra.mxu0 %v1889
        %1929 = vmatprep.subr.bf16.mxu0 0
        %1930 = vmatpush1.bf16.msra.mxu0 %v1890
        %1931 = vmatprep.subr.bf16.mxu0 0
        %1932 = vmatpush1.bf16.msra.mxu0 %v1891
        %1933 = vmatprep.subr.bf16.mxu0 0
        %1934 = vmatpush1.bf16.msra.mxu0 %v1892
        %1935 = vmatprep.subr.bf16.mxu0 0
        %1936 = vmatpush1.bf16.msra.mxu0 %v1893
        %1937 = vmatprep.subr.bf16.mxu0 0
        %1938 = vmatpush1.bf16.msra.mxu0 %v1894
        %1939 = vmatprep.subr.bf16.mxu0 0
        %1940 = vmatpush1.bf16.msra.mxu0 %v1895
        %1941 = vmatprep.subr.bf16.mxu0 0
        %1942 = vmatpush1.bf16.msra.mxu0 %v1896
        %1943 = vmatprep.subr.bf16.mxu0 0
        %1944 = vmatpush1.bf16.msra.mxu0 %v1897
        %1945 = vmatprep.subr.bf16.mxu0 0
        %1946 = vmatpush1.bf16.msra.mxu0 %v1898
        %1947 = vmatprep.subr.bf16.mxu0 0
        %1948 = vmatpush1.bf16.msra.mxu0 0
        %1949 = vmatprep.subr.bf16.mxu0 0
        %1950 = vmatpush1.bf16.msra.mxu0 0
        %1951 = vmatprep.subr.bf16.mxu0 0
        %1952 = vmatpush1.bf16.msra.mxu0 0
        %1953 = vmatprep.subr.bf16.mxu0 0
        %1954 = vmatpush1.bf16.msra.mxu0 0
        %1955 = vmatprep.mubr.bf16.mxu0 %v1912
        %1956 = vmatmul.mubr.bf16.gmra.mrb[0].mxu0 %v1819
        %v1957 = vpop.f32.mrb[0].mxu0
        %v1958 = vadd.f32 %v1799, %v1957
        %v1959 = vpop.f32.mrb[0].mxu0
        %v1960 = vpop.f32.mrb[0].mxu0
        %v1961 = vadd.f32 %v1800, %v1960
        %v1962 = vpop.f32.mrb[0].mxu0
        %1963 = vmatprep.mubr.bf16.mxu0 %v1915
        %1964 = vmatmul.mubr.bf16.gmra.mrb[0].mxu0 %v1824
        %v1965 = vpop.f32.mrb[0].mxu0
        %v1966 = vadd.f32 %v1801, %v1965
        %v1967 = vpop.f32.mrb[0].mxu0
        %v1968 = vpop.f32.mrb[0].mxu0
        %v1969 = vadd.f32 %v1802, %v1968
        %v1970 = vpop.f32.mrb[0].mxu0
        %1971 = vmatprep.mubr.bf16.mxu0 %v1918
        %1972 = vmatmul.mubr.bf16.gmra.mrb[0].mxu0 %v1828
        %v1973 = vpop.f32.mrb[0].mxu0
        %v1974 = vadd.f32 %v1803, %v1973
        %v1975 = vpop.f32.mrb[0].mxu0
        %v1976 = vpop.f32.mrb[0].mxu0
        %v1977 = vadd.f32 %v1804, %v1976
        %v1978 = vpop.f32.mrb[0].mxu0
        %1979 = vmatprep.mubr.bf16.mxu0 %v1921
        %1980 = vmatmul.mubr.bf16.gmra.mrb[0].mxu0 %v1832
        %v1981 = vpop.f32.mrb[0].mxu0
        %v1982 = vadd.f32 %v1805, %v1981
        %v1983 = vpop.f32.mrb[0].mxu0
        %v1984 = vpop.f32.mrb[0].mxu0
        %v1985 = vadd.f32 %v1806, %v1984
        %v1986 = vpop.f32.mrb[0].mxu0
        %1987 = vdwg.mxu0
        %v1988 = vsel %vm612, 1, 0
        %v1989 = vsel %vm613, 1, 0
        %v1990 = vsel %vm614, 1, 0
        %v1991 = vsel %vm615, 1, 0
        %v1992 = vsel %vm616, 1, 0
        %v1993 = vsel %vm617, 1, 0
        %v1994 = vsel %vm618, 1, 0
        %v1995 = vsel %vm619, 1, 0
        %vm1996 = vcmp.eq.s32.totalorder %v1988, 1
        %vm1997 = vcmp.eq.s32.totalorder %v1989, 1
        %vm1998 = vcmp.eq.s32.totalorder %v1990, 1
        %vm1999 = vcmp.eq.s32.totalorder %v1991, 1
        %vm2000 = vcmp.eq.s32.totalorder %v1992, 1
        %vm2001 = vcmp.eq.s32.totalorder %v1993, 1
        %vm2002 = vcmp.eq.s32.totalorder %v1994, 1
        %vm2003 = vcmp.eq.s32.totalorder %v1995, 1
        %v2004 = vsel %vm1996, %v1753, 0.0
        %v2005 = vsel %vm1997, %v1756, 0.0
        %v2006 = vsel %vm1998, %v1761, 0.0
        %v2007 = vsel %vm1999, %v1764, 0.0
        %v2008 = vsel %vm2000, %v1769, 0.0
        %v2009 = vsel %vm2001, %v1772, 0.0
        %v2010 = vsel %vm2002, %v1777, 0.0
        %v2011 = vsel %vm2003, %v1780, 0.0
        %v2012 = vadd.f32 %v1958, %v2004
        %v2013 = vadd.f32 %v1961, %v2005
        %v2014 = vadd.f32 %v1966, %v2006
        %v2015 = vadd.f32 %v1969, %v2007
        %v2016 = vadd.f32 %v1974, %v2008
        %v2017 = vadd.f32 %v1977, %v2009
        %v2018 = vadd.f32 %v1982, %v2010
        %v2019 = vadd.f32 %v1985, %v2011
        %v2020 = vld [vmem:[%s479] sm:$0x1]
        %v2022 = vlaneseq
        %v2023 = vshrl.u32 %v2022, 7
        %v2024 = vsub.s32 0, %v2023
        %v2025 = vrot.slane %v2020, %v2024
        %v2027 = vadd.f32 %v2012, %v2025
        %v2028 = vadd.f32 %v2013, %v2025
        %v2029 = vadd.f32 %v2014, %v2025
        %v2030 = vadd.f32 %v2015, %v2025
        %v2031 = vadd.f32 %v2016, %v2025
        %v2032 = vadd.f32 %v2017, %v2025
        %v2033 = vadd.f32 %v2018, %v2025
        %v2034 = vadd.f32 %v2019, %v2025
        %v2035 = vsel %vm628, %v2027, 0.0
        %v2036 = vsel %vm628, %v2028, 0.0
        %v2037 = vadd.f32 %v2035, %v2036
        %v2038 = vsel %vm628, %v2029, 0.0
        %v2039 = vadd.f32 %v2037, %v2038
        %v2040 = vsel %vm628, %v2030, 0.0
        %v2041 = vadd.f32 %v2039, %v2040
        %v2042 = vsel %vm628, %v2031, 0.0
        %v2043 = vadd.f32 %v2041, %v2042
        %v2044 = vsel %vm628, %v2032, 0.0
        %v2045 = vadd.f32 %v2043, %v2044
        %v2046 = vsel %vm628, %v2033, 0.0
        %v2047 = vadd.f32 %v2045, %v2046
        %v2048 = vsel %vm628, %v2034, 0.0
        %v2049 = vadd.f32 %v2047, %v2048
        %v2050 = vrot.slane %v2049, 4
        %v2051 = vadd.f32 %v2049, %v2050
        %v2052 = vrot.slane %v2051, 2
        %v2053 = vadd.f32 %v2051, %v2052
        %v2054 = vrot.slane %v2053, 1
        %v2055 = vadd.f32 %v2053, %v2054
        %v2056 = vmul.f32 %v2027, %v2027
        %v2057 = vmul.f32 %v2028, %v2028
        %v2058 = vmul.f32 %v2029, %v2029
        %v2059 = vmul.f32 %v2030, %v2030
        %v2060 = vmul.f32 %v2031, %v2031
        %v2061 = vmul.f32 %v2032, %v2032
        %v2062 = vmul.f32 %v2033, %v2033
        %v2063 = vmul.f32 %v2034, %v2034
        %v2064 = vsel %vm628, %v2056, 0.0
        %v2065 = vsel %vm628, %v2057, 0.0
        %v2066 = vadd.f32 %v2064, %v2065
        %v2067 = vsel %vm628, %v2058, 0.0
        %v2068 = vadd.f32 %v2066, %v2067
        %v2069 = vsel %vm628, %v2059, 0.0
        %v2070 = vadd.f32 %v2068, %v2069
        %v2071 = vsel %vm628, %v2060, 0.0
        %v2072 = vadd.f32 %v2070, %v2071
        %v2073 = vsel %vm628, %v2061, 0.0
        %v2074 = vadd.f32 %v2072, %v2073
        %v2075 = vsel %vm628, %v2062, 0.0
        %v2076 = vadd.f32 %v2074, %v2075
        %v2077 = vsel %vm628, %v2063, 0.0
        %v2078 = vadd.f32 %v2076, %v2077
        %v2079 = vrot.slane %v2078, 4
        %v2080 = vadd.f32 %v2078, %v2079
        %v2081 = vrot.slane %v2080, 2
        %v2082 = vadd.f32 %v2080, %v2081
        %v2083 = vrot.slane %v2082, 1
        %v2084 = vadd.f32 %v2082, %v2083
        %v2085 = vld [vmem:[%s9] sm:$0xff]
        %v2086 = vld [vmem:[%s9 + $0x8] sm:$0xff]
        %v2087 = vld [vmem:[%s9 + $0x10] sm:$0xff]
        %v2088 = vld [vmem:[%s9 + $0x18] sm:$0xff]
        %v2089 = vld [vmem:[%s9 + $0x20] sm:$0xff]
        %v2090 = vld [vmem:[%s9 + $0x28] sm:$0xff]
        %v2091 = vld [vmem:[%s9 + $0x30] sm:$0xff]
        %v2092 = vld [vmem:[%s9 + $0x38] sm:$0xff]
        %v2094 = vsel %vm628, %v2055, 0
        %2096 = vmatprep.subr.mxu0 0.0
        %2097 = vmatpush1.msra.mxu0 %v2085
        %2098 = vmatprep.subr.mxu0 0.0
        %2099 = vmatpush1.msra.mxu0 %v2086
        %2100 = vmatprep.subr.mxu0 0.0
        %2101 = vmatpush1.msra.mxu0 %v2087
        %2102 = vmatprep.subr.mxu0 0.0
        %2103 = vmatpush1.msra.mxu0 %v2088
        %2104 = vmatprep.subr.mxu0 0.0
        %2105 = vmatpush1.msra.mxu0 %v2089
        %2106 = vmatprep.subr.mxu0 0.0
        %2107 = vmatpush1.msra.mxu0 %v2090
        %2108 = vmatprep.subr.mxu0 0.0
        %2109 = vmatpush1.msra.mxu0 %v2091
        %2110 = vmatprep.subr.mxu0 0.0
        %2111 = vmatpush1.msra.mxu0 %v2092
        %2112 = vmatprep.subr.mxu0 0.0
        %2113 = vmatpush1.msra.mxu0 0.0
        %2114 = vmatprep.subr.mxu0 0.0
        %2115 = vmatpush1.msra.mxu0 0.0
        %2116 = vmatprep.subr.mxu0 0.0
        %2117 = vmatpush1.msra.mxu0 0.0
        %2118 = vmatprep.subr.mxu0 0.0
        %2119 = vmatpush1.msra.mxu0 0.0
        %2120 = vmatprep.subr.mxu0 0.0
        %2121 = vmatpush1.msra.mxu0 0.0
        %2122 = vmatprep.subr.mxu0 0.0
        %2123 = vmatpush1.msra.mxu0 0.0
        %2124 = vmatprep.subr.mxu0 0.0
        %2125 = vmatpush1.msra.mxu0 0.0
        %2126 = vmatprep.subr.mxu0 0.0
        %2127 = vmatpush1.msra.mxu0 0.0
        %2128 = vmatprep.subr.mxu0 0.0
        %2129 = vmatpush1.msra.mxu0 0.0
        %2130 = vmatprep.subr.mxu0 0.0
        %2131 = vmatpush1.msra.mxu0 0.0
        %2132 = vmatprep.subr.mxu0 0.0
        %2133 = vmatpush1.msra.mxu0 0.0
        %2134 = vmatprep.subr.mxu0 0.0
        %2135 = vmatpush1.msra.mxu0 0.0
        %2136 = vmatprep.subr.mxu0 0.0
        %2137 = vmatpush1.msra.mxu0 0.0
        %2138 = vmatprep.subr.mxu0 0.0
        %2139 = vmatpush1.msra.mxu0 0.0
        %2140 = vmatprep.subr.mxu0 0.0
        %2141 = vmatpush1.msra.mxu0 0.0
        %2142 = vmatprep.subr.mxu0 0.0
        %2143 = vmatpush1.msra.mxu0 0.0
        %2144 = vmatprep.subr.mxu0 0.0
        %2145 = vmatpush1.msra.mxu0 0.0
        %2146 = vmatprep.subr.mxu0 0.0
        %2147 = vmatpush1.msra.mxu0 0.0
        %2148 = vmatprep.subr.mxu0 0.0
        %2149 = vmatpush1.msra.mxu0 0.0
        %2150 = vmatprep.subr.mxu0 0.0
        %2151 = vmatpush1.msra.mxu0 0.0
        %2152 = vmatprep.subr.mxu0 0.0
        %2153 = vmatpush1.msra.mxu0 0.0
        %2154 = vmatprep.subr.mxu0 0.0
        %2155 = vmatpush1.msra.mxu0 0.0
        %2156 = vmatprep.subr.mxu0 0.0
        %2157 = vmatpush1.msra.mxu0 0.0
        %2158 = vmatprep.subr.mxu0 0.0
        %2159 = vmatpush1.msra.mxu0 0.0
        %2160 = vmatprep.mubr.f32.mxu0 0.0
        %2161 = vmatmul.mubr.f32.gmra.mrb[0].mxu0 %v2094
        %v2162 = vpop.f32.mrb[0].mxu0
        %v2163 = vadd.f32 0.0, %v2162
        %v2164 = vpop.f32.mrb[0].mxu0
        %2165 = vdwg.mxu0
        %v2166 = vmul.f32 %v2163, %v760
        %v2168 = vsel %vm628, %v2084, 0
        %2170 = vmatprep.subr.mxu0 0.0
        %2171 = vmatpush1.msra.mxu0 %v2085
        %2172 = vmatprep.subr.mxu0 0.0
        %2173 = vmatpush1.msra.mxu0 %v2086
        %2174 = vmatprep.subr.mxu0 0.0
        %2175 = vmatpush1.msra.mxu0 %v2087
        %2176 = vmatprep.subr.mxu0 0.0
        %2177 = vmatpush1.msra.mxu0 %v2088
        %2178 = vmatprep.subr.mxu0 0.0
        %2179 = vmatpush1.msra.mxu0 %v2089
        %2180 = vmatprep.subr.mxu0 0.0
        %2181 = vmatpush1.msra.mxu0 %v2090
        %2182 = vmatprep.subr.mxu0 0.0
        %2183 = vmatpush1.msra.mxu0 %v2091
        %2184 = vmatprep.subr.mxu0 0.0
        %2185 = vmatpush1.msra.mxu0 %v2092
        %2186 = vmatprep.subr.mxu0 0.0
        %2187 = vmatpush1.msra.mxu0 0.0
        %2188 = vmatprep.subr.mxu0 0.0
        %2189 = vmatpush1.msra.mxu0 0.0
        %2190 = vmatprep.subr.mxu0 0.0
        %2191 = vmatpush1.msra.mxu0 0.0
        %2192 = vmatprep.subr.mxu0 0.0
        %2193 = vmatpush1.msra.mxu0 0.0
        %2194 = vmatprep.subr.mxu0 0.0
        %2195 = vmatpush1.msra.mxu0 0.0
        %2196 = vmatprep.subr.mxu0 0.0
        %2197 = vmatpush1.msra.mxu0 0.0
        %2198 = vmatprep.subr.mxu0 0.0
        %2199 = vmatpush1.msra.mxu0 0.0
        %2200 = vmatprep.subr.mxu0 0.0
        %2201 = vmatpush1.msra.mxu0 0.0
        %2202 = vmatprep.subr.mxu0 0.0
        %2203 = vmatpush1.msra.mxu0 0.0
        %2204 = vmatprep.subr.mxu0 0.0
        %2205 = vmatpush1.msra.mxu0 0.0
        %2206 = vmatprep.subr.mxu0 0.0
        %2207 = vmatpush1.msra.mxu0 0.0
        %2208 = vmatprep.subr.mxu0 0.0
        %2209 = vmatpush1.msra.mxu0 0.0
        %2210 = vmatprep.subr.mxu0 0.0
        %2211 = vmatpush1.msra.mxu0 0.0
        %2212 = vmatprep.subr.mxu0 0.0
        %2213 = vmatpush1.msra.mxu0 0.0
        %2214 = vmatprep.subr.mxu0 0.0
        %2215 = vmatpush1.msra.mxu0 0.0
        %2216 = vmatprep.subr.mxu0 0.0
        %2217 = vmatpush1.msra.mxu0 0.0
        %2218 = vmatprep.subr.mxu0 0.0
        %2219 = vmatpush1.msra.mxu0 0.0
        %2220 = vmatprep.subr.mxu0 0.0
        %2221 = vmatpush1.msra.mxu0 0.0
        %2222 = vmatprep.subr.mxu0 0.0
        %2223 = vmatpush1.msra.mxu0 0.0
        %2224 = vmatprep.subr.mxu0 0.0
        %2225 = vmatpush1.msra.mxu0 0.0
        %2226 = vmatprep.subr.mxu0 0.0
        %2227 = vmatpush1.msra.mxu0 0.0
        %2228 = vmatprep.subr.mxu0 0.0
        %2229 = vmatpush1.msra.mxu0 0.0
        %2230 = vmatprep.subr.mxu0 0.0
        %2231 = vmatpush1.msra.mxu0 0.0
        %2232 = vmatprep.subr.mxu0 0.0
        %2233 = vmatpush1.msra.mxu0 0.0
        %2234 = vmatprep.mubr.f32.mxu0 0.0
        %2235 = vmatmul.mubr.f32.gmra.mrb[0].mxu0 %v2168
        %v2236 = vpop.f32.mrb[0].mxu0
        %v2237 = vadd.f32 0.0, %v2236
        %v2238 = vpop.f32.mrb[0].mxu0
        %2239 = vdwg.mxu0
        %v2240 = vmul.f32 %v2237, %v760
        %v2241 = vmul.f32 %v2166, %v2166
        %v2242 = vsub.f32 %v2240, %v2241
        %v2243 = vadd.f32 %v2242, 1e-05
        %v2244 = vrsqrt.pop %v2243
        %v2245 = vld [vmem:[%s10] sm:$0xff]
        %v2246 = vld [vmem:[%s10 + $0x8] sm:$0xff]
        %v2247 = vld [vmem:[%s10 + $0x10] sm:$0xff]
        %v2248 = vld [vmem:[%s10 + $0x18] sm:$0xff]
        %v2250 = vsel %vm844, %v2166, 0
        %2252 = vmatprep.subr.mxu0 0.0
        %2253 = vmatpush1.msra.mxu0 %v2245
        %2254 = vmatprep.subr.mxu0 0.0
        %2255 = vmatpush1.msra.mxu0 %v2246
        %2256 = vmatprep.subr.mxu0 0.0
        %2257 = vmatpush1.msra.mxu0 %v2247
        %2258 = vmatprep.subr.mxu0 0.0
        %2259 = vmatpush1.msra.mxu0 %v2248
        %2260 = vmatprep.subr.mxu0 0.0
        %2261 = vmatpush1.msra.mxu0 0.0
        %2262 = vmatprep.subr.mxu0 0.0
        %2263 = vmatpush1.msra.mxu0 0.0
        %2264 = vmatprep.subr.mxu0 0.0
        %2265 = vmatpush1.msra.mxu0 0.0
        %2266 = vmatprep.subr.mxu0 0.0
        %2267 = vmatpush1.msra.mxu0 0.0
        %2268 = vmatprep.subr.mxu0 0.0
        %2269 = vmatpush1.msra.mxu0 0.0
        %2270 = vmatprep.subr.mxu0 0.0
        %2271 = vmatpush1.msra.mxu0 0.0
        %2272 = vmatprep.subr.mxu0 0.0
        %2273 = vmatpush1.msra.mxu0 0.0
        %2274 = vmatprep.subr.mxu0 0.0
        %2275 = vmatpush1.msra.mxu0 0.0
        %2276 = vmatprep.subr.mxu0 0.0
        %2277 = vmatpush1.msra.mxu0 0.0
        %2278 = vmatprep.subr.mxu0 0.0
        %2279 = vmatpush1.msra.mxu0 0.0
        %2280 = vmatprep.subr.mxu0 0.0
        %2281 = vmatpush1.msra.mxu0 0.0
        %2282 = vmatprep.subr.mxu0 0.0
        %2283 = vmatpush1.msra.mxu0 0.0
        %2284 = vmatprep.subr.mxu0 0.0
        %2285 = vmatpush1.msra.mxu0 0.0
        %2286 = vmatprep.subr.mxu0 0.0
        %2287 = vmatpush1.msra.mxu0 0.0
        %2288 = vmatprep.subr.mxu0 0.0
        %2289 = vmatpush1.msra.mxu0 0.0
        %2290 = vmatprep.subr.mxu0 0.0
        %2291 = vmatpush1.msra.mxu0 0.0
        %2292 = vmatprep.subr.mxu0 0.0
        %2293 = vmatpush1.msra.mxu0 0.0
        %2294 = vmatprep.subr.mxu0 0.0
        %2295 = vmatpush1.msra.mxu0 0.0
        %2296 = vmatprep.subr.mxu0 0.0
        %2297 = vmatpush1.msra.mxu0 0.0
        %2298 = vmatprep.subr.mxu0 0.0
        %2299 = vmatpush1.msra.mxu0 0.0
        %2300 = vmatprep.subr.mxu0 0.0
        %2301 = vmatpush1.msra.mxu0 0.0
        %2302 = vmatprep.subr.mxu0 0.0
        %2303 = vmatpush1.msra.mxu0 0.0
        %2304 = vmatprep.subr.mxu0 0.0
        %2305 = vmatpush1.msra.mxu0 0.0
        %2306 = vmatprep.subr.mxu0 0.0
        %2307 = vmatpush1.msra.mxu0 0.0
        %2308 = vmatprep.subr.mxu0 0.0
        %2309 = vmatpush1.msra.mxu0 0.0
        %2310 = vmatprep.subr.mxu0 0.0
        %2311 = vmatpush1.msra.mxu0 0.0
        %2312 = vmatprep.subr.mxu0 0.0
        %2313 = vmatpush1.msra.mxu0 0.0
        %2314 = vmatprep.subr.mxu0 0.0
        %2315 = vmatpush1.msra.mxu0 0.0
        %2316 = vmatprep.mubr.f32.mxu0 0.0
        %2317 = vmatmul.mubr.f32.gmra.mrb[0].mxu0 %v2250
        %v2318 = vpop.f32.mrb[0].mxu0
        %v2319 = vadd.f32 0.0, %v2318
        %v2320 = vpop.f32.mrb[0].mxu0
        %2321 = vdwg.mxu0
        %v2323 = vsel %vm844, %v2244, 0
        %2325 = vmatprep.subr.mxu0 0.0
        %2326 = vmatpush1.msra.mxu0 %v2245
        %2327 = vmatprep.subr.mxu0 0.0
        %2328 = vmatpush1.msra.mxu0 %v2246
        %2329 = vmatprep.subr.mxu0 0.0
        %2330 = vmatpush1.msra.mxu0 %v2247
        %2331 = vmatprep.subr.mxu0 0.0
        %2332 = vmatpush1.msra.mxu0 %v2248
        %2333 = vmatprep.subr.mxu0 0.0
        %2334 = vmatpush1.msra.mxu0 0.0
        %2335 = vmatprep.subr.mxu0 0.0
        %2336 = vmatpush1.msra.mxu0 0.0
        %2337 = vmatprep.subr.mxu0 0.0
        %2338 = vmatpush1.msra.mxu0 0.0
        %2339 = vmatprep.subr.mxu0 0.0
        %2340 = vmatpush1.msra.mxu0 0.0
        %2341 = vmatprep.subr.mxu0 0.0
        %2342 = vmatpush1.msra.mxu0 0.0
        %2343 = vmatprep.subr.mxu0 0.0
        %2344 = vmatpush1.msra.mxu0 0.0
        %2345 = vmatprep.subr.mxu0 0.0
        %2346 = vmatpush1.msra.mxu0 0.0
        %2347 = vmatprep.subr.mxu0 0.0
        %2348 = vmatpush1.msra.mxu0 0.0
        %2349 = vmatprep.subr.mxu0 0.0
        %2350 = vmatpush1.msra.mxu0 0.0
        %2351 = vmatprep.subr.mxu0 0.0
        %2352 = vmatpush1.msra.mxu0 0.0
        %2353 = vmatprep.subr.mxu0 0.0
        %2354 = vmatpush1.msra.mxu0 0.0
        %2355 = vmatprep.subr.mxu0 0.0
        %2356 = vmatpush1.msra.mxu0 0.0
        %2357 = vmatprep.subr.mxu0 0.0
        %2358 = vmatpush1.msra.mxu0 0.0
        %2359 = vmatprep.subr.mxu0 0.0
        %2360 = vmatpush1.msra.mxu0 0.0
        %2361 = vmatprep.subr.mxu0 0.0
        %2362 = vmatpush1.msra.mxu0 0.0
        %2363 = vmatprep.subr.mxu0 0.0
        %2364 = vmatpush1.msra.mxu0 0.0
        %2365 = vmatprep.subr.mxu0 0.0
        %2366 = vmatpush1.msra.mxu0 0.0
        %2367 = vmatprep.subr.mxu0 0.0
        %2368 = vmatpush1.msra.mxu0 0.0
        %2369 = vmatprep.subr.mxu0 0.0
        %2370 = vmatpush1.msra.mxu0 0.0
        %2371 = vmatprep.subr.mxu0 0.0
        %2372 = vmatpush1.msra.mxu0 0.0
        %2373 = vmatprep.subr.mxu0 0.0
        %2374 = vmatpush1.msra.mxu0 0.0
        %2375 = vmatprep.subr.mxu0 0.0
        %2376 = vmatpush1.msra.mxu0 0.0
        %2377 = vmatprep.subr.mxu0 0.0
        %2378 = vmatpush1.msra.mxu0 0.0
        %2379 = vmatprep.subr.mxu0 0.0
        %2380 = vmatpush1.msra.mxu0 0.0
        %2381 = vmatprep.subr.mxu0 0.0
        %2382 = vmatpush1.msra.mxu0 0.0
        %2383 = vmatprep.subr.mxu0 0.0
        %2384 = vmatpush1.msra.mxu0 0.0
        %2385 = vmatprep.subr.mxu0 0.0
        %2386 = vmatpush1.msra.mxu0 0.0
        %2387 = vmatprep.subr.mxu0 0.0
        %2388 = vmatpush1.msra.mxu0 0.0
        %2389 = vmatprep.mubr.f32.mxu0 0.0
        %2390 = vmatmul.mubr.f32.gmra.mrb[0].mxu0 %v2323
        %v2391 = vpop.f32.mrb[0].mxu0
        %v2392 = vadd.f32 0.0, %v2391
        %v2393 = vpop.f32.mrb[0].mxu0
        %2394 = vdwg.mxu0
        %v2395 = vld [vmem:[%s7] sm:$0x1]
        %v2396 = vmul.f32 %v2392, %v2395
        %v2397 = vld [vmem:[%s8] sm:$0x1]
        %v2398 = vmul.f32 %v2319, %v2396
        %v2399 = vsub.f32 %v2397, %v2398
        %v2400 = vlaneseq
        %v2401 = vshrl.u32 %v2400, 7
        %v2402 = vsub.s32 0, %v2401
        %v2403 = vrot.slane %v2396, %v2402
        %v2404 = vmul.f32 %v2027, %v2403
        %v2405 = vmul.f32 %v2028, %v2403
        %v2406 = vmul.f32 %v2029, %v2403
        %v2407 = vmul.f32 %v2030, %v2403
        %v2408 = vmul.f32 %v2031, %v2403
        %v2409 = vmul.f32 %v2032, %v2403
        %v2410 = vmul.f32 %v2033, %v2403
        %v2411 = vmul.f32 %v2034, %v2403
        %v2413 = vlaneseq
        %v2414 = vshrl.u32 %v2413, 7
        %v2415 = vsub.s32 0, %v2414
        %v2416 = vrot.slane %v2399, %v2415
        %v2418 = vadd.f32 %v2404, %v2416
        %v2419 = vadd.f32 %v2405, %v2416
        %v2420 = vadd.f32 %v2406, %v2416
        %v2421 = vadd.f32 %v2407, %v2416
        %v2422 = vadd.f32 %v2408, %v2416
        %v2423 = vadd.f32 %v2409, %v2416
        %v2424 = vadd.f32 %v2410, %v2416
        %v2425 = vadd.f32 %v2411, %v2416
        %v2426 = vxor.u32 %v2418, 2147483648
        %v2427 = vxor.u32 %v2419, 2147483648
        %v2428 = vxor.u32 %v2420, 2147483648
        %v2429 = vxor.u32 %v2421, 2147483648
        %v2430 = vxor.u32 %v2422, 2147483648
        %v2431 = vxor.u32 %v2423, 2147483648
        %v2432 = vxor.u32 %v2424, 2147483648
        %v2433 = vxor.u32 %v2425, 2147483648
        %v2434 = vmul.f32 %v2426, 1.442695
        %v2435 = vpow.pop %v2434
        %v2436 = vmul.f32 %v2427, 1.442695
        %v2437 = vpow.pop %v2436
        %v2438 = vmul.f32 %v2428, 1.442695
        %v2439 = vpow.pop %v2438
        %v2440 = vmul.f32 %v2429, 1.442695
        %v2441 = vpow.pop %v2440
        %v2442 = vmul.f32 %v2430, 1.442695
        %v2443 = vpow.pop %v2442
        %v2444 = vmul.f32 %v2431, 1.442695
        %v2445 = vpow.pop %v2444
        %v2446 = vmul.f32 %v2432, 1.442695
        %v2447 = vpow.pop %v2446
        %v2448 = vmul.f32 %v2433, 1.442695
        %v2449 = vpow.pop %v2448
        %v2450 = vadd.f32 %v2435, 1.0
        %v2451 = vadd.f32 %v2437, 1.0
        %v2452 = vadd.f32 %v2439, 1.0
        %v2453 = vadd.f32 %v2441, 1.0
        %v2454 = vadd.f32 %v2443, 1.0
        %v2455 = vadd.f32 %v2445, 1.0
        %v2456 = vadd.f32 %v2447, 1.0
        %v2457 = vadd.f32 %v2449, 1.0
        %v2458 = vrcp.pop %v2450
        %v2459 = vmul.f32 1.0, %v2458
        %v2460 = vrcp.pop %v2451
        %v2461 = vmul.f32 1.0, %v2460
        %v2462 = vrcp.pop %v2452
        %v2463 = vmul.f32 1.0, %v2462
        %v2464 = vrcp.pop %v2453
        %v2465 = vmul.f32 1.0, %v2464
        %v2466 = vrcp.pop %v2454
        %v2467 = vmul.f32 1.0, %v2466
        %v2468 = vrcp.pop %v2455
        %v2469 = vmul.f32 1.0, %v2468
        %v2470 = vrcp.pop %v2456
        %v2471 = vmul.f32 1.0, %v2470
        %v2472 = vrcp.pop %v2457
        %v2473 = vmul.f32 1.0, %v2472
        %v2474 = vmul.f32 %v2418, %v2459
        %v2475 = vmul.f32 %v2419, %v2461
        %v2476 = vmul.f32 %v2420, %v2463
        %v2477 = vmul.f32 %v2421, %v2465
        %v2478 = vmul.f32 %v2422, %v2467
        %v2479 = vmul.f32 %v2423, %v2469
        %v2480 = vmul.f32 %v2424, %v2471
        %v2481 = vmul.f32 %v2425, %v2473
        %v2482 = vpack.c.bf16 %v2475, %v2474
        %v2483 = vpack.c.bf16 %v2477, %v2476
        %v2484 = vpack.c.bf16 %v2479, %v2478
        %v2485 = vpack.c.bf16 %v2481, %v2480
        %v2490 = vrot.slane %v2482, 4
        %v2491 = vrot.slane %v2483, 4
        %v2492 = vsel %vm1086, %v2490, %v2491
        %v2493 = vrot.slane %v2484, 4
        %v2494 = vsel %vm1086, %v2491, %v2493
        %v2495 = vrot.slane %v2485, 4
        %v2496 = vsel %vm1086, %v2493, %v2495
        %2502 = vst.msk [vmem:[#allocation2] sm:$0xf0] %vm1099, %v2490
        %2503 = vst.msk [vmem:[#allocation2 + $0x10] sm:$0xff] %vm628, %v2492
        %2504 = vst.msk [vmem:[#allocation2 + $0x20] sm:$0xff] %vm628, %v2494
        %2505 = vst.msk [vmem:[#allocation2 + $0x30] sm:$0xff] %vm628, %v2496
        %2506 = vst.msk [vmem:[#allocation2 + $0x40] sm:$0xf] %vm1104, %v2495
        %v2507 = vld [vmem:[#allocation2] sm:$0xf8]
        %v2508 = vld [vmem:[#allocation2 + $0x10] sm:$0xff]
        %v2509 = vld [vmem:[#allocation2 + $0x20] sm:$0xff]
        %v2510 = vld [vmem:[#allocation2 + $0x30] sm:$0xff]
        %v2511 = vld [vmem:[#allocation2 + $0x40] sm:$0xf]
        %v2512 = vld [vmem:[#allocation2] sm:$0xf0]
        %v2513 = vld [vmem:[#allocation2 + $0x40] sm:$0x1f]
        %v2514 = vsel %vm1193, %v2507, 0
        %v2515 = vsel %vm1194, %v2508, 0
        %v2516 = vsel %vm1195, %v2509, 0
        %v2517 = vsel %vm1196, %v2510, 0
        %v2518 = vsel %vm1197, %v2511, 0
        %v2520 = vshrl.u32 %v2514, 16
        %v2522 = vrot.slane %v2520, 7
        %v2523 = vshll.u32 %v2514, 16
        %v2525 = vor.u32 %v2522, %v2523
        %v2527 = vshrl.u32 %v2515, 16
        %v2529 = vrot.slane %v2527, 7
        %v2530 = vshll.u32 %v2515, 16
        %v2532 = vor.u32 %v2529, %v2530
        %v2533 = vsel %vm1203, %v2522, %v2532
        %v2535 = vshrl.u32 %v2516, 16
        %v2537 = vrot.slane %v2535, 7
        %v2538 = vshll.u32 %v2516, 16
        %v2540 = vor.u32 %v2537, %v2538
        %v2541 = vsel %vm1203, %v2529, %v2540
        %v2543 = vshrl.u32 %v2517, 16
        %v2545 = vrot.slane %v2543, 7
        %v2546 = vshll.u32 %v2517, 16
        %v2548 = vor.u32 %v2545, %v2546
        %v2549 = vsel %vm1203, %v2537, %v2548
        %v2551 = vshrl.u32 %v2518, 16
        %v2553 = vrot.slane %v2551, 7
        %v2554 = vshll.u32 %v2518, 16
        %v2556 = vor.u32 %v2553, %v2554
        %v2557 = vsel %vm1203, %v2545, %v2556
        %2558 = vrot.lane.b32.xlu0 %v2525, 64
        %v2559 = vpop.permute.xlu0 %2558
        %2560 = vrot.lane.b32.xlu0 %v2533, 64
        %v2561 = vpop.permute.xlu0 %2560
        %2562 = vrot.lane.b32.xlu0 %v2541, 64
        %v2563 = vpop.permute.xlu0 %2562
        %2564 = vrot.lane.b32.xlu0 %v2549, 64
        %v2565 = vpop.permute.xlu0 %2564
        %2566 = vrot.lane.b32.xlu0 %v2557, 64
        %v2567 = vpop.permute.xlu0 %2566
        %2573 = vst.msk [vmem:[#allocation2] sm:$0xf0] %vm1258, %v2559
        %2574 = vst.msk [vmem:[#allocation2 + $0x10] sm:$0xff] %vm1260, %v2561
        %2575 = vst.msk [vmem:[#allocation2 + $0x20] sm:$0xff] %vm1260, %v2563
        %2576 = vst.msk [vmem:[#allocation2 + $0x30] sm:$0xff] %vm1260, %v2565
        %2577 = vst.msk [vmem:[#allocation2 + $0x40] sm:$0xf] %vm1264, %v2567
        %v2578 = vsel %vm1346, %v2512, 0
        %v2579 = vsel %vm1347, %v2508, 0
        %v2580 = vsel %vm1348, %v2509, 0
        %v2581 = vsel %vm1349, %v2510, 0
        %v2582 = vsel %vm1350, %v2513, 0
        %v2584 = vshrl.u32 %v2578, 16
        %v2586 = vshll.u32 %v2578, 16
        %v2588 = vrot.slane %v2586, 1
        %v2589 = vor.u32 %v2584, %v2588
        %v2591 = vshll.u32 %v2579, 16
        %v2593 = vrot.slane %v2591, 1
        %v2594 = vsel %vm1356, %v2589, %v2593
        %v2595 = vshrl.u32 %v2579, 16
        %v2597 = vor.u32 %v2595, %v2593
        %v2599 = vshll.u32 %v2580, 16
        %v2601 = vrot.slane %v2599, 1
        %v2602 = vsel %vm1356, %v2597, %v2601
        %v2603 = vshrl.u32 %v2580, 16
        %v2605 = vor.u32 %v2603, %v2601
        %v2607 = vshll.u32 %v2581, 16
        %v2609 = vrot.slane %v2607, 1
        %v2610 = vsel %vm1356, %v2605, %v2609
        %v2611 = vshrl.u32 %v2581, 16
        %v2613 = vor.u32 %v2611, %v2609
        %v2615 = vshll.u32 %v2582, 16
        %v2617 = vrot.slane %v2615, 1
        %v2618 = vsel %vm1356, %v2613, %v2617
        %v2619 = vshrl.u32 %v2582, 16
        %v2621 = vor.u32 %v2619, %v2617
        %2627 = vst.msk [vmem:[#allocation2 + $0x8] sm:$0xf0] %vm1099, %v2594
        %2628 = vst.msk [vmem:[#allocation2 + $0x18] sm:$0xff] %vm628, %v2602
        %2629 = vst.msk [vmem:[#allocation2 + $0x28] sm:$0xff] %vm628, %v2610
        %2630 = vst.msk [vmem:[#allocation2 + $0x38] sm:$0xff] %vm628, %v2618
        %2631 = vst.msk [vmem:[#allocation2 + $0x48] sm:$0xf] %vm1104, %v2621
        %v2632 = vld [vmem:[#allocation2] sm:$0xf0]
        %v2633 = vld [vmem:[#allocation2 + $0x8] sm:$0xf0]
        %v2634 = vld [vmem:[#allocation2 + $0x10] sm:$0xff]
        %v2635 = vld [vmem:[#allocation2 + $0x18] sm:$0xff]
        %v2636 = vld [vmem:[#allocation2 + $0x20] sm:$0xff]
        %v2637 = vld [vmem:[#allocation2 + $0x28] sm:$0xff]
        %v2638 = vld [vmem:[#allocation2 + $0x30] sm:$0xff]
        %v2639 = vld [vmem:[#allocation2 + $0x38] sm:$0xff]
        %v2640 = vld [vmem:[#allocation2 + $0x40] sm:$0xf]
        %v2641 = vld [vmem:[#allocation2 + $0x48] sm:$0xf]
        %s2642 = scalar_lea.vmem %s11, 96
        %v2643 = vld [vmem:[%s2642] sm:$0xf]
        %v2644 = vld [vmem:[%s2642 + $0x4] sm:$0xf]
        %v2645 = vld [vmem:[%s2642 + $0x8] sm:$0xf]
        %v2646 = vld [vmem:[%s2642 + $0xc] sm:$0xf]
        %v2647 = vld [vmem:[%s2642 + $0x10] sm:$0xf]
        %v2648 = vld [vmem:[%s2642 + $0x14] sm:$0xf]
        %v2649 = vld [vmem:[%s2642 + $0x18] sm:$0xf]
        %v2650 = vld [vmem:[%s2642 + $0x1c] sm:$0xf]
        %v2651 = vld [vmem:[%s2642 + $0x20] sm:$0xf]
        %v2652 = vld [vmem:[%s2642 + $0x24] sm:$0xf]
        %v2653 = vld [vmem:[%s2642 + $0x28] sm:$0xf]
        %v2654 = vld [vmem:[%s2642 + $0x2c] sm:$0xf]
        %v2655 = vld [vmem:[%s2642 + $0x30] sm:$0xf]
        %v2656 = vld [vmem:[%s2642 + $0x34] sm:$0xf]
        %v2657 = vld [vmem:[%s2642 + $0x38] sm:$0xf]
        %v2658 = vld [vmem:[%s2642 + $0x3c] sm:$0xf]
        %v2659 = vld [vmem:[%s2642 + $0x40] sm:$0xf]
        %v2660 = vld [vmem:[%s2642 + $0x44] sm:$0xf]
        %v2661 = vld [vmem:[%s2642 + $0x48] sm:$0xf]
        %v2662 = vld [vmem:[%s2642 + $0x4c] sm:$0xf]
        %v2663 = vld [vmem:[%s2642 + $0x50] sm:$0xf]
        %v2664 = vld [vmem:[%s2642 + $0x54] sm:$0xf]
        %v2665 = vld [vmem:[%s2642 + $0x58] sm:$0xf]
        %v2666 = vld [vmem:[%s2642 + $0x5c] sm:$0xf]
        %v2667 = vld [vmem:[#allocation2] sm:$0xff]
        %v2668 = vld [vmem:[#allocation2 + $0x8] sm:$0xff]
        %v2669 = vld [vmem:[%s11] sm:$0xf]
        %v2670 = vld [vmem:[%s11 + $0x4] sm:$0xf]
        %v2671 = vld [vmem:[%s11 + $0x8] sm:$0xf]
        %v2672 = vld [vmem:[%s11 + $0xc] sm:$0xf]
        %v2673 = vld [vmem:[%s11 + $0x10] sm:$0xf]
        %v2674 = vld [vmem:[%s11 + $0x14] sm:$0xf]
        %v2675 = vld [vmem:[%s11 + $0x18] sm:$0xf]
        %v2676 = vld [vmem:[%s11 + $0x1c] sm:$0xf]
        %v2677 = vld [vmem:[%s11 + $0x20] sm:$0xf]
        %v2678 = vld [vmem:[%s11 + $0x24] sm:$0xf]
        %v2679 = vld [vmem:[%s11 + $0x28] sm:$0xf]
        %v2680 = vld [vmem:[%s11 + $0x2c] sm:$0xf]
        %v2681 = vld [vmem:[%s11 + $0x30] sm:$0xf]
        %v2682 = vld [vmem:[%s11 + $0x34] sm:$0xf]
        %v2683 = vld [vmem:[%s11 + $0x38] sm:$0xf]
        %v2684 = vld [vmem:[%s11 + $0x3c] sm:$0xf]
        %v2685 = vld [vmem:[%s11 + $0x40] sm:$0xf]
        %v2686 = vld [vmem:[%s11 + $0x44] sm:$0xf]
        %v2687 = vld [vmem:[%s11 + $0x48] sm:$0xf]
        %v2688 = vld [vmem:[%s11 + $0x4c] sm:$0xf]
        %v2689 = vld [vmem:[%s11 + $0x50] sm:$0xf]
        %v2690 = vld [vmem:[%s11 + $0x54] sm:$0xf]
        %v2691 = vld [vmem:[%s11 + $0x58] sm:$0xf]
        %v2692 = vld [vmem:[%s11 + $0x5c] sm:$0xf]
        %v2717 = vunpack.c.l.b16 %v2669
        %v2718 = vunpack.c.l.b16 %v2670
        %v2719 = vunpack.c.l.b16 %v2671
        %v2720 = vunpack.c.l.b16 %v2672
        %v2721 = vunpack.c.l.b16 %v2673
        %v2722 = vunpack.c.l.b16 %v2674
        %v2723 = vunpack.c.l.b16 %v2675
        %v2724 = vunpack.c.l.b16 %v2676
        %v2725 = vunpack.c.l.b16 %v2677
        %v2726 = vunpack.c.l.b16 %v2678
        %v2727 = vunpack.c.l.b16 %v2679
        %v2728 = vunpack.c.l.b16 %v2680
        %v2729 = vunpack.c.l.b16 %v2681
        %v2730 = vunpack.c.l.b16 %v2682
        %v2731 = vunpack.c.l.b16 %v2683
        %v2732 = vunpack.c.l.b16 %v2684
        %v2733 = vunpack.c.l.b16 %v2685
        %v2734 = vunpack.c.l.b16 %v2686
        %v2735 = vunpack.c.l.b16 %v2687
        %v2736 = vunpack.c.l.b16 %v2688
        %v2737 = vunpack.c.l.b16 %v2689
        %v2738 = vunpack.c.l.b16 %v2690
        %v2739 = vunpack.c.l.b16 %v2691
        %v2740 = vunpack.c.l.b16 %v2692
        %v2741 = vpack.c.b16 %v2718, %v2717
        %v2742 = vpack.c.b16 %v2720, %v2719
        %v2743 = vpack.c.b16 %v2722, %v2721
        %v2744 = vpack.c.b16 %v2724, %v2723
        %v2745 = vpack.c.b16 %v2726, %v2725
        %v2746 = vpack.c.b16 %v2728, %v2727
        %v2747 = vpack.c.b16 %v2730, %v2729
        %v2748 = vpack.c.b16 %v2732, %v2731
        %v2749 = vpack.c.b16 %v2734, %v2733
        %v2750 = vpack.c.b16 %v2736, %v2735
        %v2751 = vpack.c.b16 %v2738, %v2737
        %v2752 = vpack.c.b16 %v2740, %v2739
        %v2766 = vsel %vm628, %v2668, 0
        %v2769 = vsel %vm628, %v2635, 0
        %v2772 = vsel %vm628, %v2637, 0
        %v2775 = vsel %vm628, %v2639, 0
        %2777 = vmatprep.subr.bf16.mxu0 0
        %2778 = vmatpush1.bf16.msra.mxu0 %v2741
        %2779 = vmatprep.subr.bf16.mxu0 0
        %2780 = vmatpush1.bf16.msra.mxu0 %v2742
        %2781 = vmatprep.subr.bf16.mxu0 0
        %2782 = vmatpush1.bf16.msra.mxu0 %v2743
        %2783 = vmatprep.subr.bf16.mxu0 0
        %2784 = vmatpush1.bf16.msra.mxu0 %v2744
        %2785 = vmatprep.subr.bf16.mxu0 0
        %2786 = vmatpush1.bf16.msra.mxu0 %v2745
        %2787 = vmatprep.subr.bf16.mxu0 0
        %2788 = vmatpush1.bf16.msra.mxu0 %v2746
        %2789 = vmatprep.subr.bf16.mxu0 0
        %2790 = vmatpush1.bf16.msra.mxu0 %v2747
        %2791 = vmatprep.subr.bf16.mxu0 0
        %2792 = vmatpush1.bf16.msra.mxu0 %v2748
        %2793 = vmatprep.subr.bf16.mxu0 0
        %2794 = vmatpush1.bf16.msra.mxu0 %v2749
        %2795 = vmatprep.subr.bf16.mxu0 0
        %2796 = vmatpush1.bf16.msra.mxu0 %v2750
        %2797 = vmatprep.subr.bf16.mxu0 0
        %2798 = vmatpush1.bf16.msra.mxu0 %v2751
        %2799 = vmatprep.subr.bf16.mxu0 0
        %2800 = vmatpush1.bf16.msra.mxu0 %v2752
        %2801 = vmatprep.subr.bf16.mxu0 0
        %2802 = vmatpush1.bf16.msra.mxu0 0
        %2803 = vmatprep.subr.bf16.mxu0 0
        %2804 = vmatpush1.bf16.msra.mxu0 0
        %2805 = vmatprep.subr.bf16.mxu0 0
        %2806 = vmatpush1.bf16.msra.mxu0 0
        %2807 = vmatprep.subr.bf16.mxu0 0
        %2808 = vmatpush1.bf16.msra.mxu0 0
        %2809 = vmatprep.mubr.bf16.mxu0 %v2766
        %2810 = vmatmul.mubr.bf16.gmra.mrb[0].mxu0 %v2667
        %v2811 = vpop.f32.mrb[0].mxu0
        %v2812 = vadd.f32 0.0, %v2811
        %v2813 = vpop.f32.mrb[0].mxu0
        %v2814 = vpop.f32.mrb[0].mxu0
        %v2815 = vadd.f32 0.0, %v2814
        %v2816 = vpop.f32.mrb[0].mxu0
        %2817 = vmatprep.mubr.bf16.mxu0 %v2769
        %2818 = vmatmul.mubr.bf16.gmra.mrb[0].mxu0 %v2634
        %v2819 = vpop.f32.mrb[0].mxu0
        %v2820 = vadd.f32 0.0, %v2819
        %v2821 = vpop.f32.mrb[0].mxu0
        %v2822 = vpop.f32.mrb[0].mxu0
        %v2823 = vadd.f32 0.0, %v2822
        %v2824 = vpop.f32.mrb[0].mxu0
        %2825 = vmatprep.mubr.bf16.mxu0 %v2772
        %2826 = vmatmul.mubr.bf16.gmra.mrb[0].mxu0 %v2636
        %v2827 = vpop.f32.mrb[0].mxu0
        %v2828 = vadd.f32 0.0, %v2827
        %v2829 = vpop.f32.mrb[0].mxu0
        %v2830 = vpop.f32.mrb[0].mxu0
        %v2831 = vadd.f32 0.0, %v2830
        %v2832 = vpop.f32.mrb[0].mxu0
        %2833 = vmatprep.mubr.bf16.mxu0 %v2775
        %2834 = vmatmul.mubr.bf16.gmra.mrb[0].mxu0 %v2638
        %v2835 = vpop.f32.mrb[0].mxu0
        %v2836 = vadd.f32 0.0, %v2835
        %v2837 = vpop.f32.mrb[0].mxu0
        %v2838 = vpop.f32.mrb[0].mxu0
        %v2839 = vadd.f32 0.0, %v2838
        %v2840 = vpop.f32.mrb[0].mxu0
        %2841 = vdwg.mxu0
        %v2842 = vld [vmem:[#allocation2 + $0x40] sm:$0xff]
        %v2843 = vld [vmem:[#allocation2 + $0x48] sm:$0xff]
        %s2844 = scalar_lea.vmem %s11, 192
        %v2845 = vld [vmem:[%s2844] sm:$0xf]
        %v2846 = vld [vmem:[%s2844 + $0x4] sm:$0xf]
        %v2847 = vld [vmem:[%s2844 + $0x8] sm:$0xf]
        %v2848 = vld [vmem:[%s2844 + $0xc] sm:$0xf]
        %v2849 = vld [vmem:[%s2844 + $0x10] sm:$0xf]
        %v2850 = vld [vmem:[%s2844 + $0x14] sm:$0xf]
        %v2851 = vld [vmem:[%s2844 + $0x18] sm:$0xf]
        %v2852 = vld [vmem:[%s2844 + $0x1c] sm:$0xf]
        %v2853 = vld [vmem:[%s2844 + $0x20] sm:$0xf]
        %v2854 = vld [vmem:[%s2844 + $0x24] sm:$0xf]
        %v2855 = vld [vmem:[%s2844 + $0x28] sm:$0xf]
        %v2856 = vld [vmem:[%s2844 + $0x2c] sm:$0xf]
        %v2857 = vld [vmem:[%s2844 + $0x30] sm:$0xf]
        %v2858 = vld [vmem:[%s2844 + $0x34] sm:$0xf]
        %v2859 = vld [vmem:[%s2844 + $0x38] sm:$0xf]
        %v2860 = vld [vmem:[%s2844 + $0x3c] sm:$0xf]
        %v2861 = vld [vmem:[%s2844 + $0x40] sm:$0xf]
        %v2862 = vld [vmem:[%s2844 + $0x44] sm:$0xf]
        %v2863 = vld [vmem:[%s2844 + $0x48] sm:$0xf]
        %v2864 = vld [vmem:[%s2844 + $0x4c] sm:$0xf]
        %v2865 = vld [vmem:[%s2844 + $0x50] sm:$0xf]
        %v2866 = vld [vmem:[%s2844 + $0x54] sm:$0xf]
        %v2867 = vld [vmem:[%s2844 + $0x58] sm:$0xf]
        %v2868 = vld [vmem:[%s2844 + $0x5c] sm:$0xf]
        %v2893 = vunpack.c.l.b16 %v2845
        %v2894 = vunpack.c.l.b16 %v2846
        %v2895 = vunpack.c.l.b16 %v2847
        %v2896 = vunpack.c.l.b16 %v2848
        %v2897 = vunpack.c.l.b16 %v2849
        %v2898 = vunpack.c.l.b16 %v2850
        %v2899 = vunpack.c.l.b16 %v2851
        %v2900 = vunpack.c.l.b16 %v2852
        %v2901 = vunpack.c.l.b16 %v2853
        %v2902 = vunpack.c.l.b16 %v2854
        %v2903 = vunpack.c.l.b16 %v2855
        %v2904 = vunpack.c.l.b16 %v2856
        %v2905 = vunpack.c.l.b16 %v2857
        %v2906 = vunpack.c.l.b16 %v2858
        %v2907 = vunpack.c.l.b16 %v2859
        %v2908 = vunpack.c.l.b16 %v2860
        %v2909 = vunpack.c.l.b16 %v2861
        %v2910 = vunpack.c.l.b16 %v2862
        %v2911 = vunpack.c.l.b16 %v2863
        %v2912 = vunpack.c.l.b16 %v2864
        %v2913 = vunpack.c.l.b16 %v2865
        %v2914 = vunpack.c.l.b16 %v2866
        %v2915 = vunpack.c.l.b16 %v2867
        %v2916 = vunpack.c.l.b16 %v2868
        %v2917 = vpack.c.b16 %v2894, %v2893
        %v2918 = vpack.c.b16 %v2896, %v2895
        %v2919 = vpack.c.b16 %v2898, %v2897
        %v2920 = vpack.c.b16 %v2900, %v2899
        %v2921 = vpack.c.b16 %v2902, %v2901
        %v2922 = vpack.c.b16 %v2904, %v2903
        %v2923 = vpack.c.b16 %v2906, %v2905
        %v2924 = vpack.c.b16 %v2908, %v2907
        %v2925 = vpack.c.b16 %v2910, %v2909
        %v2926 = vpack.c.b16 %v2912, %v2911
        %v2927 = vpack.c.b16 %v2914, %v2913
        %v2928 = vpack.c.b16 %v2916, %v2915
        %v2942 = vsel %vm628, %v2843, 0
        %2944 = vmatprep.subr.bf16.mxu0 0
        %2945 = vmatpush1.bf16.msra.mxu0 %v2917
        %2946 = vmatprep.subr.bf16.mxu0 0
        %2947 = vmatpush1.bf16.msra.mxu0 %v2918
        %2948 = vmatprep.subr.bf16.mxu0 0
        %2949 = vmatpush1.bf16.msra.mxu0 %v2919
        %2950 = vmatprep.subr.bf16.mxu0 0
        %2951 = vmatpush1.bf16.msra.mxu0 %v2920
        %2952 = vmatprep.subr.bf16.mxu0 0
        %2953 = vmatpush1.bf16.msra.mxu0 %v2921
        %2954 = vmatprep.subr.bf16.mxu0 0
        %2955 = vmatpush1.bf16.msra.mxu0 %v2922
        %2956 = vmatprep.subr.bf16.mxu0 0
        %2957 = vmatpush1.bf16.msra.mxu0 %v2923
        %2958 = vmatprep.subr.bf16.mxu0 0
        %2959 = vmatpush1.bf16.msra.mxu0 %v2924
        %2960 = vmatprep.subr.bf16.mxu0 0
        %2961 = vmatpush1.bf16.msra.mxu0 %v2925
        %2962 = vmatprep.subr.bf16.mxu0 0
        %2963 = vmatpush1.bf16.msra.mxu0 %v2926
        %2964 = vmatprep.subr.bf16.mxu0 0
        %2965 = vmatpush1.bf16.msra.mxu0 %v2927
        %2966 = vmatprep.subr.bf16.mxu0 0
        %2967 = vmatpush1.bf16.msra.mxu0 %v2928
        %2968 = vmatprep.subr.bf16.mxu0 0
        %2969 = vmatpush1.bf16.msra.mxu0 0
        %2970 = vmatprep.subr.bf16.mxu0 0
        %2971 = vmatpush1.bf16.msra.mxu0 0
        %2972 = vmatprep.subr.bf16.mxu0 0
        %2973 = vmatpush1.bf16.msra.mxu0 0
        %2974 = vmatprep.subr.bf16.mxu0 0
        %2975 = vmatpush1.bf16.msra.mxu0 0
        %2976 = vmatprep.mubr.bf16.mxu0 %v2769
        %2977 = vmatmul.mubr.bf16.gmra.mrb[0].mxu0 %v2634
        %v2978 = vpop.f32.mrb[0].mxu0
        %v2979 = vadd.f32 0.0, %v2978
        %v2980 = vpop.f32.mrb[0].mxu0
        %v2981 = vpop.f32.mrb[0].mxu0
        %v2982 = vadd.f32 0.0, %v2981
        %v2983 = vpop.f32.mrb[0].mxu0
        %2984 = vmatprep.mubr.bf16.mxu0 %v2772
        %2985 = vmatmul.mubr.bf16.gmra.mrb[0].mxu0 %v2636
        %v2986 = vpop.f32.mrb[0].mxu0
        %v2987 = vadd.f32 0.0, %v2986
        %v2988 = vpop.f32.mrb[0].mxu0
        %v2989 = vpop.f32.mrb[0].mxu0
        %v2990 = vadd.f32 0.0, %v2989
        %v2991 = vpop.f32.mrb[0].mxu0
        %2992 = vmatprep.mubr.bf16.mxu0 %v2775
        %2993 = vmatmul.mubr.bf16.gmra.mrb[0].mxu0 %v2638
        %v2994 = vpop.f32.mrb[0].mxu0
        %v2995 = vadd.f32 0.0, %v2994
        %v2996 = vpop.f32.mrb[0].mxu0
        %v2997 = vpop.f32.mrb[0].mxu0
        %v2998 = vadd.f32 0.0, %v2997
        %v2999 = vpop.f32.mrb[0].mxu0
        %3000 = vmatprep.mubr.bf16.mxu0 %v2942
        %3001 = vmatmul.mubr.bf16.gmra.mrb[0].mxu0 %v2842
        %v3002 = vpop.f32.mrb[0].mxu0
        %v3003 = vadd.f32 0.0, %v3002
        %v3004 = vpop.f32.mrb[0].mxu0
        %v3005 = vpop.f32.mrb[0].mxu0
        %v3006 = vadd.f32 0.0, %v3005
        %v3007 = vpop.f32.mrb[0].mxu0
        %3008 = vdwg.mxu0
        %v3009 = vsel %vm1791, %v2812, 0.0
        %v3010 = vsel %vm1792, %v2815, 0.0
        %v3011 = vsel %vm1793, %v2820, 0.0
        %v3012 = vsel %vm1794, %v2823, 0.0
        %v3013 = vsel %vm1795, %v2828, 0.0
        %v3014 = vsel %vm1796, %v2831, 0.0
        %v3015 = vsel %vm1797, %v2836, 0.0
        %v3016 = vsel %vm1798, %v2839, 0.0
        %v3027 = vrot.slane %v2632, 4
        %v3028 = vrot.slane %v2634, 4
        %v3029 = vsel %vm1086, %v3027, %v3028
        %v3030 = vrot.slane %v2633, 4
        %v3031 = vrot.slane %v2635, 4
        %v3032 = vsel %vm1086, %v3030, %v3031
        %v3033 = vrot.slane %v2636, 4
        %v3034 = vsel %vm1086, %v3028, %v3033
        %v3035 = vrot.slane %v2637, 4
        %v3036 = vsel %vm1086, %v3031, %v3035
        %v3037 = vrot.slane %v2638, 4
        %v3038 = vsel %vm1086, %v3033, %v3037
        %v3039 = vrot.slane %v2639, 4
        %v3040 = vsel %vm1086, %v3035, %v3039
        %v3041 = vrot.slane %v2640, 4
        %v3042 = vsel %vm1086, %v3037, %v3041
        %v3043 = vrot.slane %v2641, 4
        %v3044 = vsel %vm1086, %v3039, %v3043
        %v3073 = vunpack.c.l.b16 %v2643
        %v3074 = vunpack.c.l.b16 %v2644
        %v3075 = vunpack.c.l.b16 %v2645
        %v3076 = vunpack.c.l.b16 %v2646
        %v3077 = vunpack.c.l.b16 %v2647
        %v3078 = vunpack.c.l.b16 %v2648
        %v3079 = vunpack.c.l.b16 %v2649
        %v3080 = vunpack.c.l.b16 %v2650
        %v3081 = vunpack.c.l.b16 %v2651
        %v3082 = vunpack.c.l.b16 %v2652
        %v3083 = vunpack.c.l.b16 %v2653
        %v3084 = vunpack.c.l.b16 %v2654
        %v3085 = vunpack.c.l.b16 %v2655
        %v3086 = vunpack.c.l.b16 %v2656
        %v3087 = vunpack.c.l.b16 %v2657
        %v3088 = vunpack.c.l.b16 %v2658
        %v3089 = vunpack.c.l.b16 %v2659
        %v3090 = vunpack.c.l.b16 %v2660
        %v3091 = vunpack.c.l.b16 %v2661
        %v3092 = vunpack.c.l.b16 %v2662
        %v3093 = vunpack.c.l.b16 %v2663
        %v3094 = vunpack.c.l.b16 %v2664
        %v3095 = vunpack.c.l.b16 %v2665
        %v3096 = vunpack.c.l.b16 %v2666
        %v3097 = vpack.c.b16 %v3074, %v3073
        %v3098 = vpack.c.b16 %v3076, %v3075
        %v3099 = vpack.c.b16 %v3078, %v3077
        %v3100 = vpack.c.b16 %v3080, %v3079
        %v3101 = vpack.c.b16 %v3082, %v3081
        %v3102 = vpack.c.b16 %v3084, %v3083
        %v3103 = vpack.c.b16 %v3086, %v3085
        %v3104 = vpack.c.b16 %v3088, %v3087
        %v3105 = vpack.c.b16 %v3090, %v3089
        %v3106 = vpack.c.b16 %v3092, %v3091
        %v3107 = vpack.c.b16 %v3094, %v3093
        %v3108 = vpack.c.b16 %v3096, %v3095
        %v3122 = vsel %vm628, %v3032, 0
        %v3125 = vsel %vm628, %v3036, 0
        %v3128 = vsel %vm628, %v3040, 0
        %v3131 = vsel %vm628, %v3044, 0
        %3133 = vmatprep.subr.bf16.mxu0 0
        %3134 = vmatpush1.bf16.msra.mxu0 %v3097
        %3135 = vmatprep.subr.bf16.mxu0 0
        %3136 = vmatpush1.bf16.msra.mxu0 %v3098
        %3137 = vmatprep.subr.bf16.mxu0 0
        %3138 = vmatpush1.bf16.msra.mxu0 %v3099
        %3139 = vmatprep.subr.bf16.mxu0 0
        %3140 = vmatpush1.bf16.msra.mxu0 %v3100
        %3141 = vmatprep.subr.bf16.mxu0 0
        %3142 = vmatpush1.bf16.msra.mxu0 %v3101
        %3143 = vmatprep.subr.bf16.mxu0 0
        %3144 = vmatpush1.bf16.msra.mxu0 %v3102
        %3145 = vmatprep.subr.bf16.mxu0 0
        %3146 = vmatpush1.bf16.msra.mxu0 %v3103
        %3147 = vmatprep.subr.bf16.mxu0 0
        %3148 = vmatpush1.bf16.msra.mxu0 %v3104
        %3149 = vmatprep.subr.bf16.mxu0 0
        %3150 = vmatpush1.bf16.msra.mxu0 %v3105
        %3151 = vmatprep.subr.bf16.mxu0 0
        %3152 = vmatpush1.bf16.msra.mxu0 %v3106
        %3153 = vmatprep.subr.bf16.mxu0 0
        %3154 = vmatpush1.bf16.msra.mxu0 %v3107
        %3155 = vmatprep.subr.bf16.mxu0 0
        %3156 = vmatpush1.bf16.msra.mxu0 %v3108
        %3157 = vmatprep.subr.bf16.mxu0 0
        %3158 = vmatpush1.bf16.msra.mxu0 0
        %3159 = vmatprep.subr.bf16.mxu0 0
        %3160 = vmatpush1.bf16.msra.mxu0 0
        %3161 = vmatprep.subr.bf16.mxu0 0
        %3162 = vmatpush1.bf16.msra.mxu0 0
        %3163 = vmatprep.subr.bf16.mxu0 0
        %3164 = vmatpush1.bf16.msra.mxu0 0
        %3165 = vmatprep.mubr.bf16.mxu0 %v3122
        %3166 = vmatmul.mubr.bf16.gmra.mrb[0].mxu0 %v3029
        %v3167 = vpop.f32.mrb[0].mxu0
        %v3168 = vadd.f32 %v3009, %v3167
        %v3169 = vpop.f32.mrb[0].mxu0
        %v3170 = vpop.f32.mrb[0].mxu0
        %v3171 = vadd.f32 %v3010, %v3170
        %v3172 = vpop.f32.mrb[0].mxu0
        %3173 = vmatprep.mubr.bf16.mxu0 %v3125
        %3174 = vmatmul.mubr.bf16.gmra.mrb[0].mxu0 %v3034
        %v3175 = vpop.f32.mrb[0].mxu0
        %v3176 = vadd.f32 %v3011, %v3175
        %v3177 = vpop.f32.mrb[0].mxu0
        %v3178 = vpop.f32.mrb[0].mxu0
        %v3179 = vadd.f32 %v3012, %v3178
        %v3180 = vpop.f32.mrb[0].mxu0
        %3181 = vmatprep.mubr.bf16.mxu0 %v3128
        %3182 = vmatmul.mubr.bf16.gmra.mrb[0].mxu0 %v3038
        %v3183 = vpop.f32.mrb[0].mxu0
        %v3184 = vadd.f32 %v3013, %v3183
        %v3185 = vpop.f32.mrb[0].mxu0
        %v3186 = vpop.f32.mrb[0].mxu0
        %v3187 = vadd.f32 %v3014, %v3186
        %v3188 = vpop.f32.mrb[0].mxu0
        %3189 = vmatprep.mubr.bf16.mxu0 %v3131
        %3190 = vmatmul.mubr.bf16.gmra.mrb[0].mxu0 %v3042
        %v3191 = vpop.f32.mrb[0].mxu0
        %v3192 = vadd.f32 %v3015, %v3191
        %v3193 = vpop.f32.mrb[0].mxu0
        %v3194 = vpop.f32.mrb[0].mxu0
        %v3195 = vadd.f32 %v3016, %v3194
        %v3196 = vpop.f32.mrb[0].mxu0
        %3197 = vdwg.mxu0
        %v3198 = vsel %vm1996, %v2979, 0.0
        %v3199 = vsel %vm1997, %v2982, 0.0
        %v3200 = vsel %vm1998, %v2987, 0.0
        %v3201 = vsel %vm1999, %v2990, 0.0
        %v3202 = vsel %vm2000, %v2995, 0.0
        %v3203 = vsel %vm2001, %v2998, 0.0
        %v3204 = vsel %vm2002, %v3003, 0.0
        %v3205 = vsel %vm2003, %v3006, 0.0
        %v3206 = vadd.f32 %v3168, %v3198
        %v3207 = vadd.f32 %v3171, %v3199
        %v3208 = vadd.f32 %v3176, %v3200
        %v3209 = vadd.f32 %v3179, %v3201
        %v3210 = vadd.f32 %v3184, %v3202
        %v3211 = vadd.f32 %v3187, %v3203
        %v3212 = vadd.f32 %v3192, %v3204
        %v3213 = vadd.f32 %v3195, %v3205
        %v3214 = vpack.c.bf16 %v621, %v620
        %v3215 = vpack.c.bf16 %v623, %v622
        %v3216 = vpack.c.bf16 %v625, %v624
        %v3217 = vpack.c.bf16 %v627, %v626
        %v3218 = vld [vmem:[%s12] sm:$0xf]
        %v3219 = vld [vmem:[%s12 + $0x4] sm:$0xf]
        %v3220 = vld [vmem:[%s12 + $0x8] sm:$0xf]
        %v3221 = vld [vmem:[%s12 + $0xc] sm:$0xf]
        %v3222 = vld [vmem:[%s12 + $0x10] sm:$0xf]
        %v3223 = vld [vmem:[%s12 + $0x14] sm:$0xf]
        %v3224 = vld [vmem:[%s12 + $0x18] sm:$0xf]
        %v3225 = vld [vmem:[%s12 + $0x1c] sm:$0xf]
        %v3234 = vunpack.c.l.b16 %v3218
        %v3235 = vunpack.c.l.b16 %v3219
        %v3236 = vunpack.c.l.b16 %v3220
        %v3237 = vunpack.c.l.b16 %v3221
        %v3238 = vunpack.c.l.b16 %v3222
        %v3239 = vunpack.c.l.b16 %v3223
        %v3240 = vunpack.c.l.b16 %v3224
        %v3241 = vunpack.c.l.b16 %v3225
        %v3242 = vpack.c.b16 %v3235, %v3234
        %v3243 = vpack.c.b16 %v3237, %v3236
        %v3244 = vpack.c.b16 %v3239, %v3238
        %v3245 = vpack.c.b16 %v3241, %v3240
        %v3251 = vsel %vm628, %v3214, 0
        %v3254 = vsel %vm628, %v3215, 0
        %v3257 = vsel %vm628, %v3216, 0
        %v3260 = vsel %vm628, %v3217, 0
        %3262 = vmatprep.subr.bf16.mxu0 0
        %3263 = vmatpush1.bf16.msra.mxu0 %v3242
        %3264 = vmatprep.subr.bf16.mxu0 0
        %3265 = vmatpush1.bf16.msra.mxu0 %v3243
        %3266 = vmatprep.subr.bf16.mxu0 0
        %3267 = vmatpush1.bf16.msra.mxu0 %v3244
        %3268 = vmatprep.subr.bf16.mxu0 0
        %3269 = vmatpush1.bf16.msra.mxu0 %v3245
        %3270 = vmatprep.subr.bf16.mxu0 0
        %3271 = vmatpush1.bf16.msra.mxu0 0
        %3272 = vmatprep.subr.bf16.mxu0 0
        %3273 = vmatpush1.bf16.msra.mxu0 0
        %3274 = vmatprep.subr.bf16.mxu0 0
        %3275 = vmatpush1.bf16.msra.mxu0 0
        %3276 = vmatprep.subr.bf16.mxu0 0
        %3277 = vmatpush1.bf16.msra.mxu0 0
        %3278 = vmatprep.subr.bf16.mxu0 0
        %3279 = vmatpush1.bf16.msra.mxu0 0
        %3280 = vmatprep.subr.bf16.mxu0 0
        %3281 = vmatpush1.bf16.msra.mxu0 0
        %3282 = vmatprep.subr.bf16.mxu0 0
        %3283 = vmatpush1.bf16.msra.mxu0 0
        %3284 = vmatprep.subr.bf16.mxu0 0
        %3285 = vmatpush1.bf16.msra.mxu0 0
        %3286 = vmatprep.subr.bf16.mxu0 0
        %3287 = vmatpush1.bf16.msra.mxu0 0
        %3288 = vmatprep.subr.bf16.mxu0 0
        %3289 = vmatpush1.bf16.msra.mxu0 0
        %3290 = vmatprep.subr.bf16.mxu0 0
        %3291 = vmatpush1.bf16.msra.mxu0 0
        %3292 = vmatprep.subr.bf16.mxu0 0
        %3293 = vmatpush1.bf16.msra.mxu0 0
        %3294 = vmatprep.mubr.bf16.mxu0 0
        %3295 = vmatmul.mubr.bf16.gmra.mrb[0].mxu0 %v3251
        %v3296 = vpop.f32.mrb[0].mxu0
        %v3297 = vadd.f32 0.0, %v3296
        %v3298 = vpop.f32.mrb[0].mxu0
        %v3299 = vpop.f32.mrb[0].mxu0
        %v3300 = vadd.f32 0.0, %v3299
        %v3301 = vpop.f32.mrb[0].mxu0
        %3302 = vmatprep.mubr.bf16.mxu0 0
        %3303 = vmatmul.mubr.bf16.gmra.mrb[0].mxu0 %v3254
        %v3304 = vpop.f32.mrb[0].mxu0
        %v3305 = vadd.f32 0.0, %v3304
        %v3306 = vpop.f32.mrb[0].mxu0
        %v3307 = vpop.f32.mrb[0].mxu0
        %v3308 = vadd.f32 0.0, %v3307
        %v3309 = vpop.f32.mrb[0].mxu0
        %3310 = vmatprep.mubr.bf16.mxu0 0
        %3311 = vmatmul.mubr.bf16.gmra.mrb[0].mxu0 %v3257
        %v3312 = vpop.f32.mrb[0].mxu0
        %v3313 = vadd.f32 0.0, %v3312
        %v3314 = vpop.f32.mrb[0].mxu0
        %v3315 = vpop.f32.mrb[0].mxu0
        %v3316 = vadd.f32 0.0, %v3315
        %v3317 = vpop.f32.mrb[0].mxu0
        %3318 = vmatprep.mubr.bf16.mxu0 0
        %3319 = vmatmul.mubr.bf16.gmra.mrb[0].mxu0 %v3260
        %v3320 = vpop.f32.mrb[0].mxu0
        %v3321 = vadd.f32 0.0, %v3320
        %v3322 = vpop.f32.mrb[0].mxu0
        %v3323 = vpop.f32.mrb[0].mxu0
        %v3324 = vadd.f32 0.0, %v3323
        %v3325 = vpop.f32.mrb[0].mxu0
        %3326 = vdwg.mxu0
        %v3327 = vadd.f32 %v3206, %v3297
        %v3328 = vadd.f32 %v3207, %v3300
        %v3329 = vadd.f32 %v3208, %v3305
        %v3330 = vadd.f32 %v3209, %v3308
        %v3331 = vadd.f32 %v3210, %v3313
        %v3332 = vadd.f32 %v3211, %v3316
        %v3333 = vadd.f32 %v3212, %v3321
        %v3334 = vadd.f32 %v3213, %v3324
        %v3335 = vld [vmem:[%s13] sm:$0x1]
        %v3337 = vlaneseq
        %v3338 = vshrl.u32 %v3337, 7
        %v3339 = vsub.s32 0, %v3338
        %v3340 = vrot.slane %v3335, %v3339
        %v3342 = vadd.f32 %v3327, %v3340
        %v3343 = vadd.f32 %v3328, %v3340
        %v3344 = vadd.f32 %v3329, %v3340
        %v3345 = vadd.f32 %v3330, %v3340
        %v3346 = vadd.f32 %v3331, %v3340
        %v3347 = vadd.f32 %v3332, %v3340
        %v3348 = vadd.f32 %v3333, %v3340
        %v3349 = vadd.f32 %v3334, %v3340
        %3350 = vst.msk [vmem:[%s471] sm:$0xff] %vm628, %v3342
        %3351 = vst.msk [vmem:[%s471 + $0x8] sm:$0xff] %vm628, %v3343
        %3352 = vst.msk [vmem:[%s471 + $0x10] sm:$0xff] %vm628, %v3344
        %3353 = vst.msk [vmem:[%s471 + $0x18] sm:$0xff] %vm628, %v3345
        %3354 = vst.msk [vmem:[%s471 + $0x20] sm:$0xff] %vm628, %v3346
        %3355 = vst.msk [vmem:[%s471 + $0x28] sm:$0xff] %vm628, %v3347
        %3356 = vst.msk [vmem:[%s471 + $0x30] sm:$0xff] %vm628, %v3348
        %3357 = vst.msk [vmem:[%s471 + $0x38] sm:$0xff] %vm628, %v3349
        %s3358 = sand.u32 %s340, 1
        %s3359 = scalar_lea.sflag [#allocation4], %s3358
        %s3360 = sand.u32 %s340, 1
        %s3361 = smul.addr %s3360, 64
        %s3362 = scalar_lea.vmem [#allocation3], %s3361
        // Predicated region
        $region77: #{tpu_custom_call.1} parent=75 // pred_check
          %p3363 = pneg %p350
        $region78: #{tpu_custom_call.1} parent=75 // pred_check_branch
          %3365 = sbr.rel (%p3363) target = $region80
        $region79: #{tpu_custom_call.1} parent=75 // pred_region
          %s3367 = ssub.s32 1024, 1024
          %3368 = vsyncadd %s3359, %s3367
          %s3369 = smul.addr %s28, 8
          %s3370 = smul.addr %s3369, 128
          %s3371 = scalar_lea.hbm %s14, %s3370
          %s3372 = sshll.u32 %s3362, 4
          %s3373 = int_to_ptr.vmem [resolvable:$true] %s3372
          %3378 = dma.vmem_to_hbm [thread:$0]  %s3373, 1024, %s3371, %s3359, 128, 128, 8
        $region80: #{tpu_custom_call.1} parent=75 // pred_fallthru
          _
      $region76: #{tpu_custom_call.1} parent=5 // pred_fallthru
        _
      %p3379 = scmp.le.s32.totalorder 2, %s23
      // Predicated region
      $region81: #{tpu_custom_call.1} parent=5 // pred_check
        %p3380 = pneg %p3379
      $region82: #{tpu_custom_call.1} parent=5 // pred_check_branch
        %3382 = sbr.rel (%p3380) target = $region84
      $region83: #{tpu_custom_call.1} parent=5 // pred_region
        %s3383 = ssub.s32 %s23, 2
        // Predicated region
        $region85: #{tpu_custom_call.1} parent=83 // pred_check
          %p3384 = pneg %p356
        $region86: #{tpu_custom_call.1} parent=83 // pred_check_branch
          %3386 = sbr.rel (%p3384) target = $region88
        $region87: #{tpu_custom_call.1} parent=83 // pred_region
          %s3387 = sand.u32 %s341, 1
          %s3388 = scalar_lea.sflag [#allocation4], %s3387
          %s3389 = sand.u32 %s341, 1
          %s3390 = smul.addr %s3389, 64
          %s3391 = scalar_lea.vmem [#allocation3], %s3390
          %3392 = dma.done %s3388, 1024
        $region88: #{tpu_custom_call.1} parent=83 // pred_fallthru
          _
      $region84: #{tpu_custom_call.1} parent=5 // pred_fallthru
        _
    $region6: #{tpu_custom_call.1} parent=1 // loop_footer
      %s27 = sadd.s32 1, %s23
    $region7: #{tpu_custom_call.1} parent=1 // loop_footer_branch
      %22 = sbr.rel target = $region3
    $region8: #{tpu_custom_call.1} parent=1 // loop_exit
      _
    %3393 = vsyncpa [#allocation4], 1
    %s3394 = scalar_lea.sflag [#allocation4], 1
    %3395 = vsyncpa %s3394, 1

</llo_original>
